<compile_context>
chip_gen: v6e
topology: v6e:2x2x1
jax: 0.10.0
libtpu: 0.0.40
codegen_flags: <defaults>
</compile_context>

<pallas_src>
import functools

import jax
import jax.numpy as jnp
from jax.experimental import pallas as pl
from jax.experimental.pallas import tpu as pltpu

_LANE = 128
_SUBLANE = 8


def _ceil_to(v, m):
    return ((v + m - 1) // m) * m


def _fused_rgcn_kernel(adj_ref, comp1_ref, comp2_ref, x_ref, w1_ref, b1_ref,
                       w2_ref, b2_ref, o_ref, acat_ref, xv_ref, *,
                       num_rel, num_bases, n_p):
    """Fused 2-layer RelGraphConv (basis regularizer) forward.

    Operands (whole, lane-padded VMEM blocks unless noted):
      adj_ref          : (R, Np, Np) bf16       raw per-relation adjacency
      comp1/2_ref      : (R, B) f32  in SMEM    basis coefficients per layer
      x_ref            : (Np, Din_p) bf16       node features
      w1_ref           : (Din_p, (B+1)*H_p) bf16   [V1_0 | V1_1 | loop1]
      b1_ref           : (1, H_p) f32
      w2_ref           : (H_p, (B+1)*Dout_p) bf16  [V2_0 | V2_1 | loop2]
      b2_ref           : (1, Dout_p) f32
      o_ref            : (Np, Dout_p) f32
      acat_ref scratch : (Np, B*Np) bf16        concatenated A_tilde bases
      xv_ref   scratch : (B*Np, max(H_p,Dout_p)) bf16  stacked X@V_b
    """

    def layer(x_bf, w_ref, b_ref, comp_ref, act):
        width = w_ref.shape[1] // (num_bases + 1)   # padded out-width (mult of 128)

        # One wide X-side matmul: [X V_0 | ... | X V_{B-1} | X W_loop].
        xw = jnp.dot(x_bf, w_ref[...], preferred_element_type=jnp.float32)

        for b in range(num_bases):                  # num_bases == 2 -> unrolled
            # Stack X V_b into rows [b*Np, (b+1)*Np) of the scratch.
            xv_ref[b * n_p:(b + 1) * n_p, :width] = (
                xw[:, b * width:(b + 1) * width].astype(xv_ref.dtype))
            # Fold comp into the adjacency inside the kernel: tiny unrolled VPU
            # weighted sum over R (comp scalars read from SMEM), f32 then bf16.
            at = comp_ref[0, b] * adj_ref[0]
            for r in range(1, num_rel):
                at = at + comp_ref[r, b] * adj_ref[r]
            acat_ref[:, b * n_p:(b + 1) * n_p] = at.astype(acat_ref.dtype)

        # Single adjacency matmul per layer; contraction dim = num_bases * Np.
        agg = jnp.dot(acat_ref[...], xv_ref[:, :width],
                      preferred_element_type=jnp.float32)
        val = agg + xw[:, num_bases * width:] + b_ref[...]
        return act(val)

    h = layer(x_ref[...], w1_ref, b1_ref, comp1_ref, jnp.tanh)
    out = layer(h.astype(jnp.bfloat16), w2_ref, b2_ref, comp2_ref,
                lambda v: jnp.maximum(v, 0.0))
    o_ref[...] = out.astype(o_ref.dtype)


@jax.jit
def graph_encoder_gcn_forward(params, adj):
    """params: dict of arrays; adj: dense per-relation adjacency (R, N, N)."""
    num_rel, n, _ = adj.shape
    num_bases = params["comp1"].shape[1]
    in_dim = params["node_emb"].shape[1]
    hidden_dim = params["v1"].shape[2]
    out_dim = params["v2"].shape[2]

    # Lane-dense padding: node dim -> 128 (so A operands / contraction dims are
    # unmasked, clean vregs), feature dims -> multiples of 128.  Zero padding is
    # benign: tanh(0)=0, relu(0)=0, padded adjacency rows/cols are zero, padded
    # output rows/cols are sliced off below.
    n_p = max(_ceil_to(n, _SUBLANE), _LANE)
    din_p = _ceil_to(in_dim, _LANE)
    h_p = _ceil_to(hidden_dim, _LANE)
    dout_p = _ceil_to(out_dim, _LANE)

    def pad2(x, rows, cols):
        return jnp.pad(x, ((0, rows - x.shape[0]), (0, cols - x.shape[1])))

    adj_p = jnp.pad(adj, ((0, 0), (0, n_p - n), (0, n_p - n))).astype(jnp.bfloat16)
    x_p = pad2(params["node_emb"], n_p, din_p).astype(jnp.bfloat16)

    # Concatenated X-side weights per layer, each segment individually padded so
    # the kernel can slice at lane-aligned offsets b*width.
    w1cat = jnp.concatenate(
        [pad2(params["v1"][b], din_p, h_p) for b in range(num_bases)]
        + [pad2(params["loop1"], din_p, h_p)], axis=1).astype(jnp.bfloat16)
    w2cat = jnp.concatenate(
        [pad2(params["v2"][b], h_p, dout_p) for b in range(num_bases)]
        + [pad2(params["loop2"], h_p, dout_p)], axis=1).astype(jnp.bfloat16)
    b1p = pad2(params["b1"].reshape(1, -1), 1, h_p).astype(jnp.float32)
    b2p = pad2(params["b2"].reshape(1, -1), 1, dout_p).astype(jnp.float32)
    comp1 = params["comp1"].astype(jnp.float32)
    comp2 = params["comp2"].astype(jnp.float32)

    vmem = pl.BlockSpec(memory_space=pltpu.MemorySpace.VMEM)
    smem = pl.BlockSpec(memory_space=pltpu.MemorySpace.SMEM)

    out_padded = pl.pallas_call(
        functools.partial(_fused_rgcn_kernel, num_rel=num_rel,
                          num_bases=num_bases, n_p=n_p),
        out_shape=jax.ShapeDtypeStruct((n_p, dout_p), jnp.float32),
        in_specs=[vmem, smem, smem, vmem, vmem, vmem, vmem, vmem],
        out_specs=vmem,
        scratch_shapes=[
            pltpu.VMEM((n_p, num_bases * n_p), jnp.bfloat16),
            pltpu.VMEM((num_bases * n_p, max(h_p, dout_p)), jnp.bfloat16),
        ],
    )(adj_p, comp1, comp2, x_p, w1cat, b1p, w2cat, b2p)

    return out_padded[:n, :out_dim]


def xavier_uniform(key, shape, dtype=jnp.float32):
    fan_in, fan_out = shape[-2], shape[-1]
    limit = jnp.sqrt(6.0 / (fan_in + fan_out)).astype(dtype)
    return jax.random.uniform(key, shape, dtype, minval=-limit, maxval=limit)


def init_params(key, in_dim, hidden_dim, out_dim, num_node, num_rel, num_bases=2):
    """Deterministic parameter pytree mirroring GraphEncoder_GCN.__init__."""
    ks = jax.random.split(key, 7)
    return dict(
        # node embedding parameter (stands in for node2vec init + xavier_uniform_)
        node_emb=xavier_uniform(ks[0], (num_node, in_dim)),
        # conv1: basis weights V, comp, self-loop weight, bias
        v1=xavier_uniform(ks[1], (num_bases, in_dim, hidden_dim)),
        comp1=xavier_uniform(ks[2], (num_rel, num_bases)),
        loop1=xavier_uniform(ks[3], (in_dim, hidden_dim)),
        b1=jnp.zeros((hidden_dim,), jnp.float32),
        # conv2
        v2=xavier_uniform(ks[4], (num_bases, hidden_dim, out_dim)),
        comp2=xavier_uniform(ks[5], (num_rel, num_bases)),
        loop2=xavier_uniform(ks[6], (hidden_dim, out_dim)),
        b2=jnp.zeros((out_dim,), jnp.float32),
    )


def _reference(params, adj):
    """Pure-JAX f32 reference (per-relation sum, no basis folding)."""
    def layer(x, comp, v, loop, b, act):
        w = jnp.einsum("rb,bio->rio", comp, v)           # (R, Din, Dout)
        msg = jnp.einsum("nd,rdo->rno", x, w)            # (R, N, Dout)
        agg = jnp.einsum("rij,rjo->io", adj, msg)        # (N, Dout)
        val = agg + x @ loop + b
        return jnp.tanh(val) if act == "tanh" else jnp.maximum(val, 0.0)

    h = layer(params["node_emb"], params["comp1"], params["v1"],
              params["loop1"], params["b1"], "tanh")
    return layer(h, params["comp2"], params["v2"], params["loop2"],
                 params["b2"], "relu")


if __name__ == "__main__":
    key = jax.random.PRNGKey(0)
    num_node, in_dim, hidden_dim, out_dim = 16, 16, 32, 8
    num_rel, num_edges = 4, 48

    k_src, k_dst, k_rel, k_params = jax.random.split(key, 4)

    # deterministic random multigraph: edges (src -> dst) with relation types
    src = jax.random.randint(k_src, (num_edges,), 0, num_node)
    dst = jax.random.randint(k_dst, (num_edges,), 0, num_node)
    rel = jax.random.randint(k_rel, (num_edges,), 0, num_rel)

    # dense per-relation adjacency: A[r, dst, src] = edge count
    adj = jnp.zeros((num_rel, num_node, num_node), jnp.float32)
    adj = adj.at[rel, dst, src].add(1.0)

    params = init_params(k_params, in_dim, hidden_dim, out_dim, num_node, num_rel)

    out = graph_encoder_gcn_forward(params, adj)
    out = jax.block_until_ready(out)

    ref = _reference(params, adj)
    assert out.shape == (num_node, out_dim)
    # bf16 MXU operands (f32 accumulation) vs. the f32 reference -> loosened
    # tolerance; real structural bugs (missing term / wrong orientation) would
    # show up as O(1) errors, far above this.
    assert jnp.allclose(out, ref, atol=1e-1, rtol=1e-1), "mismatch vs reference"

    print("KERNEL_OK")
</pallas_src>

<mosaic_0001>
module attributes {stable_mosaic.version = 11 : i64} {
  func.func @_fused_rgcn_kernel(%arg0: memref<4x128x128xbf16, #tpu.memory_space<vmem>>, %arg1: memref<4x2xf32, #tpu.memory_space<smem>>, %arg2: memref<4x2xf32, #tpu.memory_space<smem>>, %arg3: memref<128x128xbf16, #tpu.memory_space<vmem>>, %arg4: memref<128x384xbf16, #tpu.memory_space<vmem>>, %arg5: memref<1x128xf32, #tpu.memory_space<vmem>>, %arg6: memref<128x384xbf16, #tpu.memory_space<vmem>>, %arg7: memref<1x128xf32, #tpu.memory_space<vmem>>, %arg8: memref<128x128xf32, #tpu.memory_space<vmem>>, %arg9: memref<128x256xbf16, #tpu.memory_space<vmem>>, %arg10: memref<256x128xbf16, #tpu.memory_space<vmem>>) attributes {dimension_semantics = [], scalar_prefetch = 0 : i64, scratch_operands = 2 : i64, tpu.core_type = #tpu.core_type<tc>} {
    %c0 = arith.constant 0 : index
    %c0_0 = arith.constant 0 : index
    %0 = vector.load %arg3[%c0, %c0_0] : memref<128x128xbf16, #tpu.memory_space<vmem>>, vector<128x128xbf16>
    %c0_1 = arith.constant 0 : index
    %c0_2 = arith.constant 0 : index
    %1 = vector.load %arg4[%c0_1, %c0_2] : memref<128x384xbf16, #tpu.memory_space<vmem>>, vector<128x384xbf16>
    %cst = arith.constant dense<0.000000e+00> : vector<128x384xf32>
    %2 = tpu.matmul %0, %1, %cst {dimension_numbers = #tpu.dot_dimension_numbers<[1], [0], [0], [1], [0, 0, 1, 1], [], []>} : vector<128x128xbf16>, vector<128x384xbf16>, vector<128x384xf32> -> vector<128x384xf32>
    %3 = vector.extract_strided_slice %2 {offsets = [0, 0], sizes = [128, 128], strides = [1, 1]} : vector<128x384xf32> to vector<128x128xf32>
    %4 = arith.truncf %3 : vector<128x128xf32> to vector<128x128xbf16>
    %c0_3 = arith.constant 0 : index
    %c0_4 = arith.constant 0 : index
    %5 = vector.load %arg10[%c0_3, %c0_4] : memref<256x128xbf16, #tpu.memory_space<vmem>>, vector<128x128xbf16>
    tpu.vector_store %arg10[%c0_3, %c0_4], %4 {strides = array<i32>} : memref<256x128xbf16, #tpu.memory_space<vmem>>, vector<128x128xbf16>,
    %c0_5 = arith.constant 0 : index
    %c0_6 = arith.constant 0 : index
    %6 = memref.load %arg1[%c0_5, %c0_6] : memref<4x2xf32, #tpu.memory_space<smem>>
    %c0_7 = arith.constant 0 : index
    %c0_8 = arith.constant 0 : index
    %c0_9 = arith.constant 0 : index
    %7 = vector.load %arg0[%c0_7, %c0_8, %c0_9] : memref<4x128x128xbf16, #tpu.memory_space<vmem>>, vector<1x128x128xbf16>
    %8 = vector.shape_cast %7 : vector<1x128x128xbf16> to vector<128x128xbf16>
    %9 = arith.extf %8 : vector<128x128xbf16> to vector<128x128xf32>
    %10 = vector.broadcast %6 : f32 to vector<128x128xf32>
    %11 = arith.mulf %10, %9 : vector<128x128xf32>
    %c1 = arith.constant 1 : index
    %c0_10 = arith.constant 0 : index
    %12 = memref.load %arg1[%c1, %c0_10] : memref<4x2xf32, #tpu.memory_space<smem>>
    %c1_11 = arith.constant 1 : index
    %c0_12 = arith.constant 0 : index
    %c0_13 = arith.constant 0 : index
    %13 = vector.load %arg0[%c1_11, %c0_12, %c0_13] : memref<4x128x128xbf16, #tpu.memory_space<vmem>>, vector<1x128x128xbf16>
    %14 = vector.shape_cast %13 : vector<1x128x128xbf16> to vector<128x128xbf16>
    %15 = arith.extf %14 : vector<128x128xbf16> to vector<128x128xf32>
    %16 = vector.broadcast %12 : f32 to vector<128x128xf32>
    %17 = arith.mulf %16, %15 : vector<128x128xf32>
    %18 = arith.addf %11, %17 : vector<128x128xf32>
    %c2 = arith.constant 2 : index
    %c0_14 = arith.constant 0 : index
    %19 = memref.load %arg1[%c2, %c0_14] : memref<4x2xf32, #tpu.memory_space<smem>>
    %c2_15 = arith.constant 2 : index
    %c0_16 = arith.constant 0 : index
    %c0_17 = arith.constant 0 : index
    %20 = vector.load %arg0[%c2_15, %c0_16, %c0_17] : memref<4x128x128xbf16, #tpu.memory_space<vmem>>, vector<1x128x128xbf16>
    %21 = vector.shape_cast %20 : vector<1x128x128xbf16> to vector<128x128xbf16>
    %22 = arith.extf %21 : vector<128x128xbf16> to vector<128x128xf32>
    %23 = vector.broadcast %19 : f32 to vector<128x128xf32>
    %24 = arith.mulf %23, %22 : vector<128x128xf32>
    %25 = arith.addf %18, %24 : vector<128x128xf32>
    %c3 = arith.constant 3 : index
    %c0_18 = arith.constant 0 : index
    %26 = memref.load %arg1[%c3, %c0_18] : memref<4x2xf32, #tpu.memory_space<smem>>
    %c3_19 = arith.constant 3 : index
    %c0_20 = arith.constant 0 : index
    %c0_21 = arith.constant 0 : index
    %27 = vector.load %arg0[%c3_19, %c0_20, %c0_21] : memref<4x128x128xbf16, #tpu.memory_space<vmem>>, vector<1x128x128xbf16>
    %28 = vector.shape_cast %27 : vector<1x128x128xbf16> to vector<128x128xbf16>
    %29 = arith.extf %28 : vector<128x128xbf16> to vector<128x128xf32>
    %30 = vector.broadcast %26 : f32 to vector<128x128xf32>
    %31 = arith.mulf %30, %29 : vector<128x128xf32>
    %32 = arith.addf %25, %31 : vector<128x128xf32>
    %33 = arith.truncf %32 : vector<128x128xf32> to vector<128x128xbf16>
    %c0_22 = arith.constant 0 : index
    %c0_23 = arith.constant 0 : index
    %34 = vector.load %arg9[%c0_22, %c0_23] : memref<128x256xbf16, #tpu.memory_space<vmem>>, vector<128x128xbf16>
    tpu.vector_store %arg9[%c0_22, %c0_23], %33 {strides = array<i32>} : memref<128x256xbf16, #tpu.memory_space<vmem>>, vector<128x128xbf16>,
    %35 = vector.extract_strided_slice %2 {offsets = [0, 128], sizes = [128, 128], strides = [1, 1]} : vector<128x384xf32> to vector<128x128xf32>
    %36 = arith.truncf %35 : vector<128x128xf32> to vector<128x128xbf16>
    %c128 = arith.constant 128 : index
    %c0_24 = arith.constant 0 : index
    %37 = vector.load %arg10[%c128, %c0_24] : memref<256x128xbf16, #tpu.memory_space<vmem>>, vector<128x128xbf16>
    tpu.vector_store %arg10[%c128, %c0_24], %36 {strides = array<i32>} : memref<256x128xbf16, #tpu.memory_space<vmem>>, vector<128x128xbf16>,
    %c0_25 = arith.constant 0 : index
    %c1_26 = arith.constant 1 : index
    %38 = memref.load %arg1[%c0_25, %c1_26] : memref<4x2xf32, #tpu.memory_space<smem>>
    %c0_27 = arith.constant 0 : index
    %c0_28 = arith.constant 0 : index
    %c0_29 = arith.constant 0 : index
    %39 = vector.load %arg0[%c0_27, %c0_28, %c0_29] : memref<4x128x128xbf16, #tpu.memory_space<vmem>>, vector<1x128x128xbf16>
    %40 = vector.shape_cast %39 : vector<1x128x128xbf16> to vector<128x128xbf16>
    %41 = arith.extf %40 : vector<128x128xbf16> to vector<128x128xf32>
    %42 = vector.broadcast %38 : f32 to vector<128x128xf32>
    %43 = arith.mulf %42, %41 : vector<128x128xf32>
    %c1_30 = arith.constant 1 : index
    %c1_31 = arith.constant 1 : index
    %44 = memref.load %arg1[%c1_30, %c1_31] : memref<4x2xf32, #tpu.memory_space<smem>>
    %c1_32 = arith.constant 1 : index
    %c0_33 = arith.constant 0 : index
    %c0_34 = arith.constant 0 : index
    %45 = vector.load %arg0[%c1_32, %c0_33, %c0_34] : memref<4x128x128xbf16, #tpu.memory_space<vmem>>, vector<1x128x128xbf16>
    %46 = vector.shape_cast %45 : vector<1x128x128xbf16> to vector<128x128xbf16>
    %47 = arith.extf %46 : vector<128x128xbf16> to vector<128x128xf32>
    %48 = vector.broadcast %44 : f32 to vector<128x128xf32>
    %49 = arith.mulf %48, %47 : vector<128x128xf32>
    %50 = arith.addf %43, %49 : vector<128x128xf32>
    %c2_35 = arith.constant 2 : index
    %c1_36 = arith.constant 1 : index
    %51 = memref.load %arg1[%c2_35, %c1_36] : memref<4x2xf32, #tpu.memory_space<smem>>
    %c2_37 = arith.constant 2 : index
    %c0_38 = arith.constant 0 : index
    %c0_39 = arith.constant 0 : index
    %52 = vector.load %arg0[%c2_37, %c0_38, %c0_39] : memref<4x128x128xbf16, #tpu.memory_space<vmem>>, vector<1x128x128xbf16>
    %53 = vector.shape_cast %52 : vector<1x128x128xbf16> to vector<128x128xbf16>
    %54 = arith.extf %53 : vector<128x128xbf16> to vector<128x128xf32>
    %55 = vector.broadcast %51 : f32 to vector<128x128xf32>
    %56 = arith.mulf %55, %54 : vector<128x128xf32>
    %57 = arith.addf %50, %56 : vector<128x128xf32>
    %c3_40 = arith.constant 3 : index
    %c1_41 = arith.constant 1 : index
    %58 = memref.load %arg1[%c3_40, %c1_41] : memref<4x2xf32, #tpu.memory_space<smem>>
    %c3_42 = arith.constant 3 : index
    %c0_43 = arith.constant 0 : index
    %c0_44 = arith.constant 0 : index
    %59 = vector.load %arg0[%c3_42, %c0_43, %c0_44] : memref<4x128x128xbf16, #tpu.memory_space<vmem>>, vector<1x128x128xbf16>
    %60 = vector.shape_cast %59 : vector<1x128x128xbf16> to vector<128x128xbf16>
    %61 = arith.extf %60 : vector<128x128xbf16> to vector<128x128xf32>
    %62 = vector.broadcast %58 : f32 to vector<128x128xf32>
    %63 = arith.mulf %62, %61 : vector<128x128xf32>
    %64 = arith.addf %57, %63 : vector<128x128xf32>
    %65 = arith.truncf %64 : vector<128x128xf32> to vector<128x128xbf16>
    %c0_45 = arith.constant 0 : index
    %c128_46 = arith.constant 128 : index
    %66 = vector.load %arg9[%c0_45, %c128_46] : memref<128x256xbf16, #tpu.memory_space<vmem>>, vector<128x128xbf16>
    tpu.vector_store %arg9[%c0_45, %c128_46], %65 {strides = array<i32>} : memref<128x256xbf16, #tpu.memory_space<vmem>>, vector<128x128xbf16>,
    %c0_47 = arith.constant 0 : index
    %c0_48 = arith.constant 0 : index
    %67 = vector.load %arg9[%c0_47, %c0_48] : memref<128x256xbf16, #tpu.memory_space<vmem>>, vector<128x256xbf16>
    %c0_49 = arith.constant 0 : index
    %c0_50 = arith.constant 0 : index
    %68 = vector.load %arg10[%c0_49, %c0_50] : memref<256x128xbf16, #tpu.memory_space<vmem>>, vector<256x128xbf16>
    %cst_51 = arith.constant dense<0.000000e+00> : vector<128x128xf32>
    %69 = tpu.matmul %67, %68, %cst_51 {dimension_numbers = #tpu.dot_dimension_numbers<[1], [0], [0], [1], [0, 0, 1, 1], [], []>} : vector<128x256xbf16>, vector<256x128xbf16>, vector<128x128xf32> -> vector<128x128xf32>
    %70 = vector.extract_strided_slice %2 {offsets = [0, 256], sizes = [128, 128], strides = [1, 1]} : vector<128x384xf32> to vector<128x128xf32>
    %71 = arith.addf %69, %70 : vector<128x128xf32>
    %c0_52 = arith.constant 0 : index
    %c0_53 = arith.constant 0 : index
    %72 = vector.load %arg5[%c0_52, %c0_53] : memref<1x128xf32, #tpu.memory_space<vmem>>, vector<1x128xf32>
    %73 = vector.broadcast %72 : vector<1x128xf32> to vector<128x128xf32>
    %74 = arith.addf %71, %73 : vector<128x128xf32>
    %75 = math.tanh %74 : vector<128x128xf32>
    %76 = arith.truncf %75 : vector<128x128xf32> to vector<128x128xbf16>
    %c0_54 = arith.constant 0 : index
    %c0_55 = arith.constant 0 : index
    %77 = vector.load %arg6[%c0_54, %c0_55] : memref<128x384xbf16, #tpu.memory_space<vmem>>, vector<128x384xbf16>
    %cst_56 = arith.constant dense<0.000000e+00> : vector<128x384xf32>
    %78 = tpu.matmul %76, %77, %cst_56 {dimension_numbers = #tpu.dot_dimension_numbers<[1], [0], [0], [1], [0, 0, 1, 1], [], []>} : vector<128x128xbf16>, vector<128x384xbf16>, vector<128x384xf32> -> vector<128x384xf32>
    %79 = vector.extract_strided_slice %78 {offsets = [0, 0], sizes = [128, 128], strides = [1, 1]} : vector<128x384xf32> to vector<128x128xf32>
    %80 = arith.truncf %79 : vector<128x128xf32> to vector<128x128xbf16>
    %c0_57 = arith.constant 0 : index
    %c0_58 = arith.constant 0 : index
    %81 = vector.load %arg10[%c0_57, %c0_58] : memref<256x128xbf16, #tpu.memory_space<vmem>>, vector<128x128xbf16>
    tpu.vector_store %arg10[%c0_57, %c0_58], %80 {strides = array<i32>} : memref<256x128xbf16, #tpu.memory_space<vmem>>, vector<128x128xbf16>,
    %c0_59 = arith.constant 0 : index
    %c0_60 = arith.constant 0 : index
    %82 = memref.load %arg2[%c0_59, %c0_60] : memref<4x2xf32, #tpu.memory_space<smem>>
    %c0_61 = arith.constant 0 : index
    %c0_62 = arith.constant 0 : index
    %c0_63 = arith.constant 0 : index
    %83 = vector.load %arg0[%c0_61, %c0_62, %c0_63] : memref<4x128x128xbf16, #tpu.memory_space<vmem>>, vector<1x128x128xbf16>
    %84 = vector.shape_cast %83 : vector<1x128x128xbf16> to vector<128x128xbf16>
    %85 = arith.extf %84 : vector<128x128xbf16> to vector<128x128xf32>
    %86 = vector.broadcast %82 : f32 to vector<128x128xf32>
    %87 = arith.mulf %86, %85 : vector<128x128xf32>
    %c1_64 = arith.constant 1 : index
    %c0_65 = arith.constant 0 : index
    %88 = memref.load %arg2[%c1_64, %c0_65] : memref<4x2xf32, #tpu.memory_space<smem>>
    %c1_66 = arith.constant 1 : index
    %c0_67 = arith.constant 0 : index
    %c0_68 = arith.constant 0 : index
    %89 = vector.load %arg0[%c1_66, %c0_67, %c0_68] : memref<4x128x128xbf16, #tpu.memory_space<vmem>>, vector<1x128x128xbf16>
    %90 = vector.shape_cast %89 : vector<1x128x128xbf16> to vector<128x128xbf16>
    %91 = arith.extf %90 : vector<128x128xbf16> to vector<128x128xf32>
    %92 = vector.broadcast %88 : f32 to vector<128x128xf32>
    %93 = arith.mulf %92, %91 : vector<128x128xf32>
    %94 = arith.addf %87, %93 : vector<128x128xf32>
    %c2_69 = arith.constant 2 : index
    %c0_70 = arith.constant 0 : index
    %95 = memref.load %arg2[%c2_69, %c0_70] : memref<4x2xf32, #tpu.memory_space<smem>>
    %c2_71 = arith.constant 2 : index
    %c0_72 = arith.constant 0 : index
    %c0_73 = arith.constant 0 : index
    %96 = vector.load %arg0[%c2_71, %c0_72, %c0_73] : memref<4x128x128xbf16, #tpu.memory_space<vmem>>, vector<1x128x128xbf16>
    %97 = vector.shape_cast %96 : vector<1x128x128xbf16> to vector<128x128xbf16>
    %98 = arith.extf %97 : vector<128x128xbf16> to vector<128x128xf32>
    %99 = vector.broadcast %95 : f32 to vector<128x128xf32>
    %100 = arith.mulf %99, %98 : vector<128x128xf32>
    %101 = arith.addf %94, %100 : vector<128x128xf32>
    %c3_74 = arith.constant 3 : index
    %c0_75 = arith.constant 0 : index
    %102 = memref.load %arg2[%c3_74, %c0_75] : memref<4x2xf32, #tpu.memory_space<smem>>
    %c3_76 = arith.constant 3 : index
    %c0_77 = arith.constant 0 : index
    %c0_78 = arith.constant 0 : index
    %103 = vector.load %arg0[%c3_76, %c0_77, %c0_78] : memref<4x128x128xbf16, #tpu.memory_space<vmem>>, vector<1x128x128xbf16>
    %104 = vector.shape_cast %103 : vector<1x128x128xbf16> to vector<128x128xbf16>
    %105 = arith.extf %104 : vector<128x128xbf16> to vector<128x128xf32>
    %106 = vector.broadcast %102 : f32 to vector<128x128xf32>
    %107 = arith.mulf %106, %105 : vector<128x128xf32>
    %108 = arith.addf %101, %107 : vector<128x128xf32>
    %109 = arith.truncf %108 : vector<128x128xf32> to vector<128x128xbf16>
    %c0_79 = arith.constant 0 : index
    %c0_80 = arith.constant 0 : index
    %110 = vector.load %arg9[%c0_79, %c0_80] : memref<128x256xbf16, #tpu.memory_space<vmem>>, vector<128x128xbf16>
    tpu.vector_store %arg9[%c0_79, %c0_80], %109 {strides = array<i32>} : memref<128x256xbf16, #tpu.memory_space<vmem>>, vector<128x128xbf16>,
    %111 = vector.extract_strided_slice %78 {offsets = [0, 128], sizes = [128, 128], strides = [1, 1]} : vector<128x384xf32> to vector<128x128xf32>
    %112 = arith.truncf %111 : vector<128x128xf32> to vector<128x128xbf16>
    %c128_81 = arith.constant 128 : index
    %c0_82 = arith.constant 0 : index
    %113 = vector.load %arg10[%c128_81, %c0_82] : memref<256x128xbf16, #tpu.memory_space<vmem>>, vector<128x128xbf16>
    tpu.vector_store %arg10[%c128_81, %c0_82], %112 {strides = array<i32>} : memref<256x128xbf16, #tpu.memory_space<vmem>>, vector<128x128xbf16>,
    %c0_83 = arith.constant 0 : index
    %c1_84 = arith.constant 1 : index
    %114 = memref.load %arg2[%c0_83, %c1_84] : memref<4x2xf32, #tpu.memory_space<smem>>
    %c0_85 = arith.constant 0 : index
    %c0_86 = arith.constant 0 : index
    %c0_87 = arith.constant 0 : index
    %115 = vector.load %arg0[%c0_85, %c0_86, %c0_87] : memref<4x128x128xbf16, #tpu.memory_space<vmem>>, vector<1x128x128xbf16>
    %116 = vector.shape_cast %115 : vector<1x128x128xbf16> to vector<128x128xbf16>
    %117 = arith.extf %116 : vector<128x128xbf16> to vector<128x128xf32>
    %118 = vector.broadcast %114 : f32 to vector<128x128xf32>
    %119 = arith.mulf %118, %117 : vector<128x128xf32>
    %c1_88 = arith.constant 1 : index
    %c1_89 = arith.constant 1 : index
    %120 = memref.load %arg2[%c1_88, %c1_89] : memref<4x2xf32, #tpu.memory_space<smem>>
    %c1_90 = arith.constant 1 : index
    %c0_91 = arith.constant 0 : index
    %c0_92 = arith.constant 0 : index
    %121 = vector.load %arg0[%c1_90, %c0_91, %c0_92] : memref<4x128x128xbf16, #tpu.memory_space<vmem>>, vector<1x128x128xbf16>
    %122 = vector.shape_cast %121 : vector<1x128x128xbf16> to vector<128x128xbf16>
    %123 = arith.extf %122 : vector<128x128xbf16> to vector<128x128xf32>
    %124 = vector.broadcast %120 : f32 to vector<128x128xf32>
    %125 = arith.mulf %124, %123 : vector<128x128xf32>
    %126 = arith.addf %119, %125 : vector<128x128xf32>
    %c2_93 = arith.constant 2 : index
    %c1_94 = arith.constant 1 : index
    %127 = memref.load %arg2[%c2_93, %c1_94] : memref<4x2xf32, #tpu.memory_space<smem>>
    %c2_95 = arith.constant 2 : index
    %c0_96 = arith.constant 0 : index
    %c0_97 = arith.constant 0 : index
    %128 = vector.load %arg0[%c2_95, %c0_96, %c0_97] : memref<4x128x128xbf16, #tpu.memory_space<vmem>>, vector<1x128x128xbf16>
    %129 = vector.shape_cast %128 : vector<1x128x128xbf16> to vector<128x128xbf16>
    %130 = arith.extf %129 : vector<128x128xbf16> to vector<128x128xf32>
    %131 = vector.broadcast %127 : f32 to vector<128x128xf32>
    %132 = arith.mulf %131, %130 : vector<128x128xf32>
    %133 = arith.addf %126, %132 : vector<128x128xf32>
    %c3_98 = arith.constant 3 : index
    %c1_99 = arith.constant 1 : index
    %134 = memref.load %arg2[%c3_98, %c1_99] : memref<4x2xf32, #tpu.memory_space<smem>>
    %c3_100 = arith.constant 3 : index
    %c0_101 = arith.constant 0 : index
    %c0_102 = arith.constant 0 : index
    %135 = vector.load %arg0[%c3_100, %c0_101, %c0_102] : memref<4x128x128xbf16, #tpu.memory_space<vmem>>, vector<1x128x128xbf16>
    %136 = vector.shape_cast %135 : vector<1x128x128xbf16> to vector<128x128xbf16>
    %137 = arith.extf %136 : vector<128x128xbf16> to vector<128x128xf32>
    %138 = vector.broadcast %134 : f32 to vector<128x128xf32>
    %139 = arith.mulf %138, %137 : vector<128x128xf32>
    %140 = arith.addf %133, %139 : vector<128x128xf32>
    %141 = arith.truncf %140 : vector<128x128xf32> to vector<128x128xbf16>
    %c0_103 = arith.constant 0 : index
    %c128_104 = arith.constant 128 : index
    %142 = vector.load %arg9[%c0_103, %c128_104] : memref<128x256xbf16, #tpu.memory_space<vmem>>, vector<128x128xbf16>
    tpu.vector_store %arg9[%c0_103, %c128_104], %141 {strides = array<i32>} : memref<128x256xbf16, #tpu.memory_space<vmem>>, vector<128x128xbf16>,
    %c0_105 = arith.constant 0 : index
    %c0_106 = arith.constant 0 : index
    %143 = vector.load %arg9[%c0_105, %c0_106] : memref<128x256xbf16, #tpu.memory_space<vmem>>, vector<128x256xbf16>
    %c0_107 = arith.constant 0 : index
    %c0_108 = arith.constant 0 : index
    %144 = vector.load %arg10[%c0_107, %c0_108] : memref<256x128xbf16, #tpu.memory_space<vmem>>, vector<256x128xbf16>
    %cst_109 = arith.constant dense<0.000000e+00> : vector<128x128xf32>
    %145 = tpu.matmul %143, %144, %cst_109 {dimension_numbers = #tpu.dot_dimension_numbers<[1], [0], [0], [1], [0, 0, 1, 1], [], []>} : vector<128x256xbf16>, vector<256x128xbf16>, vector<128x128xf32> -> vector<128x128xf32>
    %146 = vector.extract_strided_slice %78 {offsets = [0, 256], sizes = [128, 128], strides = [1, 1]} : vector<128x384xf32> to vector<128x128xf32>
    %147 = arith.addf %145, %146 : vector<128x128xf32>
    %c0_110 = arith.constant 0 : index
    %c0_111 = arith.constant 0 : index
    %148 = vector.load %arg7[%c0_110, %c0_111] : memref<1x128xf32, #tpu.memory_space<vmem>>, vector<1x128xf32>
    %149 = vector.broadcast %148 : vector<1x128xf32> to vector<128x128xf32>
    %150 = arith.addf %147, %149 : vector<128x128xf32>
    %cst_112 = arith.constant 0.000000e+00 : f32
    %151 = vector.broadcast %cst_112 : f32 to vector<128x128xf32>
    %152 = arith.maximumf %150, %151 : vector<128x128xf32>
    %c0_113 = arith.constant 0 : index
    %c0_114 = arith.constant 0 : index
    %153 = vector.load %arg8[%c0_113, %c0_114] : memref<128x128xf32, #tpu.memory_space<vmem>>, vector<128x128xf32>
    tpu.vector_store %arg8[%c0_113, %c0_114], %152 {strides = array<i32>} : memref<128x128xf32, #tpu.memory_space<vmem>>, vector<128x128xf32>,
    return
  }
}

</mosaic_0001>

<llo_original>
// kernel: graph_encoder_gcn_forward.1
$region0: #{graph_encoder_gcn_forward.1}
  #allocation0 [shape = 'u32[]', space=smem, size = 0x4, offset = 0x4, fixed_abs, tag = 'smem constant byte address 0x4 - core index']
  #allocation1 [shape = 'u32[144,128]{1,0:T(1,128)}', space=vmem, size = 0x12000, scoped, tag = 'internal scratch']
  #allocation2 [shape = 'bf16[128,256]{1,0:T(8,128)(2,1)}', space=vmem, size = 0x10000, scoped, tag = 'scratch operand']
  #allocation3 [shape = 'bf16[256,128]{1,0:T(8,128)(2,1)}', space=vmem, size = 0x10000, scoped, tag = 'scratch operand']
  %s0 = inlined_call_operand.vmem [shape: bf16[4,128,128], index: 0, kind: input, shape index: {}]
  %s1 = inlined_call_operand.vmem [shape: f32[4,2], index: 1, kind: input, shape index: {}]
  %s2 = inlined_call_operand.vmem [shape: f32[4,2], index: 2, kind: input, shape index: {}]
  %s3 = inlined_call_operand.vmem [shape: bf16[128,128], index: 3, kind: input, shape index: {}]
  %s4 = inlined_call_operand.vmem [shape: bf16[128,384], index: 4, kind: input, shape index: {}]
  %s5 = inlined_call_operand.vmem [shape: f32[1,128], index: 5, kind: input, shape index: {}]
  %s6 = inlined_call_operand.vmem [shape: bf16[128,384], index: 6, kind: input, shape index: {}]
  %s7 = inlined_call_operand.vmem [shape: f32[1,128], index: 7, kind: input, shape index: {}]
  %s8 = inlined_call_operand.vmem [shape: f32[128,128], index: 8, kind: output, shape index: {}]
  %s9 = sld [smem:[#allocation0]]
  $region50: #{graph_encoder_gcn_forward.1} parent=0
    _
  %s11 = ssub.s32 1, %s9
  %s12 = scalar_select 0, %s11, %s9
  $region1: #{graph_encoder_gcn_forward.1} parent=0
    #allocation4 [shape = 'u8[2048]{0}', space=smem, size = 0x800, scoped, tag = 'input window, operand 1, single buffered']
    #allocation5 [shape = 's32[1]{0}', space=sflag, size = 0x4, scoped, tag = 'scoped memory for graph_encoder_gcn_forward.1']
    #allocation6 [shape = 'u8[2048]{0}', space=smem, size = 0x800, scoped, tag = 'input window, operand 2, single buffered']
    #allocation7 [shape = 's32[1]{0}', space=sflag, size = 0x4, scoped, tag = 'scoped memory for graph_encoder_gcn_forward.1']
    %13 = vsyncpa [#allocation5], 0
    %14 = vsyncpa [#allocation7], 0
    // Predicated region
    $region2: #{graph_encoder_gcn_forward.1} parent=1 // pred_check
      _
    $region3: #{graph_encoder_gcn_forward.1} parent=1 // pred_check_branch
      %16 = sbr.rel (0) target = $region5
    $region4: #{graph_encoder_gcn_forward.1} parent=1 // pred_region
      _
    $region5: #{graph_encoder_gcn_forward.1} parent=1 // pred_fallthru
      _
    // Predicated region
    $region6: #{graph_encoder_gcn_forward.1} parent=1 // pred_check
      _
    $region7: #{graph_encoder_gcn_forward.1} parent=1 // pred_check_branch
      %18 = sbr.rel (0) target = $region9
    $region8: #{graph_encoder_gcn_forward.1} parent=1 // pred_region
      %s20 = ssub.s32 64, 64
      %21 = vsyncadd [#allocation5], %s20
      %s23 = sshll.u32 %s1, 4
      %s24 = int_to_ptr.vmem [resolvable:$true] %s23
      %26 = dma.vmem_to_smem %s24, 64, [#allocation4], [#allocation5]
    $region9: #{graph_encoder_gcn_forward.1} parent=1 // pred_fallthru
      _
    // Predicated region
    $region10: #{graph_encoder_gcn_forward.1} parent=1 // pred_check
      _
    $region11: #{graph_encoder_gcn_forward.1} parent=1 // pred_check_branch
      %28 = sbr.rel (0) target = $region13
    $region12: #{graph_encoder_gcn_forward.1} parent=1 // pred_region
      %s30 = ssub.s32 64, 64
      %31 = vsyncadd [#allocation7], %s30
      %s33 = sshll.u32 %s2, 4
      %s34 = int_to_ptr.vmem [resolvable:$true] %s33
      %36 = dma.vmem_to_smem %s34, 64, [#allocation6], [#allocation7]
    $region13: #{graph_encoder_gcn_forward.1} parent=1 // pred_fallthru
      _
    // Predicated region
    $region14: #{graph_encoder_gcn_forward.1} parent=1 // pred_check
      _
    $region15: #{graph_encoder_gcn_forward.1} parent=1 // pred_check_branch
      %38 = sbr.rel (0) target = $region17
    $region16: #{graph_encoder_gcn_forward.1} parent=1 // pred_region
      _
    $region17: #{graph_encoder_gcn_forward.1} parent=1 // pred_fallthru
      _
    // Predicated region
    $region18: #{graph_encoder_gcn_forward.1} parent=1 // pred_check
      _
    $region19: #{graph_encoder_gcn_forward.1} parent=1 // pred_check_branch
      %40 = sbr.rel (0) target = $region21
    $region20: #{graph_encoder_gcn_forward.1} parent=1 // pred_region
      _
    $region21: #{graph_encoder_gcn_forward.1} parent=1 // pred_fallthru
      _
    // Predicated region
    $region22: #{graph_encoder_gcn_forward.1} parent=1 // pred_check
      _
    $region23: #{graph_encoder_gcn_forward.1} parent=1 // pred_check_branch
      %42 = sbr.rel (0) target = $region25
    $region24: #{graph_encoder_gcn_forward.1} parent=1 // pred_region
      _
    $region25: #{graph_encoder_gcn_forward.1} parent=1 // pred_fallthru
      _
    // Predicated region
    $region26: #{graph_encoder_gcn_forward.1} parent=1 // pred_check
      _
    $region27: #{graph_encoder_gcn_forward.1} parent=1 // pred_check_branch
      %44 = sbr.rel (0) target = $region29
    $region28: #{graph_encoder_gcn_forward.1} parent=1 // pred_region
      _
    $region29: #{graph_encoder_gcn_forward.1} parent=1 // pred_fallthru
      _
    // Predicated region
    $region30: #{graph_encoder_gcn_forward.1} parent=1 // pred_check
      _
    $region31: #{graph_encoder_gcn_forward.1} parent=1 // pred_check_branch
      %46 = sbr.rel (0) target = $region33
    $region32: #{graph_encoder_gcn_forward.1} parent=1 // pred_region
      _
    $region33: #{graph_encoder_gcn_forward.1} parent=1 // pred_fallthru
      _
    // Predicated region
    $region34: #{graph_encoder_gcn_forward.1} parent=1 // pred_check
      _
    $region35: #{graph_encoder_gcn_forward.1} parent=1 // pred_check_branch
      %48 = sbr.rel (0) target = $region37
    $region36: #{graph_encoder_gcn_forward.1} parent=1 // pred_region
      %49 = dma.done [#allocation5], 64
    $region37: #{graph_encoder_gcn_forward.1} parent=1 // pred_fallthru
      _
    // Predicated region
    $region38: #{graph_encoder_gcn_forward.1} parent=1 // pred_check
      _
    $region39: #{graph_encoder_gcn_forward.1} parent=1 // pred_check_branch
      %51 = sbr.rel (0) target = $region41
    $region40: #{graph_encoder_gcn_forward.1} parent=1 // pred_region
      %52 = dma.done [#allocation7], 64
    $region41: #{graph_encoder_gcn_forward.1} parent=1 // pred_fallthru
      _
    %53 = sfence
    %v55 = vld [vmem:[%s3] sm:$0xf]
    %v56 = vld [vmem:[%s3 + $0x4] sm:$0xf]
    %v57 = vld [vmem:[%s3 + $0x8] sm:$0xf]
    %v58 = vld [vmem:[%s3 + $0xc] sm:$0xf]
    %v59 = vld [vmem:[%s3 + $0x10] sm:$0xf]
    %v60 = vld [vmem:[%s3 + $0x14] sm:$0xf]
    %v61 = vld [vmem:[%s3 + $0x18] sm:$0xf]
    %v62 = vld [vmem:[%s3 + $0x1c] sm:$0xf]
    %v63 = vld [vmem:[%s3 + $0x20] sm:$0xf]
    %v64 = vld [vmem:[%s3 + $0x24] sm:$0xf]
    %v65 = vld [vmem:[%s3 + $0x28] sm:$0xf]
    %v66 = vld [vmem:[%s3 + $0x2c] sm:$0xf]
    %v67 = vld [vmem:[%s3 + $0x30] sm:$0xf]
    %v68 = vld [vmem:[%s3 + $0x34] sm:$0xf]
    %v69 = vld [vmem:[%s3 + $0x38] sm:$0xf]
    %v70 = vld [vmem:[%s3 + $0x3c] sm:$0xf]
    %v71 = vld [vmem:[%s4] sm:$0xff]
    %v72 = vld [vmem:[%s4 + $0x8] sm:$0xf]
    %v73 = vld [vmem:[%s4 + $0xc] sm:$0xff]
    %v74 = vld [vmem:[%s4 + $0x14] sm:$0xf]
    %v75 = vld [vmem:[%s4 + $0x18] sm:$0xff]
    %v76 = vld [vmem:[%s4 + $0x20] sm:$0xf]
    %v77 = vld [vmem:[%s4 + $0x24] sm:$0xff]
    %v78 = vld [vmem:[%s4 + $0x2c] sm:$0xf]
    %v79 = vld [vmem:[%s4 + $0x30] sm:$0xff]
    %v80 = vld [vmem:[%s4 + $0x38] sm:$0xf]
    %v81 = vld [vmem:[%s4 + $0x3c] sm:$0xff]
    %v82 = vld [vmem:[%s4 + $0x44] sm:$0xf]
    %v83 = vld [vmem:[%s4 + $0x48] sm:$0xff]
    %v84 = vld [vmem:[%s4 + $0x50] sm:$0xf]
    %v85 = vld [vmem:[%s4 + $0x54] sm:$0xff]
    %v86 = vld [vmem:[%s4 + $0x5c] sm:$0xf]
    %v87 = vld [vmem:[%s4 + $0x60] sm:$0xff]
    %v88 = vld [vmem:[%s4 + $0x68] sm:$0xf]
    %v89 = vld [vmem:[%s4 + $0x6c] sm:$0xff]
    %v90 = vld [vmem:[%s4 + $0x74] sm:$0xf]
    %v91 = vld [vmem:[%s4 + $0x78] sm:$0xff]
    %v92 = vld [vmem:[%s4 + $0x80] sm:$0xf]
    %v93 = vld [vmem:[%s4 + $0x84] sm:$0xff]
    %v94 = vld [vmem:[%s4 + $0x8c] sm:$0xf]
    %v95 = vld [vmem:[%s4 + $0x90] sm:$0xff]
    %v96 = vld [vmem:[%s4 + $0x98] sm:$0xf]
    %v97 = vld [vmem:[%s4 + $0x9c] sm:$0xff]
    %v98 = vld [vmem:[%s4 + $0xa4] sm:$0xf]
    %v99 = vld [vmem:[%s4 + $0xa8] sm:$0xff]
    %v100 = vld [vmem:[%s4 + $0xb0] sm:$0xf]
    %v101 = vld [vmem:[%s4 + $0xb4] sm:$0xff]
    %v102 = vld [vmem:[%s4 + $0xbc] sm:$0xf]
    %v119 = vunpack.c.l.b16 %v55
    %v120 = vunpack.c.l.b16 %v56
    %v121 = vunpack.c.l.b16 %v57
    %v122 = vunpack.c.l.b16 %v58
    %v123 = vunpack.c.l.b16 %v59
    %v124 = vunpack.c.l.b16 %v60
    %v125 = vunpack.c.l.b16 %v61
    %v126 = vunpack.c.l.b16 %v62
    %v127 = vunpack.c.l.b16 %v63
    %v128 = vunpack.c.l.b16 %v64
    %v129 = vunpack.c.l.b16 %v65
    %v130 = vunpack.c.l.b16 %v66
    %v131 = vunpack.c.l.b16 %v67
    %v132 = vunpack.c.l.b16 %v68
    %v133 = vunpack.c.l.b16 %v69
    %v134 = vunpack.c.l.b16 %v70
    %v135 = vpack.c.b16 %v120, %v119
    %v136 = vpack.c.b16 %v122, %v121
    %v137 = vpack.c.b16 %v124, %v123
    %v138 = vpack.c.b16 %v126, %v125
    %v139 = vpack.c.b16 %v128, %v127
    %v140 = vpack.c.b16 %v130, %v129
    %v141 = vpack.c.b16 %v132, %v131
    %v142 = vpack.c.b16 %v134, %v133
    %v183 = vunpack.c.l.b16 %v71
    %v184 = vunpack.c.h.b16 %v71
    %v185 = vunpack.c.l.b16 %v72
    %v186 = vunpack.c.l.b16 %v73
    %v187 = vunpack.c.h.b16 %v73
    %v188 = vunpack.c.l.b16 %v74
    %v189 = vunpack.c.l.b16 %v75
    %v190 = vunpack.c.h.b16 %v75
    %v191 = vunpack.c.l.b16 %v76
    %v192 = vunpack.c.l.b16 %v77
    %v193 = vunpack.c.h.b16 %v77
    %v194 = vunpack.c.l.b16 %v78
    %v195 = vunpack.c.l.b16 %v79
    %v196 = vunpack.c.h.b16 %v79
    %v197 = vunpack.c.l.b16 %v80
    %v198 = vunpack.c.l.b16 %v81
    %v199 = vunpack.c.h.b16 %v81
    %v200 = vunpack.c.l.b16 %v82
    %v201 = vunpack.c.l.b16 %v83
    %v202 = vunpack.c.h.b16 %v83
    %v203 = vunpack.c.l.b16 %v84
    %v204 = vunpack.c.l.b16 %v85
    %v205 = vunpack.c.h.b16 %v85
    %v206 = vunpack.c.l.b16 %v86
    %v207 = vunpack.c.l.b16 %v87
    %v208 = vunpack.c.h.b16 %v87
    %v209 = vunpack.c.l.b16 %v88
    %v210 = vunpack.c.l.b16 %v89
    %v211 = vunpack.c.h.b16 %v89
    %v212 = vunpack.c.l.b16 %v90
    %v213 = vunpack.c.l.b16 %v91
    %v214 = vunpack.c.h.b16 %v91
    %v215 = vunpack.c.l.b16 %v92
    %v216 = vunpack.c.l.b16 %v93
    %v217 = vunpack.c.h.b16 %v93
    %v218 = vunpack.c.l.b16 %v94
    %v219 = vunpack.c.l.b16 %v95
    %v220 = vunpack.c.h.b16 %v95
    %v221 = vunpack.c.l.b16 %v96
    %v222 = vunpack.c.l.b16 %v97
    %v223 = vunpack.c.h.b16 %v97
    %v224 = vunpack.c.l.b16 %v98
    %v225 = vunpack.c.l.b16 %v99
    %v226 = vunpack.c.h.b16 %v99
    %v227 = vunpack.c.l.b16 %v100
    %v228 = vunpack.c.l.b16 %v101
    %v229 = vunpack.c.h.b16 %v101
    %v230 = vunpack.c.l.b16 %v102
    %v231 = vpack.c.b16 %v186, %v183
    %v232 = vpack.c.b16 %v187, %v184
    %v233 = vpack.c.b16 %v188, %v185
    %v234 = vpack.c.b16 %v192, %v189
    %v235 = vpack.c.b16 %v193, %v190
    %v236 = vpack.c.b16 %v194, %v191
    %v237 = vpack.c.b16 %v198, %v195
    %v238 = vpack.c.b16 %v199, %v196
    %v239 = vpack.c.b16 %v200, %v197
    %v240 = vpack.c.b16 %v204, %v201
    %v241 = vpack.c.b16 %v205, %v202
    %v242 = vpack.c.b16 %v206, %v203
    %v243 = vpack.c.b16 %v210, %v207
    %v244 = vpack.c.b16 %v211, %v208
    %v245 = vpack.c.b16 %v212, %v209
    %v246 = vpack.c.b16 %v216, %v213
    %v247 = vpack.c.b16 %v217, %v214
    %v248 = vpack.c.b16 %v218, %v215
    %v249 = vpack.c.b16 %v222, %v219
    %v250 = vpack.c.b16 %v223, %v220
    %v251 = vpack.c.b16 %v224, %v221
    %v252 = vpack.c.b16 %v228, %v225
    %v253 = vpack.c.b16 %v229, %v226
    %v254 = vpack.c.b16 %v230, %v227
    %279 = vmatprep.subr.bf16.mxu0 %v253
    %280 = vmatpush1.bf16.msra.mxu0 %v252
    %281 = vmatprep.subr.bf16.mxu0 %v250
    %282 = vmatpush1.bf16.msra.mxu0 %v249
    %283 = vmatprep.subr.bf16.mxu0 %v247
    %284 = vmatpush1.bf16.msra.mxu0 %v246
    %285 = vmatprep.subr.bf16.mxu0 %v244
    %286 = vmatpush1.bf16.msra.mxu0 %v243
    %287 = vmatprep.subr.bf16.mxu0 %v241
    %288 = vmatpush1.bf16.msra.mxu0 %v240
    %289 = vmatprep.subr.bf16.mxu0 %v238
    %290 = vmatpush1.bf16.msra.mxu0 %v237
    %291 = vmatprep.subr.bf16.mxu0 %v235
    %292 = vmatpush1.bf16.msra.mxu0 %v234
    %293 = vmatprep.subr.bf16.mxu0 %v232
    %294 = vmatpush1.bf16.msra.mxu0 %v231
    %295 = vmatprep.subr.bf16.mxu0 0
    %296 = vmatpush2.bf16.msra.mxu0 0
    %297 = vmatprep.subr.bf16.mxu0 0
    %298 = vmatpush2.bf16.msra.mxu0 0
    %299 = vmatprep.subr.bf16.mxu0 0
    %300 = vmatpush2.bf16.msra.mxu0 0
    %301 = vmatprep.subr.bf16.mxu0 0
    %302 = vmatpush2.bf16.msra.mxu0 0
    %303 = vmatprep.subr.bf16.mxu0 0
    %304 = vmatpush2.bf16.msra.mxu0 0
    %305 = vmatprep.subr.bf16.mxu0 0
    %306 = vmatpush2.bf16.msra.mxu0 0
    %307 = vmatprep.subr.bf16.mxu0 0
    %308 = vmatpush2.bf16.msra.mxu0 0
    %309 = vmatprep.subr.bf16.mxu0 0
    %310 = vmatpush2.bf16.msra.mxu0 0
    %311 = vmatprep.mubr.bf16.mxu0 0
    %312 = vmatmul.mubr.bf16.gmra.mxu0 %v135
    %v313 = vpop.f32.mrf.mxu0
    %v314 = vadd.f32 0.0, %v313
    %v315 = vpop.f32.mrf.mxu0
    %v316 = vadd.f32 0.0, %v315
    %v317 = vpop.f32.mrf.mxu0
    %v318 = vadd.f32 0.0, %v317
    %v319 = vpop.f32.mrf.mxu0
    %v320 = vadd.f32 0.0, %v319
    %321 = vmatprep.mubr.bf16.mxu0 0
    %322 = vmatmul.mubr.bf16.gmra.mxu0 %v136
    %v323 = vpop.f32.mrf.mxu0
    %v324 = vadd.f32 0.0, %v323
    %v325 = vpop.f32.mrf.mxu0
    %v326 = vadd.f32 0.0, %v325
    %v327 = vpop.f32.mrf.mxu0
    %v328 = vadd.f32 0.0, %v327
    %v329 = vpop.f32.mrf.mxu0
    %v330 = vadd.f32 0.0, %v329
    %331 = vmatprep.mubr.bf16.mxu0 0
    %332 = vmatmul.mubr.bf16.gmra.mxu0 %v137
    %v333 = vpop.f32.mrf.mxu0
    %v334 = vadd.f32 0.0, %v333
    %v335 = vpop.f32.mrf.mxu0
    %v336 = vadd.f32 0.0, %v335
    %v337 = vpop.f32.mrf.mxu0
    %v338 = vadd.f32 0.0, %v337
    %v339 = vpop.f32.mrf.mxu0
    %v340 = vadd.f32 0.0, %v339
    %341 = vmatprep.mubr.bf16.mxu0 0
    %342 = vmatmul.mubr.bf16.gmra.mxu0 %v138
    %v343 = vpop.f32.mrf.mxu0
    %v344 = vadd.f32 0.0, %v343
    %v345 = vpop.f32.mrf.mxu0
    %v346 = vadd.f32 0.0, %v345
    %v347 = vpop.f32.mrf.mxu0
    %v348 = vadd.f32 0.0, %v347
    %v349 = vpop.f32.mrf.mxu0
    %v350 = vadd.f32 0.0, %v349
    %351 = vmatprep.mubr.bf16.mxu0 0
    %352 = vmatmul.mubr.bf16.gmra.mxu0 %v139
    %v353 = vpop.f32.mrf.mxu0
    %v354 = vadd.f32 0.0, %v353
    %v355 = vpop.f32.mrf.mxu0
    %v356 = vadd.f32 0.0, %v355
    %v357 = vpop.f32.mrf.mxu0
    %v358 = vadd.f32 0.0, %v357
    %v359 = vpop.f32.mrf.mxu0
    %v360 = vadd.f32 0.0, %v359
    %361 = vmatprep.mubr.bf16.mxu0 0
    %362 = vmatmul.mubr.bf16.gmra.mxu0 %v140
    %v363 = vpop.f32.mrf.mxu0
    %v364 = vadd.f32 0.0, %v363
    %v365 = vpop.f32.mrf.mxu0
    %v366 = vadd.f32 0.0, %v365
    %v367 = vpop.f32.mrf.mxu0
    %v368 = vadd.f32 0.0, %v367
    %v369 = vpop.f32.mrf.mxu0
    %v370 = vadd.f32 0.0, %v369
    %371 = vmatprep.mubr.bf16.mxu0 0
    %372 = vmatmul.mubr.bf16.gmra.mxu0 %v141
    %v373 = vpop.f32.mrf.mxu0
    %v374 = vadd.f32 0.0, %v373
    %v375 = vpop.f32.mrf.mxu0
    %v376 = vadd.f32 0.0, %v375
    %v377 = vpop.f32.mrf.mxu0
    %v378 = vadd.f32 0.0, %v377
    %v379 = vpop.f32.mrf.mxu0
    %v380 = vadd.f32 0.0, %v379
    %381 = vmatprep.mubr.bf16.mxu0 0
    %382 = vmatmul.mubr.bf16.gmra.mxu0 %v142
    %v383 = vpop.f32.mrf.mxu0
    %v384 = vadd.f32 0.0, %v383
    %v385 = vpop.f32.mrf.mxu0
    %v386 = vadd.f32 0.0, %v385
    %v387 = vpop.f32.mrf.mxu0
    %v388 = vadd.f32 0.0, %v387
    %v389 = vpop.f32.mrf.mxu0
    %v390 = vadd.f32 0.0, %v389
    %391 = vdwg.mxu0
    %392 = vmatprep.subr.bf16.mxu0 0
    %393 = vmatpush1.bf16.msra.mxu0 %v254
    %394 = vmatprep.subr.bf16.mxu0 0
    %395 = vmatpush1.bf16.msra.mxu0 %v251
    %396 = vmatprep.subr.bf16.mxu0 0
    %397 = vmatpush1.bf16.msra.mxu0 %v248
    %398 = vmatprep.subr.bf16.mxu0 0
    %399 = vmatpush1.bf16.msra.mxu0 %v245
    %400 = vmatprep.subr.bf16.mxu0 0
    %401 = vmatpush1.bf16.msra.mxu0 %v242
    %402 = vmatprep.subr.bf16.mxu0 0
    %403 = vmatpush1.bf16.msra.mxu0 %v239
    %404 = vmatprep.subr.bf16.mxu0 0
    %405 = vmatpush1.bf16.msra.mxu0 %v236
    %406 = vmatprep.subr.bf16.mxu0 0
    %407 = vmatpush1.bf16.msra.mxu0 %v233
    %408 = vmatprep.subr.bf16.mxu0 0
    %409 = vmatpush2.bf16.msra.mxu0 0
    %410 = vmatprep.subr.bf16.mxu0 0
    %411 = vmatpush2.bf16.msra.mxu0 0
    %412 = vmatprep.subr.bf16.mxu0 0
    %413 = vmatpush2.bf16.msra.mxu0 0
    %414 = vmatprep.subr.bf16.mxu0 0
    %415 = vmatpush2.bf16.msra.mxu0 0
    %416 = vmatprep.subr.bf16.mxu0 0
    %417 = vmatpush2.bf16.msra.mxu0 0
    %418 = vmatprep.subr.bf16.mxu0 0
    %419 = vmatpush2.bf16.msra.mxu0 0
    %420 = vmatprep.subr.bf16.mxu0 0
    %421 = vmatpush2.bf16.msra.mxu0 0
    %422 = vmatprep.subr.bf16.mxu0 0
    %423 = vmatpush2.bf16.msra.mxu0 0
    %424 = vmatprep.mubr.bf16.mxu0 0
    %425 = vmatmul.mubr.bf16.gmra.mxu0 %v135
    %v426 = vpop.f32.mrf.mxu0
    %v427 = vadd.f32 0.0, %v426
    %v428 = vpop.f32.mrf.mxu0
    %v429 = vpop.f32.mrf.mxu0
    %v430 = vadd.f32 0.0, %v429
    %v431 = vpop.f32.mrf.mxu0
    %432 = vmatprep.mubr.bf16.mxu0 0
    %433 = vmatmul.mubr.bf16.gmra.mxu0 %v136
    %v434 = vpop.f32.mrf.mxu0
    %v435 = vadd.f32 0.0, %v434
    %v436 = vpop.f32.mrf.mxu0
    %v437 = vpop.f32.mrf.mxu0
    %v438 = vadd.f32 0.0, %v437
    %v439 = vpop.f32.mrf.mxu0
    %440 = vmatprep.mubr.bf16.mxu0 0
    %441 = vmatmul.mubr.bf16.gmra.mxu0 %v137
    %v442 = vpop.f32.mrf.mxu0
    %v443 = vadd.f32 0.0, %v442
    %v444 = vpop.f32.mrf.mxu0
    %v445 = vpop.f32.mrf.mxu0
    %v446 = vadd.f32 0.0, %v445
    %v447 = vpop.f32.mrf.mxu0
    %448 = vmatprep.mubr.bf16.mxu0 0
    %449 = vmatmul.mubr.bf16.gmra.mxu0 %v138
    %v450 = vpop.f32.mrf.mxu0
    %v451 = vadd.f32 0.0, %v450
    %v452 = vpop.f32.mrf.mxu0
    %v453 = vpop.f32.mrf.mxu0
    %v454 = vadd.f32 0.0, %v453
    %v455 = vpop.f32.mrf.mxu0
    %456 = vmatprep.mubr.bf16.mxu0 0
    %457 = vmatmul.mubr.bf16.gmra.mxu0 %v139
    %v458 = vpop.f32.mrf.mxu0
    %v459 = vadd.f32 0.0, %v458
    %v460 = vpop.f32.mrf.mxu0
    %v461 = vpop.f32.mrf.mxu0
    %v462 = vadd.f32 0.0, %v461
    %v463 = vpop.f32.mrf.mxu0
    %464 = vmatprep.mubr.bf16.mxu0 0
    %465 = vmatmul.mubr.bf16.gmra.mxu0 %v140
    %v466 = vpop.f32.mrf.mxu0
    %v467 = vadd.f32 0.0, %v466
    %v468 = vpop.f32.mrf.mxu0
    %v469 = vpop.f32.mrf.mxu0
    %v470 = vadd.f32 0.0, %v469
    %v471 = vpop.f32.mrf.mxu0
    %472 = vmatprep.mubr.bf16.mxu0 0
    %473 = vmatmul.mubr.bf16.gmra.mxu0 %v141
    %v474 = vpop.f32.mrf.mxu0
    %v475 = vadd.f32 0.0, %v474
    %v476 = vpop.f32.mrf.mxu0
    %v477 = vpop.f32.mrf.mxu0
    %v478 = vadd.f32 0.0, %v477
    %v479 = vpop.f32.mrf.mxu0
    %480 = vmatprep.mubr.bf16.mxu0 0
    %481 = vmatmul.mubr.bf16.gmra.mxu0 %v142
    %v482 = vpop.f32.mrf.mxu0
    %v483 = vadd.f32 0.0, %v482
    %v484 = vpop.f32.mrf.mxu0
    %v485 = vpop.f32.mrf.mxu0
    %v486 = vadd.f32 0.0, %v485
    %v487 = vpop.f32.mrf.mxu0
    %488 = vdwg.mxu0
    %v489 = vpack.c.bf16 %v318, %v314
    %v490 = vpack.c.bf16 %v328, %v324
    %v491 = vpack.c.bf16 %v338, %v334
    %v492 = vpack.c.bf16 %v348, %v344
    %v493 = vpack.c.bf16 %v358, %v354
    %v494 = vpack.c.bf16 %v368, %v364
    %v495 = vpack.c.bf16 %v378, %v374
    %v496 = vpack.c.bf16 %v388, %v384
    %v505 = vunpack.c.l.b16 %v489
    %v506 = vunpack.c.h.b16 %v489
    %v507 = vunpack.c.l.b16 %v490
    %v508 = vunpack.c.h.b16 %v490
    %v509 = vunpack.c.l.b16 %v491
    %v510 = vunpack.c.h.b16 %v491
    %v511 = vunpack.c.l.b16 %v492
    %v512 = vunpack.c.h.b16 %v492
    %v513 = vunpack.c.l.b16 %v493
    %v514 = vunpack.c.h.b16 %v493
    %v515 = vunpack.c.l.b16 %v494
    %v516 = vunpack.c.h.b16 %v494
    %v517 = vunpack.c.l.b16 %v495
    %v518 = vunpack.c.h.b16 %v495
    %v519 = vunpack.c.l.b16 %v496
    %v520 = vunpack.c.h.b16 %v496
    %v521 = vpack.c.b16 %v505, %v505
    %v522 = vpack.c.b16 %v506, %v506
    %v523 = vpack.c.b16 %v507, %v507
    %v524 = vpack.c.b16 %v508, %v508
    %v525 = vpack.c.b16 %v509, %v509
    %v526 = vpack.c.b16 %v510, %v510
    %v527 = vpack.c.b16 %v511, %v511
    %v528 = vpack.c.b16 %v512, %v512
    %v529 = vpack.c.b16 %v513, %v513
    %v530 = vpack.c.b16 %v514, %v514
    %v531 = vpack.c.b16 %v515, %v515
    %v532 = vpack.c.b16 %v516, %v516
    %v533 = vpack.c.b16 %v517, %v517
    %v534 = vpack.c.b16 %v518, %v518
    %v535 = vpack.c.b16 %v519, %v519
    %v536 = vpack.c.b16 %v520, %v520
    %553 = vst [vmem:[#allocation3] sm:$0xf] %v521
    %554 = vst [vmem:[#allocation3 + $0x4] sm:$0xf] %v522
    %555 = vst [vmem:[#allocation3 + $0x8] sm:$0xf] %v523
    %556 = vst [vmem:[#allocation3 + $0xc] sm:$0xf] %v524
    %557 = vst [vmem:[#allocation3 + $0x10] sm:$0xf] %v525
    %558 = vst [vmem:[#allocation3 + $0x14] sm:$0xf] %v526
    %559 = vst [vmem:[#allocation3 + $0x18] sm:$0xf] %v527
    %560 = vst [vmem:[#allocation3 + $0x1c] sm:$0xf] %v528
    %561 = vst [vmem:[#allocation3 + $0x20] sm:$0xf] %v529
    %562 = vst [vmem:[#allocation3 + $0x24] sm:$0xf] %v530
    %563 = vst [vmem:[#allocation3 + $0x28] sm:$0xf] %v531
    %564 = vst [vmem:[#allocation3 + $0x2c] sm:$0xf] %v532
    %565 = vst [vmem:[#allocation3 + $0x30] sm:$0xf] %v533
    %566 = vst [vmem:[#allocation3 + $0x34] sm:$0xf] %v534
    %567 = vst [vmem:[#allocation3 + $0x38] sm:$0xf] %v535
    %568 = vst [vmem:[#allocation3 + $0x3c] sm:$0xf] %v536
    %s569 = sld [smem:[#allocation4]]
    %v570 = vld [vmem:[%s0] sm:$0xf]
    %v571 = vld [vmem:[%s0 + $0x4] sm:$0xf]
    %v572 = vld [vmem:[%s0 + $0x8] sm:$0xf]
    %v573 = vld [vmem:[%s0 + $0xc] sm:$0xf]
    %v574 = vld [vmem:[%s0 + $0x10] sm:$0xf]
    %v575 = vld [vmem:[%s0 + $0x14] sm:$0xf]
    %v576 = vld [vmem:[%s0 + $0x18] sm:$0xf]
    %v577 = vld [vmem:[%s0 + $0x1c] sm:$0xf]
    %v578 = vld [vmem:[%s0 + $0x20] sm:$0xf]
    %v579 = vld [vmem:[%s0 + $0x24] sm:$0xf]
    %v580 = vld [vmem:[%s0 + $0x28] sm:$0xf]
    %v581 = vld [vmem:[%s0 + $0x2c] sm:$0xf]
    %v582 = vld [vmem:[%s0 + $0x30] sm:$0xf]
    %v583 = vld [vmem:[%s0 + $0x34] sm:$0xf]
    %v584 = vld [vmem:[%s0 + $0x38] sm:$0xf]
    %v585 = vld [vmem:[%s0 + $0x3c] sm:$0xf]
    %v586 = vunpack.c.l.bf16 %v570
    %v587 = vunpack.c.l.bf16 %v571
    %v588 = vunpack.c.l.bf16 %v572
    %v589 = vunpack.c.l.bf16 %v573
    %v590 = vunpack.c.l.bf16 %v574
    %v591 = vunpack.c.l.bf16 %v575
    %v592 = vunpack.c.l.bf16 %v576
    %v593 = vunpack.c.l.bf16 %v577
    %v594 = vunpack.c.l.bf16 %v578
    %v595 = vunpack.c.l.bf16 %v579
    %v596 = vunpack.c.l.bf16 %v580
    %v597 = vunpack.c.l.bf16 %v581
    %v598 = vunpack.c.l.bf16 %v582
    %v599 = vunpack.c.l.bf16 %v583
    %v600 = vunpack.c.l.bf16 %v584
    %v601 = vunpack.c.l.bf16 %v585
    %v602 = vstv %s569
    %v603 = vmul.f32 %v602, %v586
    %v604 = vmul.f32 %v602, %v587
    %v605 = vmul.f32 %v602, %v588
    %v606 = vmul.f32 %v602, %v589
    %v607 = vmul.f32 %v602, %v590
    %v608 = vmul.f32 %v602, %v591
    %v609 = vmul.f32 %v602, %v592
    %v610 = vmul.f32 %v602, %v593
    %v611 = vmul.f32 %v602, %v594
    %v612 = vmul.f32 %v602, %v595
    %v613 = vmul.f32 %v602, %v596
    %v614 = vmul.f32 %v602, %v597
    %v615 = vmul.f32 %v602, %v598
    %v616 = vmul.f32 %v602, %v599
    %v617 = vmul.f32 %v602, %v600
    %v618 = vmul.f32 %v602, %v601
    %s619 = sld [smem:[#allocation4 + $0x80]]
    %s620 = scalar_lea.vmem %s0, 64
    %v621 = vld [vmem:[%s620] sm:$0xf]
    %v622 = vld [vmem:[%s620 + $0x4] sm:$0xf]
    %v623 = vld [vmem:[%s620 + $0x8] sm:$0xf]
    %v624 = vld [vmem:[%s620 + $0xc] sm:$0xf]
    %v625 = vld [vmem:[%s620 + $0x10] sm:$0xf]
    %v626 = vld [vmem:[%s620 + $0x14] sm:$0xf]
    %v627 = vld [vmem:[%s620 + $0x18] sm:$0xf]
    %v628 = vld [vmem:[%s620 + $0x1c] sm:$0xf]
    %v629 = vld [vmem:[%s620 + $0x20] sm:$0xf]
    %v630 = vld [vmem:[%s620 + $0x24] sm:$0xf]
    %v631 = vld [vmem:[%s620 + $0x28] sm:$0xf]
    %v632 = vld [vmem:[%s620 + $0x2c] sm:$0xf]
    %v633 = vld [vmem:[%s620 + $0x30] sm:$0xf]
    %v634 = vld [vmem:[%s620 + $0x34] sm:$0xf]
    %v635 = vld [vmem:[%s620 + $0x38] sm:$0xf]
    %v636 = vld [vmem:[%s620 + $0x3c] sm:$0xf]
    %v637 = vunpack.c.l.bf16 %v621
    %v638 = vunpack.c.l.bf16 %v622
    %v639 = vunpack.c.l.bf16 %v623
    %v640 = vunpack.c.l.bf16 %v624
    %v641 = vunpack.c.l.bf16 %v625
    %v642 = vunpack.c.l.bf16 %v626
    %v643 = vunpack.c.l.bf16 %v627
    %v644 = vunpack.c.l.bf16 %v628
    %v645 = vunpack.c.l.bf16 %v629
    %v646 = vunpack.c.l.bf16 %v630
    %v647 = vunpack.c.l.bf16 %v631
    %v648 = vunpack.c.l.bf16 %v632
    %v649 = vunpack.c.l.bf16 %v633
    %v650 = vunpack.c.l.bf16 %v634
    %v651 = vunpack.c.l.bf16 %v635
    %v652 = vunpack.c.l.bf16 %v636
    %v653 = vstv %s619
    %v654 = vmul.f32 %v653, %v637
    %v655 = vmul.f32 %v653, %v638
    %v656 = vmul.f32 %v653, %v639
    %v657 = vmul.f32 %v653, %v640
    %v658 = vmul.f32 %v653, %v641
    %v659 = vmul.f32 %v653, %v642
    %v660 = vmul.f32 %v653, %v643
    %v661 = vmul.f32 %v653, %v644
    %v662 = vmul.f32 %v653, %v645
    %v663 = vmul.f32 %v653, %v646
    %v664 = vmul.f32 %v653, %v647
    %v665 = vmul.f32 %v653, %v648
    %v666 = vmul.f32 %v653, %v649
    %v667 = vmul.f32 %v653, %v650
    %v668 = vmul.f32 %v653, %v651
    %v669 = vmul.f32 %v653, %v652
    %v670 = vadd.f32 %v603, %v654
    %v671 = vadd.f32 %v604, %v655
    %v672 = vadd.f32 %v605, %v656
    %v673 = vadd.f32 %v606, %v657
    %v674 = vadd.f32 %v607, %v658
    %v675 = vadd.f32 %v608, %v659
    %v676 = vadd.f32 %v609, %v660
    %v677 = vadd.f32 %v610, %v661
    %v678 = vadd.f32 %v611, %v662
    %v679 = vadd.f32 %v612, %v663
    %v680 = vadd.f32 %v613, %v664
    %v681 = vadd.f32 %v614, %v665
    %v682 = vadd.f32 %v615, %v666
    %v683 = vadd.f32 %v616, %v667
    %v684 = vadd.f32 %v617, %v668
    %v685 = vadd.f32 %v618, %v669
    %s686 = sld [smem:[#allocation4 + $0x100]]
    %s687 = scalar_lea.vmem %s0, 128
    %v688 = vld [vmem:[%s687] sm:$0xf]
    %v689 = vld [vmem:[%s687 + $0x4] sm:$0xf]
    %v690 = vld [vmem:[%s687 + $0x8] sm:$0xf]
    %v691 = vld [vmem:[%s687 + $0xc] sm:$0xf]
    %v692 = vld [vmem:[%s687 + $0x10] sm:$0xf]
    %v693 = vld [vmem:[%s687 + $0x14] sm:$0xf]
    %v694 = vld [vmem:[%s687 + $0x18] sm:$0xf]
    %v695 = vld [vmem:[%s687 + $0x1c] sm:$0xf]
    %v696 = vld [vmem:[%s687 + $0x20] sm:$0xf]
    %v697 = vld [vmem:[%s687 + $0x24] sm:$0xf]
    %v698 = vld [vmem:[%s687 + $0x28] sm:$0xf]
    %v699 = vld [vmem:[%s687 + $0x2c] sm:$0xf]
    %v700 = vld [vmem:[%s687 + $0x30] sm:$0xf]
    %v701 = vld [vmem:[%s687 + $0x34] sm:$0xf]
    %v702 = vld [vmem:[%s687 + $0x38] sm:$0xf]
    %v703 = vld [vmem:[%s687 + $0x3c] sm:$0xf]
    %v704 = vunpack.c.l.bf16 %v688
    %v705 = vunpack.c.l.bf16 %v689
    %v706 = vunpack.c.l.bf16 %v690
    %v707 = vunpack.c.l.bf16 %v691
    %v708 = vunpack.c.l.bf16 %v692
    %v709 = vunpack.c.l.bf16 %v693
    %v710 = vunpack.c.l.bf16 %v694
    %v711 = vunpack.c.l.bf16 %v695
    %v712 = vunpack.c.l.bf16 %v696
    %v713 = vunpack.c.l.bf16 %v697
    %v714 = vunpack.c.l.bf16 %v698
    %v715 = vunpack.c.l.bf16 %v699
    %v716 = vunpack.c.l.bf16 %v700
    %v717 = vunpack.c.l.bf16 %v701
    %v718 = vunpack.c.l.bf16 %v702
    %v719 = vunpack.c.l.bf16 %v703
    %v720 = vstv %s686
    %v721 = vmul.f32 %v720, %v704
    %v722 = vmul.f32 %v720, %v705
    %v723 = vmul.f32 %v720, %v706
    %v724 = vmul.f32 %v720, %v707
    %v725 = vmul.f32 %v720, %v708
    %v726 = vmul.f32 %v720, %v709
    %v727 = vmul.f32 %v720, %v710
    %v728 = vmul.f32 %v720, %v711
    %v729 = vmul.f32 %v720, %v712
    %v730 = vmul.f32 %v720, %v713
    %v731 = vmul.f32 %v720, %v714
    %v732 = vmul.f32 %v720, %v715
    %v733 = vmul.f32 %v720, %v716
    %v734 = vmul.f32 %v720, %v717
    %v735 = vmul.f32 %v720, %v718
    %v736 = vmul.f32 %v720, %v719
    %v737 = vadd.f32 %v670, %v721
    %v738 = vadd.f32 %v671, %v722
    %v739 = vadd.f32 %v672, %v723
    %v740 = vadd.f32 %v673, %v724
    %v741 = vadd.f32 %v674, %v725
    %v742 = vadd.f32 %v675, %v726
    %v743 = vadd.f32 %v676, %v727
    %v744 = vadd.f32 %v677, %v728
    %v745 = vadd.f32 %v678, %v729
    %v746 = vadd.f32 %v679, %v730
    %v747 = vadd.f32 %v680, %v731
    %v748 = vadd.f32 %v681, %v732
    %v749 = vadd.f32 %v682, %v733
    %v750 = vadd.f32 %v683, %v734
    %v751 = vadd.f32 %v684, %v735
    %v752 = vadd.f32 %v685, %v736
    %s753 = sld [smem:[#allocation4 + $0x180]]
    %s754 = scalar_lea.vmem %s0, 192
    %v755 = vld [vmem:[%s754] sm:$0xf]
    %v756 = vld [vmem:[%s754 + $0x4] sm:$0xf]
    %v757 = vld [vmem:[%s754 + $0x8] sm:$0xf]
    %v758 = vld [vmem:[%s754 + $0xc] sm:$0xf]
    %v759 = vld [vmem:[%s754 + $0x10] sm:$0xf]
    %v760 = vld [vmem:[%s754 + $0x14] sm:$0xf]
    %v761 = vld [vmem:[%s754 + $0x18] sm:$0xf]
    %v762 = vld [vmem:[%s754 + $0x1c] sm:$0xf]
    %v763 = vld [vmem:[%s754 + $0x20] sm:$0xf]
    %v764 = vld [vmem:[%s754 + $0x24] sm:$0xf]
    %v765 = vld [vmem:[%s754 + $0x28] sm:$0xf]
    %v766 = vld [vmem:[%s754 + $0x2c] sm:$0xf]
    %v767 = vld [vmem:[%s754 + $0x30] sm:$0xf]
    %v768 = vld [vmem:[%s754 + $0x34] sm:$0xf]
    %v769 = vld [vmem:[%s754 + $0x38] sm:$0xf]
    %v770 = vld [vmem:[%s754 + $0x3c] sm:$0xf]
    %v771 = vunpack.c.l.bf16 %v755
    %v772 = vunpack.c.l.bf16 %v756
    %v773 = vunpack.c.l.bf16 %v757
    %v774 = vunpack.c.l.bf16 %v758
    %v775 = vunpack.c.l.bf16 %v759
    %v776 = vunpack.c.l.bf16 %v760
    %v777 = vunpack.c.l.bf16 %v761
    %v778 = vunpack.c.l.bf16 %v762
    %v779 = vunpack.c.l.bf16 %v763
    %v780 = vunpack.c.l.bf16 %v764
    %v781 = vunpack.c.l.bf16 %v765
    %v782 = vunpack.c.l.bf16 %v766
    %v783 = vunpack.c.l.bf16 %v767
    %v784 = vunpack.c.l.bf16 %v768
    %v785 = vunpack.c.l.bf16 %v769
    %v786 = vunpack.c.l.bf16 %v770
    %v787 = vstv %s753
    %v788 = vmul.f32 %v787, %v771
    %v789 = vmul.f32 %v787, %v772
    %v790 = vmul.f32 %v787, %v773
    %v791 = vmul.f32 %v787, %v774
    %v792 = vmul.f32 %v787, %v775
    %v793 = vmul.f32 %v787, %v776
    %v794 = vmul.f32 %v787, %v777
    %v795 = vmul.f32 %v787, %v778
    %v796 = vmul.f32 %v787, %v779
    %v797 = vmul.f32 %v787, %v780
    %v798 = vmul.f32 %v787, %v781
    %v799 = vmul.f32 %v787, %v782
    %v800 = vmul.f32 %v787, %v783
    %v801 = vmul.f32 %v787, %v784
    %v802 = vmul.f32 %v787, %v785
    %v803 = vmul.f32 %v787, %v786
    %v804 = vadd.f32 %v737, %v788
    %v805 = vadd.f32 %v738, %v789
    %v806 = vadd.f32 %v739, %v790
    %v807 = vadd.f32 %v740, %v791
    %v808 = vadd.f32 %v741, %v792
    %v809 = vadd.f32 %v742, %v793
    %v810 = vadd.f32 %v743, %v794
    %v811 = vadd.f32 %v744, %v795
    %v812 = vadd.f32 %v745, %v796
    %v813 = vadd.f32 %v746, %v797
    %v814 = vadd.f32 %v747, %v798
    %v815 = vadd.f32 %v748, %v799
    %v816 = vadd.f32 %v749, %v800
    %v817 = vadd.f32 %v750, %v801
    %v818 = vadd.f32 %v751, %v802
    %v819 = vadd.f32 %v752, %v803
    %v820 = vpack.c.bf16 %v805, %v804
    %v821 = vpack.c.bf16 %v807, %v806
    %v822 = vpack.c.bf16 %v809, %v808
    %v823 = vpack.c.bf16 %v811, %v810
    %v824 = vpack.c.bf16 %v813, %v812
    %v825 = vpack.c.bf16 %v815, %v814
    %v826 = vpack.c.bf16 %v817, %v816
    %v827 = vpack.c.bf16 %v819, %v818
    %v836 = vunpack.c.l.b16 %v820
    %v837 = vunpack.c.h.b16 %v820
    %v838 = vunpack.c.l.b16 %v821
    %v839 = vunpack.c.h.b16 %v821
    %v840 = vunpack.c.l.b16 %v822
    %v841 = vunpack.c.h.b16 %v822
    %v842 = vunpack.c.l.b16 %v823
    %v843 = vunpack.c.h.b16 %v823
    %v844 = vunpack.c.l.b16 %v824
    %v845 = vunpack.c.h.b16 %v824
    %v846 = vunpack.c.l.b16 %v825
    %v847 = vunpack.c.h.b16 %v825
    %v848 = vunpack.c.l.b16 %v826
    %v849 = vunpack.c.h.b16 %v826
    %v850 = vunpack.c.l.b16 %v827
    %v851 = vunpack.c.h.b16 %v827
    %v852 = vpack.c.b16 %v836, %v836
    %v853 = vpack.c.b16 %v837, %v837
    %v854 = vpack.c.b16 %v838, %v838
    %v855 = vpack.c.b16 %v839, %v839
    %v856 = vpack.c.b16 %v840, %v840
    %v857 = vpack.c.b16 %v841, %v841
    %v858 = vpack.c.b16 %v842, %v842
    %v859 = vpack.c.b16 %v843, %v843
    %v860 = vpack.c.b16 %v844, %v844
    %v861 = vpack.c.b16 %v845, %v845
    %v862 = vpack.c.b16 %v846, %v846
    %v863 = vpack.c.b16 %v847, %v847
    %v864 = vpack.c.b16 %v848, %v848
    %v865 = vpack.c.b16 %v849, %v849
    %v866 = vpack.c.b16 %v850, %v850
    %v867 = vpack.c.b16 %v851, %v851
    %884 = vst [vmem:[#allocation2] sm:$0xf] %v852
    %885 = vst [vmem:[#allocation2 + $0x8] sm:$0xf] %v853
    %886 = vst [vmem:[#allocation2 + $0x10] sm:$0xf] %v854
    %887 = vst [vmem:[#allocation2 + $0x18] sm:$0xf] %v855
    %888 = vst [vmem:[#allocation2 + $0x20] sm:$0xf] %v856
    %889 = vst [vmem:[#allocation2 + $0x28] sm:$0xf] %v857
    %890 = vst [vmem:[#allocation2 + $0x30] sm:$0xf] %v858
    %891 = vst [vmem:[#allocation2 + $0x38] sm:$0xf] %v859
    %892 = vst [vmem:[#allocation2 + $0x40] sm:$0xf] %v860
    %893 = vst [vmem:[#allocation2 + $0x48] sm:$0xf] %v861
    %894 = vst [vmem:[#allocation2 + $0x50] sm:$0xf] %v862
    %895 = vst [vmem:[#allocation2 + $0x58] sm:$0xf] %v863
    %896 = vst [vmem:[#allocation2 + $0x60] sm:$0xf] %v864
    %897 = vst [vmem:[#allocation2 + $0x68] sm:$0xf] %v865
    %898 = vst [vmem:[#allocation2 + $0x70] sm:$0xf] %v866
    %899 = vst [vmem:[#allocation2 + $0x78] sm:$0xf] %v867
    %v900 = vpack.c.bf16 %v320, %v316
    %v901 = vpack.c.bf16 %v330, %v326
    %v902 = vpack.c.bf16 %v340, %v336
    %v903 = vpack.c.bf16 %v350, %v346
    %v904 = vpack.c.bf16 %v360, %v356
    %v905 = vpack.c.bf16 %v370, %v366
    %v906 = vpack.c.bf16 %v380, %v376
    %v907 = vpack.c.bf16 %v390, %v386
    %v916 = vunpack.c.l.b16 %v900
    %v917 = vunpack.c.h.b16 %v900
    %v918 = vunpack.c.l.b16 %v901
    %v919 = vunpack.c.h.b16 %v901
    %v920 = vunpack.c.l.b16 %v902
    %v921 = vunpack.c.h.b16 %v902
    %v922 = vunpack.c.l.b16 %v903
    %v923 = vunpack.c.h.b16 %v903
    %v924 = vunpack.c.l.b16 %v904
    %v925 = vunpack.c.h.b16 %v904
    %v926 = vunpack.c.l.b16 %v905
    %v927 = vunpack.c.h.b16 %v905
    %v928 = vunpack.c.l.b16 %v906
    %v929 = vunpack.c.h.b16 %v906
    %v930 = vunpack.c.l.b16 %v907
    %v931 = vunpack.c.h.b16 %v907
    %v932 = vpack.c.b16 %v916, %v916
    %v933 = vpack.c.b16 %v917, %v917
    %v934 = vpack.c.b16 %v918, %v918
    %v935 = vpack.c.b16 %v919, %v919
    %v936 = vpack.c.b16 %v920, %v920
    %v937 = vpack.c.b16 %v921, %v921
    %v938 = vpack.c.b16 %v922, %v922
    %v939 = vpack.c.b16 %v923, %v923
    %v940 = vpack.c.b16 %v924, %v924
    %v941 = vpack.c.b16 %v925, %v925
    %v942 = vpack.c.b16 %v926, %v926
    %v943 = vpack.c.b16 %v927, %v927
    %v944 = vpack.c.b16 %v928, %v928
    %v945 = vpack.c.b16 %v929, %v929
    %v946 = vpack.c.b16 %v930, %v930
    %v947 = vpack.c.b16 %v931, %v931
    %964 = vst [vmem:[#allocation3 + $0x40] sm:$0xf] %v932
    %965 = vst [vmem:[#allocation3 + $0x44] sm:$0xf] %v933
    %966 = vst [vmem:[#allocation3 + $0x48] sm:$0xf] %v934
    %967 = vst [vmem:[#allocation3 + $0x4c] sm:$0xf] %v935
    %968 = vst [vmem:[#allocation3 + $0x50] sm:$0xf] %v936
    %969 = vst [vmem:[#allocation3 + $0x54] sm:$0xf] %v937
    %970 = vst [vmem:[#allocation3 + $0x58] sm:$0xf] %v938
    %971 = vst [vmem:[#allocation3 + $0x5c] sm:$0xf] %v939
    %972 = vst [vmem:[#allocation3 + $0x60] sm:$0xf] %v940
    %973 = vst [vmem:[#allocation3 + $0x64] sm:$0xf] %v941
    %974 = vst [vmem:[#allocation3 + $0x68] sm:$0xf] %v942
    %975 = vst [vmem:[#allocation3 + $0x6c] sm:$0xf] %v943
    %976 = vst [vmem:[#allocation3 + $0x70] sm:$0xf] %v944
    %977 = vst [vmem:[#allocation3 + $0x74] sm:$0xf] %v945
    %978 = vst [vmem:[#allocation3 + $0x78] sm:$0xf] %v946
    %979 = vst [vmem:[#allocation3 + $0x7c] sm:$0xf] %v947
    %s980 = sld [smem:[#allocation4 + $0x1]]
    %v981 = vld [vmem:[%s0] sm:$0xf]
    %v982 = vld [vmem:[%s0 + $0x4] sm:$0xf]
    %v983 = vld [vmem:[%s0 + $0x8] sm:$0xf]
    %v984 = vld [vmem:[%s0 + $0xc] sm:$0xf]
    %v985 = vld [vmem:[%s0 + $0x10] sm:$0xf]
    %v986 = vld [vmem:[%s0 + $0x14] sm:$0xf]
    %v987 = vld [vmem:[%s0 + $0x18] sm:$0xf]
    %v988 = vld [vmem:[%s0 + $0x1c] sm:$0xf]
    %v989 = vld [vmem:[%s0 + $0x20] sm:$0xf]
    %v990 = vld [vmem:[%s0 + $0x24] sm:$0xf]
    %v991 = vld [vmem:[%s0 + $0x28] sm:$0xf]
    %v992 = vld [vmem:[%s0 + $0x2c] sm:$0xf]
    %v993 = vld [vmem:[%s0 + $0x30] sm:$0xf]
    %v994 = vld [vmem:[%s0 + $0x34] sm:$0xf]
    %v995 = vld [vmem:[%s0 + $0x38] sm:$0xf]
    %v996 = vld [vmem:[%s0 + $0x3c] sm:$0xf]
    %v997 = vunpack.c.l.bf16 %v981
    %v998 = vunpack.c.l.bf16 %v982
    %v999 = vunpack.c.l.bf16 %v983
    %v1000 = vunpack.c.l.bf16 %v984
    %v1001 = vunpack.c.l.bf16 %v985
    %v1002 = vunpack.c.l.bf16 %v986
    %v1003 = vunpack.c.l.bf16 %v987
    %v1004 = vunpack.c.l.bf16 %v988
    %v1005 = vunpack.c.l.bf16 %v989
    %v1006 = vunpack.c.l.bf16 %v990
    %v1007 = vunpack.c.l.bf16 %v991
    %v1008 = vunpack.c.l.bf16 %v992
    %v1009 = vunpack.c.l.bf16 %v993
    %v1010 = vunpack.c.l.bf16 %v994
    %v1011 = vunpack.c.l.bf16 %v995
    %v1012 = vunpack.c.l.bf16 %v996
    %v1013 = vstv %s980
    %v1014 = vmul.f32 %v1013, %v997
    %v1015 = vmul.f32 %v1013, %v998
    %v1016 = vmul.f32 %v1013, %v999
    %v1017 = vmul.f32 %v1013, %v1000
    %v1018 = vmul.f32 %v1013, %v1001
    %v1019 = vmul.f32 %v1013, %v1002
    %v1020 = vmul.f32 %v1013, %v1003
    %v1021 = vmul.f32 %v1013, %v1004
    %v1022 = vmul.f32 %v1013, %v1005
    %v1023 = vmul.f32 %v1013, %v1006
    %v1024 = vmul.f32 %v1013, %v1007
    %v1025 = vmul.f32 %v1013, %v1008
    %v1026 = vmul.f32 %v1013, %v1009
    %v1027 = vmul.f32 %v1013, %v1010
    %v1028 = vmul.f32 %v1013, %v1011
    %v1029 = vmul.f32 %v1013, %v1012
    %s1030 = sld [smem:[#allocation4 + $0x81]]
    %v1031 = vld [vmem:[%s620] sm:$0xf]
    %v1032 = vld [vmem:[%s620 + $0x4] sm:$0xf]
    %v1033 = vld [vmem:[%s620 + $0x8] sm:$0xf]
    %v1034 = vld [vmem:[%s620 + $0xc] sm:$0xf]
    %v1035 = vld [vmem:[%s620 + $0x10] sm:$0xf]
    %v1036 = vld [vmem:[%s620 + $0x14] sm:$0xf]
    %v1037 = vld [vmem:[%s620 + $0x18] sm:$0xf]
    %v1038 = vld [vmem:[%s620 + $0x1c] sm:$0xf]
    %v1039 = vld [vmem:[%s620 + $0x20] sm:$0xf]
    %v1040 = vld [vmem:[%s620 + $0x24] sm:$0xf]
    %v1041 = vld [vmem:[%s620 + $0x28] sm:$0xf]
    %v1042 = vld [vmem:[%s620 + $0x2c] sm:$0xf]
    %v1043 = vld [vmem:[%s620 + $0x30] sm:$0xf]
    %v1044 = vld [vmem:[%s620 + $0x34] sm:$0xf]
    %v1045 = vld [vmem:[%s620 + $0x38] sm:$0xf]
    %v1046 = vld [vmem:[%s620 + $0x3c] sm:$0xf]
    %v1047 = vunpack.c.l.bf16 %v1031
    %v1048 = vunpack.c.l.bf16 %v1032
    %v1049 = vunpack.c.l.bf16 %v1033
    %v1050 = vunpack.c.l.bf16 %v1034
    %v1051 = vunpack.c.l.bf16 %v1035
    %v1052 = vunpack.c.l.bf16 %v1036
    %v1053 = vunpack.c.l.bf16 %v1037
    %v1054 = vunpack.c.l.bf16 %v1038
    %v1055 = vunpack.c.l.bf16 %v1039
    %v1056 = vunpack.c.l.bf16 %v1040
    %v1057 = vunpack.c.l.bf16 %v1041
    %v1058 = vunpack.c.l.bf16 %v1042
    %v1059 = vunpack.c.l.bf16 %v1043
    %v1060 = vunpack.c.l.bf16 %v1044
    %v1061 = vunpack.c.l.bf16 %v1045
    %v1062 = vunpack.c.l.bf16 %v1046
    %v1063 = vstv %s1030
    %v1064 = vmul.f32 %v1063, %v1047
    %v1065 = vmul.f32 %v1063, %v1048
    %v1066 = vmul.f32 %v1063, %v1049
    %v1067 = vmul.f32 %v1063, %v1050
    %v1068 = vmul.f32 %v1063, %v1051
    %v1069 = vmul.f32 %v1063, %v1052
    %v1070 = vmul.f32 %v1063, %v1053
    %v1071 = vmul.f32 %v1063, %v1054
    %v1072 = vmul.f32 %v1063, %v1055
    %v1073 = vmul.f32 %v1063, %v1056
    %v1074 = vmul.f32 %v1063, %v1057
    %v1075 = vmul.f32 %v1063, %v1058
    %v1076 = vmul.f32 %v1063, %v1059
    %v1077 = vmul.f32 %v1063, %v1060
    %v1078 = vmul.f32 %v1063, %v1061
    %v1079 = vmul.f32 %v1063, %v1062
    %v1080 = vadd.f32 %v1014, %v1064
    %v1081 = vadd.f32 %v1015, %v1065
    %v1082 = vadd.f32 %v1016, %v1066
    %v1083 = vadd.f32 %v1017, %v1067
    %v1084 = vadd.f32 %v1018, %v1068
    %v1085 = vadd.f32 %v1019, %v1069
    %v1086 = vadd.f32 %v1020, %v1070
    %v1087 = vadd.f32 %v1021, %v1071
    %v1088 = vadd.f32 %v1022, %v1072
    %v1089 = vadd.f32 %v1023, %v1073
    %v1090 = vadd.f32 %v1024, %v1074
    %v1091 = vadd.f32 %v1025, %v1075
    %v1092 = vadd.f32 %v1026, %v1076
    %v1093 = vadd.f32 %v1027, %v1077
    %v1094 = vadd.f32 %v1028, %v1078
    %v1095 = vadd.f32 %v1029, %v1079
    %s1096 = sld [smem:[#allocation4 + $0x101]]
    %v1097 = vld [vmem:[%s687] sm:$0xf]
    %v1098 = vld [vmem:[%s687 + $0x4] sm:$0xf]
    %v1099 = vld [vmem:[%s687 + $0x8] sm:$0xf]
    %v1100 = vld [vmem:[%s687 + $0xc] sm:$0xf]
    %v1101 = vld [vmem:[%s687 + $0x10] sm:$0xf]
    %v1102 = vld [vmem:[%s687 + $0x14] sm:$0xf]
    %v1103 = vld [vmem:[%s687 + $0x18] sm:$0xf]
    %v1104 = vld [vmem:[%s687 + $0x1c] sm:$0xf]
    %v1105 = vld [vmem:[%s687 + $0x20] sm:$0xf]
    %v1106 = vld [vmem:[%s687 + $0x24] sm:$0xf]
    %v1107 = vld [vmem:[%s687 + $0x28] sm:$0xf]
    %v1108 = vld [vmem:[%s687 + $0x2c] sm:$0xf]
    %v1109 = vld [vmem:[%s687 + $0x30] sm:$0xf]
    %v1110 = vld [vmem:[%s687 + $0x34] sm:$0xf]
    %v1111 = vld [vmem:[%s687 + $0x38] sm:$0xf]
    %v1112 = vld [vmem:[%s687 + $0x3c] sm:$0xf]
    %v1113 = vunpack.c.l.bf16 %v1097
    %v1114 = vunpack.c.l.bf16 %v1098
    %v1115 = vunpack.c.l.bf16 %v1099
    %v1116 = vunpack.c.l.bf16 %v1100
    %v1117 = vunpack.c.l.bf16 %v1101
    %v1118 = vunpack.c.l.bf16 %v1102
    %v1119 = vunpack.c.l.bf16 %v1103
    %v1120 = vunpack.c.l.bf16 %v1104
    %v1121 = vunpack.c.l.bf16 %v1105
    %v1122 = vunpack.c.l.bf16 %v1106
    %v1123 = vunpack.c.l.bf16 %v1107
    %v1124 = vunpack.c.l.bf16 %v1108
    %v1125 = vunpack.c.l.bf16 %v1109
    %v1126 = vunpack.c.l.bf16 %v1110
    %v1127 = vunpack.c.l.bf16 %v1111
    %v1128 = vunpack.c.l.bf16 %v1112
    %v1129 = vstv %s1096
    %v1130 = vmul.f32 %v1129, %v1113
    %v1131 = vmul.f32 %v1129, %v1114
    %v1132 = vmul.f32 %v1129, %v1115
    %v1133 = vmul.f32 %v1129, %v1116
    %v1134 = vmul.f32 %v1129, %v1117
    %v1135 = vmul.f32 %v1129, %v1118
    %v1136 = vmul.f32 %v1129, %v1119
    %v1137 = vmul.f32 %v1129, %v1120
    %v1138 = vmul.f32 %v1129, %v1121
    %v1139 = vmul.f32 %v1129, %v1122
    %v1140 = vmul.f32 %v1129, %v1123
    %v1141 = vmul.f32 %v1129, %v1124
    %v1142 = vmul.f32 %v1129, %v1125
    %v1143 = vmul.f32 %v1129, %v1126
    %v1144 = vmul.f32 %v1129, %v1127
    %v1145 = vmul.f32 %v1129, %v1128
    %v1146 = vadd.f32 %v1080, %v1130
    %v1147 = vadd.f32 %v1081, %v1131
    %v1148 = vadd.f32 %v1082, %v1132
    %v1149 = vadd.f32 %v1083, %v1133
    %v1150 = vadd.f32 %v1084, %v1134
    %v1151 = vadd.f32 %v1085, %v1135
    %v1152 = vadd.f32 %v1086, %v1136
    %v1153 = vadd.f32 %v1087, %v1137
    %v1154 = vadd.f32 %v1088, %v1138
    %v1155 = vadd.f32 %v1089, %v1139
    %v1156 = vadd.f32 %v1090, %v1140
    %v1157 = vadd.f32 %v1091, %v1141
    %v1158 = vadd.f32 %v1092, %v1142
    %v1159 = vadd.f32 %v1093, %v1143
    %v1160 = vadd.f32 %v1094, %v1144
    %v1161 = vadd.f32 %v1095, %v1145
    %s1162 = sld [smem:[#allocation4 + $0x181]]
    %v1163 = vld [vmem:[%s754] sm:$0xf]
    %v1164 = vld [vmem:[%s754 + $0x4] sm:$0xf]
    %v1165 = vld [vmem:[%s754 + $0x8] sm:$0xf]
    %v1166 = vld [vmem:[%s754 + $0xc] sm:$0xf]
    %v1167 = vld [vmem:[%s754 + $0x10] sm:$0xf]
    %v1168 = vld [vmem:[%s754 + $0x14] sm:$0xf]
    %v1169 = vld [vmem:[%s754 + $0x18] sm:$0xf]
    %v1170 = vld [vmem:[%s754 + $0x1c] sm:$0xf]
    %v1171 = vld [vmem:[%s754 + $0x20] sm:$0xf]
    %v1172 = vld [vmem:[%s754 + $0x24] sm:$0xf]
    %v1173 = vld [vmem:[%s754 + $0x28] sm:$0xf]
    %v1174 = vld [vmem:[%s754 + $0x2c] sm:$0xf]
    %v1175 = vld [vmem:[%s754 + $0x30] sm:$0xf]
    %v1176 = vld [vmem:[%s754 + $0x34] sm:$0xf]
    %v1177 = vld [vmem:[%s754 + $0x38] sm:$0xf]
    %v1178 = vld [vmem:[%s754 + $0x3c] sm:$0xf]
    %v1179 = vunpack.c.l.bf16 %v1163
    %v1180 = vunpack.c.l.bf16 %v1164
    %v1181 = vunpack.c.l.bf16 %v1165
    %v1182 = vunpack.c.l.bf16 %v1166
    %v1183 = vunpack.c.l.bf16 %v1167
    %v1184 = vunpack.c.l.bf16 %v1168
    %v1185 = vunpack.c.l.bf16 %v1169
    %v1186 = vunpack.c.l.bf16 %v1170
    %v1187 = vunpack.c.l.bf16 %v1171
    %v1188 = vunpack.c.l.bf16 %v1172
    %v1189 = vunpack.c.l.bf16 %v1173
    %v1190 = vunpack.c.l.bf16 %v1174
    %v1191 = vunpack.c.l.bf16 %v1175
    %v1192 = vunpack.c.l.bf16 %v1176
    %v1193 = vunpack.c.l.bf16 %v1177
    %v1194 = vunpack.c.l.bf16 %v1178
    %v1195 = vstv %s1162
    %v1196 = vmul.f32 %v1195, %v1179
    %v1197 = vmul.f32 %v1195, %v1180
    %v1198 = vmul.f32 %v1195, %v1181
    %v1199 = vmul.f32 %v1195, %v1182
    %v1200 = vmul.f32 %v1195, %v1183
    %v1201 = vmul.f32 %v1195, %v1184
    %v1202 = vmul.f32 %v1195, %v1185
    %v1203 = vmul.f32 %v1195, %v1186
    %v1204 = vmul.f32 %v1195, %v1187
    %v1205 = vmul.f32 %v1195, %v1188
    %v1206 = vmul.f32 %v1195, %v1189
    %v1207 = vmul.f32 %v1195, %v1190
    %v1208 = vmul.f32 %v1195, %v1191
    %v1209 = vmul.f32 %v1195, %v1192
    %v1210 = vmul.f32 %v1195, %v1193
    %v1211 = vmul.f32 %v1195, %v1194
    %v1212 = vadd.f32 %v1146, %v1196
    %v1213 = vadd.f32 %v1147, %v1197
    %v1214 = vadd.f32 %v1148, %v1198
    %v1215 = vadd.f32 %v1149, %v1199
    %v1216 = vadd.f32 %v1150, %v1200
    %v1217 = vadd.f32 %v1151, %v1201
    %v1218 = vadd.f32 %v1152, %v1202
    %v1219 = vadd.f32 %v1153, %v1203
    %v1220 = vadd.f32 %v1154, %v1204
    %v1221 = vadd.f32 %v1155, %v1205
    %v1222 = vadd.f32 %v1156, %v1206
    %v1223 = vadd.f32 %v1157, %v1207
    %v1224 = vadd.f32 %v1158, %v1208
    %v1225 = vadd.f32 %v1159, %v1209
    %v1226 = vadd.f32 %v1160, %v1210
    %v1227 = vadd.f32 %v1161, %v1211
    %v1228 = vpack.c.bf16 %v1213, %v1212
    %v1229 = vpack.c.bf16 %v1215, %v1214
    %v1230 = vpack.c.bf16 %v1217, %v1216
    %v1231 = vpack.c.bf16 %v1219, %v1218
    %v1232 = vpack.c.bf16 %v1221, %v1220
    %v1233 = vpack.c.bf16 %v1223, %v1222
    %v1234 = vpack.c.bf16 %v1225, %v1224
    %v1235 = vpack.c.bf16 %v1227, %v1226
    %v1244 = vunpack.c.l.b16 %v1228
    %v1245 = vunpack.c.h.b16 %v1228
    %v1246 = vunpack.c.l.b16 %v1229
    %v1247 = vunpack.c.h.b16 %v1229
    %v1248 = vunpack.c.l.b16 %v1230
    %v1249 = vunpack.c.h.b16 %v1230
    %v1250 = vunpack.c.l.b16 %v1231
    %v1251 = vunpack.c.h.b16 %v1231
    %v1252 = vunpack.c.l.b16 %v1232
    %v1253 = vunpack.c.h.b16 %v1232
    %v1254 = vunpack.c.l.b16 %v1233
    %v1255 = vunpack.c.h.b16 %v1233
    %v1256 = vunpack.c.l.b16 %v1234
    %v1257 = vunpack.c.h.b16 %v1234
    %v1258 = vunpack.c.l.b16 %v1235
    %v1259 = vunpack.c.h.b16 %v1235
    %v1260 = vpack.c.b16 %v1244, %v1244
    %v1261 = vpack.c.b16 %v1245, %v1245
    %v1262 = vpack.c.b16 %v1246, %v1246
    %v1263 = vpack.c.b16 %v1247, %v1247
    %v1264 = vpack.c.b16 %v1248, %v1248
    %v1265 = vpack.c.b16 %v1249, %v1249
    %v1266 = vpack.c.b16 %v1250, %v1250
    %v1267 = vpack.c.b16 %v1251, %v1251
    %v1268 = vpack.c.b16 %v1252, %v1252
    %v1269 = vpack.c.b16 %v1253, %v1253
    %v1270 = vpack.c.b16 %v1254, %v1254
    %v1271 = vpack.c.b16 %v1255, %v1255
    %v1272 = vpack.c.b16 %v1256, %v1256
    %v1273 = vpack.c.b16 %v1257, %v1257
    %v1274 = vpack.c.b16 %v1258, %v1258
    %v1275 = vpack.c.b16 %v1259, %v1259
    %1292 = vst [vmem:[#allocation2 + $0x4] sm:$0xf] %v1260
    %1293 = vst [vmem:[#allocation2 + $0xc] sm:$0xf] %v1261
    %1294 = vst [vmem:[#allocation2 + $0x14] sm:$0xf] %v1262
    %1295 = vst [vmem:[#allocation2 + $0x1c] sm:$0xf] %v1263
    %1296 = vst [vmem:[#allocation2 + $0x24] sm:$0xf] %v1264
    %1297 = vst [vmem:[#allocation2 + $0x2c] sm:$0xf] %v1265
    %1298 = vst [vmem:[#allocation2 + $0x34] sm:$0xf] %v1266
    %1299 = vst [vmem:[#allocation2 + $0x3c] sm:$0xf] %v1267
    %1300 = vst [vmem:[#allocation2 + $0x44] sm:$0xf] %v1268
    %1301 = vst [vmem:[#allocation2 + $0x4c] sm:$0xf] %v1269
    %1302 = vst [vmem:[#allocation2 + $0x54] sm:$0xf] %v1270
    %1303 = vst [vmem:[#allocation2 + $0x5c] sm:$0xf] %v1271
    %1304 = vst [vmem:[#allocation2 + $0x64] sm:$0xf] %v1272
    %1305 = vst [vmem:[#allocation2 + $0x6c] sm:$0xf] %v1273
    %1306 = vst [vmem:[#allocation2 + $0x74] sm:$0xf] %v1274
    %1307 = vst [vmem:[#allocation2 + $0x7c] sm:$0xf] %v1275
    %v1308 = vld [vmem:[#allocation2] sm:$0xff]
    %v1309 = vld [vmem:[#allocation2 + $0x8] sm:$0xff]
    %v1310 = vld [vmem:[#allocation2 + $0x10] sm:$0xff]
    %v1311 = vld [vmem:[#allocation2 + $0x18] sm:$0xff]
    %v1312 = vld [vmem:[#allocation2 + $0x20] sm:$0xff]
    %v1313 = vld [vmem:[#allocation2 + $0x28] sm:$0xff]
    %v1314 = vld [vmem:[#allocation2 + $0x30] sm:$0xff]
    %v1315 = vld [vmem:[#allocation2 + $0x38] sm:$0xff]
    %v1316 = vld [vmem:[#allocation2 + $0x40] sm:$0xff]
    %v1317 = vld [vmem:[#allocation2 + $0x48] sm:$0xff]
    %v1318 = vld [vmem:[#allocation2 + $0x50] sm:$0xff]
    %v1319 = vld [vmem:[#allocation2 + $0x58] sm:$0xff]
    %v1320 = vld [vmem:[#allocation2 + $0x60] sm:$0xff]
    %v1321 = vld [vmem:[#allocation2 + $0x68] sm:$0xff]
    %v1322 = vld [vmem:[#allocation2 + $0x70] sm:$0xff]
    %v1323 = vld [vmem:[#allocation2 + $0x78] sm:$0xff]
    %v1324 = vld [vmem:[#allocation3] sm:$0xf]
    %v1325 = vld [vmem:[#allocation3 + $0x4] sm:$0xf]
    %v1326 = vld [vmem:[#allocation3 + $0x8] sm:$0xf]
    %v1327 = vld [vmem:[#allocation3 + $0xc] sm:$0xf]
    %v1328 = vld [vmem:[#allocation3 + $0x10] sm:$0xf]
    %v1329 = vld [vmem:[#allocation3 + $0x14] sm:$0xf]
    %v1330 = vld [vmem:[#allocation3 + $0x18] sm:$0xf]
    %v1331 = vld [vmem:[#allocation3 + $0x1c] sm:$0xf]
    %v1332 = vld [vmem:[#allocation3 + $0x20] sm:$0xf]
    %v1333 = vld [vmem:[#allocation3 + $0x24] sm:$0xf]
    %v1334 = vld [vmem:[#allocation3 + $0x28] sm:$0xf]
    %v1335 = vld [vmem:[#allocation3 + $0x2c] sm:$0xf]
    %v1336 = vld [vmem:[#allocation3 + $0x30] sm:$0xf]
    %v1337 = vld [vmem:[#allocation3 + $0x34] sm:$0xf]
    %v1338 = vld [vmem:[#allocation3 + $0x38] sm:$0xf]
    %v1339 = vld [vmem:[#allocation3 + $0x3c] sm:$0xf]
    %v1340 = vld [vmem:[#allocation3 + $0x40] sm:$0xf]
    %v1341 = vld [vmem:[#allocation3 + $0x44] sm:$0xf]
    %v1342 = vld [vmem:[#allocation3 + $0x48] sm:$0xf]
    %v1343 = vld [vmem:[#allocation3 + $0x4c] sm:$0xf]
    %v1344 = vld [vmem:[#allocation3 + $0x50] sm:$0xf]
    %v1345 = vld [vmem:[#allocation3 + $0x54] sm:$0xf]
    %v1346 = vld [vmem:[#allocation3 + $0x58] sm:$0xf]
    %v1347 = vld [vmem:[#allocation3 + $0x5c] sm:$0xf]
    %v1348 = vld [vmem:[#allocation3 + $0x60] sm:$0xf]
    %v1349 = vld [vmem:[#allocation3 + $0x64] sm:$0xf]
    %v1350 = vld [vmem:[#allocation3 + $0x68] sm:$0xf]
    %v1351 = vld [vmem:[#allocation3 + $0x6c] sm:$0xf]
    %v1352 = vld [vmem:[#allocation3 + $0x70] sm:$0xf]
    %v1353 = vld [vmem:[#allocation3 + $0x74] sm:$0xf]
    %v1354 = vld [vmem:[#allocation3 + $0x78] sm:$0xf]
    %v1355 = vld [vmem:[#allocation3 + $0x7c] sm:$0xf]
    %v1372 = vunpack.c.l.b16 %v1308
    %v1373 = vunpack.c.h.b16 %v1308
    %v1374 = vunpack.c.l.b16 %v1309
    %v1375 = vunpack.c.h.b16 %v1309
    %v1376 = vunpack.c.l.b16 %v1310
    %v1377 = vunpack.c.h.b16 %v1310
    %v1378 = vunpack.c.l.b16 %v1311
    %v1379 = vunpack.c.h.b16 %v1311
    %v1380 = vunpack.c.l.b16 %v1312
    %v1381 = vunpack.c.h.b16 %v1312
    %v1382 = vunpack.c.l.b16 %v1313
    %v1383 = vunpack.c.h.b16 %v1313
    %v1384 = vunpack.c.l.b16 %v1314
    %v1385 = vunpack.c.h.b16 %v1314
    %v1386 = vunpack.c.l.b16 %v1315
    %v1387 = vunpack.c.h.b16 %v1315
    %v1388 = vunpack.c.l.b16 %v1316
    %v1389 = vunpack.c.h.b16 %v1316
    %v1390 = vunpack.c.l.b16 %v1317
    %v1391 = vunpack.c.h.b16 %v1317
    %v1392 = vunpack.c.l.b16 %v1318
    %v1393 = vunpack.c.h.b16 %v1318
    %v1394 = vunpack.c.l.b16 %v1319
    %v1395 = vunpack.c.h.b16 %v1319
    %v1396 = vunpack.c.l.b16 %v1320
    %v1397 = vunpack.c.h.b16 %v1320
    %v1398 = vunpack.c.l.b16 %v1321
    %v1399 = vunpack.c.h.b16 %v1321
    %v1400 = vunpack.c.l.b16 %v1322
    %v1401 = vunpack.c.h.b16 %v1322
    %v1402 = vunpack.c.l.b16 %v1323
    %v1403 = vunpack.c.h.b16 %v1323
    %v1404 = vpack.c.b16 %v1374, %v1372
    %v1405 = vpack.c.b16 %v1375, %v1373
    %v1406 = vpack.c.b16 %v1378, %v1376
    %v1407 = vpack.c.b16 %v1379, %v1377
    %v1408 = vpack.c.b16 %v1382, %v1380
    %v1409 = vpack.c.b16 %v1383, %v1381
    %v1410 = vpack.c.b16 %v1386, %v1384
    %v1411 = vpack.c.b16 %v1387, %v1385
    %v1412 = vpack.c.b16 %v1390, %v1388
    %v1413 = vpack.c.b16 %v1391, %v1389
    %v1414 = vpack.c.b16 %v1394, %v1392
    %v1415 = vpack.c.b16 %v1395, %v1393
    %v1416 = vpack.c.b16 %v1398, %v1396
    %v1417 = vpack.c.b16 %v1399, %v1397
    %v1418 = vpack.c.b16 %v1402, %v1400
    %v1419 = vpack.c.b16 %v1403, %v1401
    %v1468 = vunpack.c.l.b16 %v1324
    %v1469 = vunpack.c.l.b16 %v1325
    %v1470 = vunpack.c.l.b16 %v1326
    %v1471 = vunpack.c.l.b16 %v1327
    %v1472 = vunpack.c.l.b16 %v1328
    %v1473 = vunpack.c.l.b16 %v1329
    %v1474 = vunpack.c.l.b16 %v1330
    %v1475 = vunpack.c.l.b16 %v1331
    %v1476 = vunpack.c.l.b16 %v1332
    %v1477 = vunpack.c.l.b16 %v1333
    %v1478 = vunpack.c.l.b16 %v1334
    %v1479 = vunpack.c.l.b16 %v1335
    %v1480 = vunpack.c.l.b16 %v1336
    %v1481 = vunpack.c.l.b16 %v1337
    %v1482 = vunpack.c.l.b16 %v1338
    %v1483 = vunpack.c.l.b16 %v1339
    %v1484 = vunpack.c.l.b16 %v1340
    %v1485 = vunpack.c.l.b16 %v1341
    %v1486 = vunpack.c.l.b16 %v1342
    %v1487 = vunpack.c.l.b16 %v1343
    %v1488 = vunpack.c.l.b16 %v1344
    %v1489 = vunpack.c.l.b16 %v1345
    %v1490 = vunpack.c.l.b16 %v1346
    %v1491 = vunpack.c.l.b16 %v1347
    %v1492 = vunpack.c.l.b16 %v1348
    %v1493 = vunpack.c.l.b16 %v1349
    %v1494 = vunpack.c.l.b16 %v1350
    %v1495 = vunpack.c.l.b16 %v1351
    %v1496 = vunpack.c.l.b16 %v1352
    %v1497 = vunpack.c.l.b16 %v1353
    %v1498 = vunpack.c.l.b16 %v1354
    %v1499 = vunpack.c.l.b16 %v1355
    %v1500 = vpack.c.b16 %v1469, %v1468
    %v1501 = vpack.c.b16 %v1471, %v1470
    %v1502 = vpack.c.b16 %v1473, %v1472
    %v1503 = vpack.c.b16 %v1475, %v1474
    %v1504 = vpack.c.b16 %v1477, %v1476
    %v1505 = vpack.c.b16 %v1479, %v1478
    %v1506 = vpack.c.b16 %v1481, %v1480
    %v1507 = vpack.c.b16 %v1483, %v1482
    %v1508 = vpack.c.b16 %v1485, %v1484
    %v1509 = vpack.c.b16 %v1487, %v1486
    %v1510 = vpack.c.b16 %v1489, %v1488
    %v1511 = vpack.c.b16 %v1491, %v1490
    %v1512 = vpack.c.b16 %v1493, %v1492
    %v1513 = vpack.c.b16 %v1495, %v1494
    %v1514 = vpack.c.b16 %v1497, %v1496
    %v1515 = vpack.c.b16 %v1499, %v1498
    %1532 = vmatprep.subr.bf16.mxu0 0
    %1533 = vmatpush1.bf16.msra.mxu0 %v1507
    %1534 = vmatprep.subr.bf16.mxu0 0
    %1535 = vmatpush1.bf16.msra.mxu0 %v1506
    %1536 = vmatprep.subr.bf16.mxu0 0
    %1537 = vmatpush1.bf16.msra.mxu0 %v1505
    %1538 = vmatprep.subr.bf16.mxu0 0
    %1539 = vmatpush1.bf16.msra.mxu0 %v1504
    %1540 = vmatprep.subr.bf16.mxu0 0
    %1541 = vmatpush1.bf16.msra.mxu0 %v1503
    %1542 = vmatprep.subr.bf16.mxu0 0
    %1543 = vmatpush1.bf16.msra.mxu0 %v1502
    %1544 = vmatprep.subr.bf16.mxu0 0
    %1545 = vmatpush1.bf16.msra.mxu0 %v1501
    %1546 = vmatprep.subr.bf16.mxu0 0
    %1547 = vmatpush1.bf16.msra.mxu0 %v1500
    %1548 = vmatprep.subr.bf16.mxu0 0
    %1549 = vmatpush2.bf16.msra.mxu0 %v1515
    %1550 = vmatprep.subr.bf16.mxu0 0
    %1551 = vmatpush2.bf16.msra.mxu0 %v1514
    %1552 = vmatprep.subr.bf16.mxu0 0
    %1553 = vmatpush2.bf16.msra.mxu0 %v1513
    %1554 = vmatprep.subr.bf16.mxu0 0
    %1555 = vmatpush2.bf16.msra.mxu0 %v1512
    %1556 = vmatprep.subr.bf16.mxu0 0
    %1557 = vmatpush2.bf16.msra.mxu0 %v1511
    %1558 = vmatprep.subr.bf16.mxu0 0
    %1559 = vmatpush2.bf16.msra.mxu0 %v1510
    %1560 = vmatprep.subr.bf16.mxu0 0
    %1561 = vmatpush2.bf16.msra.mxu0 %v1509
    %1562 = vmatprep.subr.bf16.mxu0 0
    %1563 = vmatpush2.bf16.msra.mxu0 %v1508
    %1564 = vmatprep.mubr.bf16.mxu0 %v1405
    %1565 = vmatmul.mubr.bf16.gmra.mxu0 %v1404
    %v1566 = vpop.f32.mrf.mxu0
    %v1567 = vadd.f32 %v427, %v1566
    %v1568 = vpop.f32.mrf.mxu0
    %v1569 = vpop.f32.mrf.mxu0
    %v1570 = vadd.f32 %v430, %v1569
    %v1571 = vpop.f32.mrf.mxu0
    %1572 = vmatprep.mubr.bf16.mxu0 %v1407
    %1573 = vmatmul.mubr.bf16.gmra.mxu0 %v1406
    %v1574 = vpop.f32.mrf.mxu0
    %v1575 = vadd.f32 %v435, %v1574
    %v1576 = vpop.f32.mrf.mxu0
    %v1577 = vpop.f32.mrf.mxu0
    %v1578 = vadd.f32 %v438, %v1577
    %v1579 = vpop.f32.mrf.mxu0
    %1580 = vmatprep.mubr.bf16.mxu0 %v1409
    %1581 = vmatmul.mubr.bf16.gmra.mxu0 %v1408
    %v1582 = vpop.f32.mrf.mxu0
    %v1583 = vadd.f32 %v443, %v1582
    %v1584 = vpop.f32.mrf.mxu0
    %v1585 = vpop.f32.mrf.mxu0
    %v1586 = vadd.f32 %v446, %v1585
    %v1587 = vpop.f32.mrf.mxu0
    %1588 = vmatprep.mubr.bf16.mxu0 %v1411
    %1589 = vmatmul.mubr.bf16.gmra.mxu0 %v1410
    %v1590 = vpop.f32.mrf.mxu0
    %v1591 = vadd.f32 %v451, %v1590
    %v1592 = vpop.f32.mrf.mxu0
    %v1593 = vpop.f32.mrf.mxu0
    %v1594 = vadd.f32 %v454, %v1593
    %v1595 = vpop.f32.mrf.mxu0
    %1596 = vmatprep.mubr.bf16.mxu0 %v1413
    %1597 = vmatmul.mubr.bf16.gmra.mxu0 %v1412
    %v1598 = vpop.f32.mrf.mxu0
    %v1599 = vadd.f32 %v459, %v1598
    %v1600 = vpop.f32.mrf.mxu0
    %v1601 = vpop.f32.mrf.mxu0
    %v1602 = vadd.f32 %v462, %v1601
    %v1603 = vpop.f32.mrf.mxu0
    %1604 = vmatprep.mubr.bf16.mxu0 %v1415
    %1605 = vmatmul.mubr.bf16.gmra.mxu0 %v1414
    %v1606 = vpop.f32.mrf.mxu0
    %v1607 = vadd.f32 %v467, %v1606
    %v1608 = vpop.f32.mrf.mxu0
    %v1609 = vpop.f32.mrf.mxu0
    %v1610 = vadd.f32 %v470, %v1609
    %v1611 = vpop.f32.mrf.mxu0
    %1612 = vmatprep.mubr.bf16.mxu0 %v1417
    %1613 = vmatmul.mubr.bf16.gmra.mxu0 %v1416
    %v1614 = vpop.f32.mrf.mxu0
    %v1615 = vadd.f32 %v475, %v1614
    %v1616 = vpop.f32.mrf.mxu0
    %v1617 = vpop.f32.mrf.mxu0
    %v1618 = vadd.f32 %v478, %v1617
    %v1619 = vpop.f32.mrf.mxu0
    %1620 = vmatprep.mubr.bf16.mxu0 %v1419
    %1621 = vmatmul.mubr.bf16.gmra.mxu0 %v1418
    %v1622 = vpop.f32.mrf.mxu0
    %v1623 = vadd.f32 %v483, %v1622
    %v1624 = vpop.f32.mrf.mxu0
    %v1625 = vpop.f32.mrf.mxu0
    %v1626 = vadd.f32 %v486, %v1625
    %v1627 = vpop.f32.mrf.mxu0
    %1628 = vdwg.mxu0
    %v1629 = vld [vmem:[%s5] sm:$0x1]
    %v1631 = vlaneseq
    %v1632 = vshrl.u32 %v1631, 7
    %v1633 = vsub.s32 0, %v1632
    %v1634 = vrot.slane %v1629, %v1633
    %v1636 = vadd.f32 %v1567, %v1634
    %v1637 = vadd.f32 %v1570, %v1634
    %v1638 = vadd.f32 %v1575, %v1634
    %v1639 = vadd.f32 %v1578, %v1634
    %v1640 = vadd.f32 %v1583, %v1634
    %v1641 = vadd.f32 %v1586, %v1634
    %v1642 = vadd.f32 %v1591, %v1634
    %v1643 = vadd.f32 %v1594, %v1634
    %v1644 = vadd.f32 %v1599, %v1634
    %v1645 = vadd.f32 %v1602, %v1634
    %v1646 = vadd.f32 %v1607, %v1634
    %v1647 = vadd.f32 %v1610, %v1634
    %v1648 = vadd.f32 %v1615, %v1634
    %v1649 = vadd.f32 %v1618, %v1634
    %v1650 = vadd.f32 %v1623, %v1634
    %v1651 = vadd.f32 %v1626, %v1634
    %v1652 = vtanh.pop %v1636
    %v1653 = vtanh.pop %v1637
    %v1654 = vtanh.pop %v1638
    %v1655 = vtanh.pop %v1639
    %v1656 = vtanh.pop %v1640
    %v1657 = vtanh.pop %v1641
    %v1658 = vtanh.pop %v1642
    %v1659 = vtanh.pop %v1643
    %v1660 = vtanh.pop %v1644
    %v1661 = vtanh.pop %v1645
    %v1662 = vtanh.pop %v1646
    %v1663 = vtanh.pop %v1647
    %v1664 = vtanh.pop %v1648
    %v1665 = vtanh.pop %v1649
    %v1666 = vtanh.pop %v1650
    %v1667 = vtanh.pop %v1651
    %v1668 = vpack.c.bf16 %v1653, %v1652
    %v1669 = vpack.c.bf16 %v1655, %v1654
    %v1670 = vpack.c.bf16 %v1657, %v1656
    %v1671 = vpack.c.bf16 %v1659, %v1658
    %v1672 = vpack.c.bf16 %v1661, %v1660
    %v1673 = vpack.c.bf16 %v1663, %v1662
    %v1674 = vpack.c.bf16 %v1665, %v1664
    %v1675 = vpack.c.bf16 %v1667, %v1666
    %v1676 = vld [vmem:[%s6] sm:$0xff]
    %v1677 = vld [vmem:[%s6 + $0x8] sm:$0xf]
    %v1678 = vld [vmem:[%s6 + $0xc] sm:$0xff]
    %v1679 = vld [vmem:[%s6 + $0x14] sm:$0xf]
    %v1680 = vld [vmem:[%s6 + $0x18] sm:$0xff]
    %v1681 = vld [vmem:[%s6 + $0x20] sm:$0xf]
    %v1682 = vld [vmem:[%s6 + $0x24] sm:$0xff]
    %v1683 = vld [vmem:[%s6 + $0x2c] sm:$0xf]
    %v1684 = vld [vmem:[%s6 + $0x30] sm:$0xff]
    %v1685 = vld [vmem:[%s6 + $0x38] sm:$0xf]
    %v1686 = vld [vmem:[%s6 + $0x3c] sm:$0xff]
    %v1687 = vld [vmem:[%s6 + $0x44] sm:$0xf]
    %v1688 = vld [vmem:[%s6 + $0x48] sm:$0xff]
    %v1689 = vld [vmem:[%s6 + $0x50] sm:$0xf]
    %v1690 = vld [vmem:[%s6 + $0x54] sm:$0xff]
    %v1691 = vld [vmem:[%s6 + $0x5c] sm:$0xf]
    %v1692 = vld [vmem:[%s6 + $0x60] sm:$0xff]
    %v1693 = vld [vmem:[%s6 + $0x68] sm:$0xf]
    %v1694 = vld [vmem:[%s6 + $0x6c] sm:$0xff]
    %v1695 = vld [vmem:[%s6 + $0x74] sm:$0xf]
    %v1696 = vld [vmem:[%s6 + $0x78] sm:$0xff]
    %v1697 = vld [vmem:[%s6 + $0x80] sm:$0xf]
    %v1698 = vld [vmem:[%s6 + $0x84] sm:$0xff]
    %v1699 = vld [vmem:[%s6 + $0x8c] sm:$0xf]
    %v1700 = vld [vmem:[%s6 + $0x90] sm:$0xff]
    %v1701 = vld [vmem:[%s6 + $0x98] sm:$0xf]
    %v1702 = vld [vmem:[%s6 + $0x9c] sm:$0xff]
    %v1703 = vld [vmem:[%s6 + $0xa4] sm:$0xf]
    %v1704 = vld [vmem:[%s6 + $0xa8] sm:$0xff]
    %v1705 = vld [vmem:[%s6 + $0xb0] sm:$0xf]
    %v1706 = vld [vmem:[%s6 + $0xb4] sm:$0xff]
    %v1707 = vld [vmem:[%s6 + $0xbc] sm:$0xf]
    %v1740 = vunpack.c.l.b16 %v1676
    %v1741 = vunpack.c.h.b16 %v1676
    %v1742 = vunpack.c.l.b16 %v1677
    %v1743 = vunpack.c.l.b16 %v1678
    %v1744 = vunpack.c.h.b16 %v1678
    %v1745 = vunpack.c.l.b16 %v1679
    %v1746 = vunpack.c.l.b16 %v1680
    %v1747 = vunpack.c.h.b16 %v1680
    %v1748 = vunpack.c.l.b16 %v1681
    %v1749 = vunpack.c.l.b16 %v1682
    %v1750 = vunpack.c.h.b16 %v1682
    %v1751 = vunpack.c.l.b16 %v1683
    %v1752 = vunpack.c.l.b16 %v1684
    %v1753 = vunpack.c.h.b16 %v1684
    %v1754 = vunpack.c.l.b16 %v1685
    %v1755 = vunpack.c.l.b16 %v1686
    %v1756 = vunpack.c.h.b16 %v1686
    %v1757 = vunpack.c.l.b16 %v1687
    %v1758 = vunpack.c.l.b16 %v1688
    %v1759 = vunpack.c.h.b16 %v1688
    %v1760 = vunpack.c.l.b16 %v1689
    %v1761 = vunpack.c.l.b16 %v1690
    %v1762 = vunpack.c.h.b16 %v1690
    %v1763 = vunpack.c.l.b16 %v1691
    %v1764 = vunpack.c.l.b16 %v1692
    %v1765 = vunpack.c.h.b16 %v1692
    %v1766 = vunpack.c.l.b16 %v1693
    %v1767 = vunpack.c.l.b16 %v1694
    %v1768 = vunpack.c.h.b16 %v1694
    %v1769 = vunpack.c.l.b16 %v1695
    %v1770 = vunpack.c.l.b16 %v1696
    %v1771 = vunpack.c.h.b16 %v1696
    %v1772 = vunpack.c.l.b16 %v1697
    %v1773 = vunpack.c.l.b16 %v1698
    %v1774 = vunpack.c.h.b16 %v1698
    %v1775 = vunpack.c.l.b16 %v1699
    %v1776 = vunpack.c.l.b16 %v1700
    %v1777 = vunpack.c.h.b16 %v1700
    %v1778 = vunpack.c.l.b16 %v1701
    %v1779 = vunpack.c.l.b16 %v1702
    %v1780 = vunpack.c.h.b16 %v1702
    %v1781 = vunpack.c.l.b16 %v1703
    %v1782 = vunpack.c.l.b16 %v1704
    %v1783 = vunpack.c.h.b16 %v1704
    %v1784 = vunpack.c.l.b16 %v1705
    %v1785 = vunpack.c.l.b16 %v1706
    %v1786 = vunpack.c.h.b16 %v1706
    %v1787 = vunpack.c.l.b16 %v1707
    %v1788 = vpack.c.b16 %v1743, %v1740
    %v1789 = vpack.c.b16 %v1744, %v1741
    %v1790 = vpack.c.b16 %v1745, %v1742
    %v1791 = vpack.c.b16 %v1749, %v1746
    %v1792 = vpack.c.b16 %v1750, %v1747
    %v1793 = vpack.c.b16 %v1751, %v1748
    %v1794 = vpack.c.b16 %v1755, %v1752
    %v1795 = vpack.c.b16 %v1756, %v1753
    %v1796 = vpack.c.b16 %v1757, %v1754
    %v1797 = vpack.c.b16 %v1761, %v1758
    %v1798 = vpack.c.b16 %v1762, %v1759
    %v1799 = vpack.c.b16 %v1763, %v1760
    %v1800 = vpack.c.b16 %v1767, %v1764
    %v1801 = vpack.c.b16 %v1768, %v1765
    %v1802 = vpack.c.b16 %v1769, %v1766
    %v1803 = vpack.c.b16 %v1773, %v1770
    %v1804 = vpack.c.b16 %v1774, %v1771
    %v1805 = vpack.c.b16 %v1775, %v1772
    %v1806 = vpack.c.b16 %v1779, %v1776
    %v1807 = vpack.c.b16 %v1780, %v1777
    %v1808 = vpack.c.b16 %v1781, %v1778
    %v1809 = vpack.c.b16 %v1785, %v1782
    %v1810 = vpack.c.b16 %v1786, %v1783
    %v1811 = vpack.c.b16 %v1787, %v1784
    %1836 = vmatprep.subr.bf16.mxu0 %v1810
    %1837 = vmatpush1.bf16.msra.mxu0 %v1809
    %1838 = vmatprep.subr.bf16.mxu0 %v1807
    %1839 = vmatpush1.bf16.msra.mxu0 %v1806
    %1840 = vmatprep.subr.bf16.mxu0 %v1804
    %1841 = vmatpush1.bf16.msra.mxu0 %v1803
    %1842 = vmatprep.subr.bf16.mxu0 %v1801
    %1843 = vmatpush1.bf16.msra.mxu0 %v1800
    %1844 = vmatprep.subr.bf16.mxu0 %v1798
    %1845 = vmatpush1.bf16.msra.mxu0 %v1797
    %1846 = vmatprep.subr.bf16.mxu0 %v1795
    %1847 = vmatpush1.bf16.msra.mxu0 %v1794
    %1848 = vmatprep.subr.bf16.mxu0 %v1792
    %1849 = vmatpush1.bf16.msra.mxu0 %v1791
    %1850 = vmatprep.subr.bf16.mxu0 %v1789
    %1851 = vmatpush1.bf16.msra.mxu0 %v1788
    %1852 = vmatprep.subr.bf16.mxu0 0
    %1853 = vmatpush2.bf16.msra.mxu0 0
    %1854 = vmatprep.subr.bf16.mxu0 0
    %1855 = vmatpush2.bf16.msra.mxu0 0
    %1856 = vmatprep.subr.bf16.mxu0 0
    %1857 = vmatpush2.bf16.msra.mxu0 0
    %1858 = vmatprep.subr.bf16.mxu0 0
    %1859 = vmatpush2.bf16.msra.mxu0 0
    %1860 = vmatprep.subr.bf16.mxu0 0
    %1861 = vmatpush2.bf16.msra.mxu0 0
    %1862 = vmatprep.subr.bf16.mxu0 0
    %1863 = vmatpush2.bf16.msra.mxu0 0
    %1864 = vmatprep.subr.bf16.mxu0 0
    %1865 = vmatpush2.bf16.msra.mxu0 0
    %1866 = vmatprep.subr.bf16.mxu0 0
    %1867 = vmatpush2.bf16.msra.mxu0 0
    %1868 = vmatprep.mubr.bf16.mxu0 0
    %1869 = vmatmul.mubr.bf16.gmra.mxu0 %v1668
    %v1870 = vpop.f32.mrf.mxu0
    %v1871 = vadd.f32 0.0, %v1870
    %v1872 = vpop.f32.mrf.mxu0
    %v1873 = vadd.f32 0.0, %v1872
    %v1874 = vpop.f32.mrf.mxu0
    %v1875 = vadd.f32 0.0, %v1874
    %v1876 = vpop.f32.mrf.mxu0
    %v1877 = vadd.f32 0.0, %v1876
    %1878 = vmatprep.mubr.bf16.mxu0 0
    %1879 = vmatmul.mubr.bf16.gmra.mxu0 %v1669
    %v1880 = vpop.f32.mrf.mxu0
    %v1881 = vadd.f32 0.0, %v1880
    %v1882 = vpop.f32.mrf.mxu0
    %v1883 = vadd.f32 0.0, %v1882
    %v1884 = vpop.f32.mrf.mxu0
    %v1885 = vadd.f32 0.0, %v1884
    %v1886 = vpop.f32.mrf.mxu0
    %v1887 = vadd.f32 0.0, %v1886
    %1888 = vmatprep.mubr.bf16.mxu0 0
    %1889 = vmatmul.mubr.bf16.gmra.mxu0 %v1670
    %v1890 = vpop.f32.mrf.mxu0
    %v1891 = vadd.f32 0.0, %v1890
    %v1892 = vpop.f32.mrf.mxu0
    %v1893 = vadd.f32 0.0, %v1892
    %v1894 = vpop.f32.mrf.mxu0
    %v1895 = vadd.f32 0.0, %v1894
    %v1896 = vpop.f32.mrf.mxu0
    %v1897 = vadd.f32 0.0, %v1896
    %1898 = vmatprep.mubr.bf16.mxu0 0
    %1899 = vmatmul.mubr.bf16.gmra.mxu0 %v1671
    %v1900 = vpop.f32.mrf.mxu0
    %v1901 = vadd.f32 0.0, %v1900
    %v1902 = vpop.f32.mrf.mxu0
    %v1903 = vadd.f32 0.0, %v1902
    %v1904 = vpop.f32.mrf.mxu0
    %v1905 = vadd.f32 0.0, %v1904
    %v1906 = vpop.f32.mrf.mxu0
    %v1907 = vadd.f32 0.0, %v1906
    %1908 = vmatprep.mubr.bf16.mxu0 0
    %1909 = vmatmul.mubr.bf16.gmra.mxu0 %v1672
    %v1910 = vpop.f32.mrf.mxu0
    %v1911 = vadd.f32 0.0, %v1910
    %v1912 = vpop.f32.mrf.mxu0
    %v1913 = vadd.f32 0.0, %v1912
    %v1914 = vpop.f32.mrf.mxu0
    %v1915 = vadd.f32 0.0, %v1914
    %v1916 = vpop.f32.mrf.mxu0
    %v1917 = vadd.f32 0.0, %v1916
    %1918 = vmatprep.mubr.bf16.mxu0 0
    %1919 = vmatmul.mubr.bf16.gmra.mxu0 %v1673
    %v1920 = vpop.f32.mrf.mxu0
    %v1921 = vadd.f32 0.0, %v1920
    %v1922 = vpop.f32.mrf.mxu0
    %v1923 = vadd.f32 0.0, %v1922
    %v1924 = vpop.f32.mrf.mxu0
    %v1925 = vadd.f32 0.0, %v1924
    %v1926 = vpop.f32.mrf.mxu0
    %v1927 = vadd.f32 0.0, %v1926
    %1928 = vmatprep.mubr.bf16.mxu0 0
    %1929 = vmatmul.mubr.bf16.gmra.mxu0 %v1674
    %v1930 = vpop.f32.mrf.mxu0
    %v1931 = vadd.f32 0.0, %v1930
    %v1932 = vpop.f32.mrf.mxu0
    %v1933 = vadd.f32 0.0, %v1932
    %v1934 = vpop.f32.mrf.mxu0
    %v1935 = vadd.f32 0.0, %v1934
    %v1936 = vpop.f32.mrf.mxu0
    %v1937 = vadd.f32 0.0, %v1936
    %1938 = vmatprep.mubr.bf16.mxu0 0
    %1939 = vmatmul.mubr.bf16.gmra.mxu0 %v1675
    %v1940 = vpop.f32.mrf.mxu0
    %v1941 = vadd.f32 0.0, %v1940
    %v1942 = vpop.f32.mrf.mxu0
    %v1943 = vadd.f32 0.0, %v1942
    %v1944 = vpop.f32.mrf.mxu0
    %v1945 = vadd.f32 0.0, %v1944
    %v1946 = vpop.f32.mrf.mxu0
    %v1947 = vadd.f32 0.0, %v1946
    %1948 = vdwg.mxu0
    %1949 = vmatprep.subr.bf16.mxu0 0
    %1950 = vmatpush1.bf16.msra.mxu0 %v1811
    %1951 = vmatprep.subr.bf16.mxu0 0
    %1952 = vmatpush1.bf16.msra.mxu0 %v1808
    %1953 = vmatprep.subr.bf16.mxu0 0
    %1954 = vmatpush1.bf16.msra.mxu0 %v1805
    %1955 = vmatprep.subr.bf16.mxu0 0
    %1956 = vmatpush1.bf16.msra.mxu0 %v1802
    %1957 = vmatprep.subr.bf16.mxu0 0
    %1958 = vmatpush1.bf16.msra.mxu0 %v1799
    %1959 = vmatprep.subr.bf16.mxu0 0
    %1960 = vmatpush1.bf16.msra.mxu0 %v1796
    %1961 = vmatprep.subr.bf16.mxu0 0
    %1962 = vmatpush1.bf16.msra.mxu0 %v1793
    %1963 = vmatprep.subr.bf16.mxu0 0
    %1964 = vmatpush1.bf16.msra.mxu0 %v1790
    %1965 = vmatprep.subr.bf16.mxu0 0
    %1966 = vmatpush2.bf16.msra.mxu0 0
    %1967 = vmatprep.subr.bf16.mxu0 0
    %1968 = vmatpush2.bf16.msra.mxu0 0
    %1969 = vmatprep.subr.bf16.mxu0 0
    %1970 = vmatpush2.bf16.msra.mxu0 0
    %1971 = vmatprep.subr.bf16.mxu0 0
    %1972 = vmatpush2.bf16.msra.mxu0 0
    %1973 = vmatprep.subr.bf16.mxu0 0
    %1974 = vmatpush2.bf16.msra.mxu0 0
    %1975 = vmatprep.subr.bf16.mxu0 0
    %1976 = vmatpush2.bf16.msra.mxu0 0
    %1977 = vmatprep.subr.bf16.mxu0 0
    %1978 = vmatpush2.bf16.msra.mxu0 0
    %1979 = vmatprep.subr.bf16.mxu0 0
    %1980 = vmatpush2.bf16.msra.mxu0 0
    %1981 = vmatprep.mubr.bf16.mxu0 0
    %1982 = vmatmul.mubr.bf16.gmra.mxu0 %v1668
    %v1983 = vpop.f32.mrf.mxu0
    %v1984 = vadd.f32 0.0, %v1983
    %v1985 = vpop.f32.mrf.mxu0
    %v1986 = vpop.f32.mrf.mxu0
    %v1987 = vadd.f32 0.0, %v1986
    %v1988 = vpop.f32.mrf.mxu0
    %1989 = vmatprep.mubr.bf16.mxu0 0
    %1990 = vmatmul.mubr.bf16.gmra.mxu0 %v1669
    %v1991 = vpop.f32.mrf.mxu0
    %v1992 = vadd.f32 0.0, %v1991
    %v1993 = vpop.f32.mrf.mxu0
    %v1994 = vpop.f32.mrf.mxu0
    %v1995 = vadd.f32 0.0, %v1994
    %v1996 = vpop.f32.mrf.mxu0
    %1997 = vmatprep.mubr.bf16.mxu0 0
    %1998 = vmatmul.mubr.bf16.gmra.mxu0 %v1670
    %v1999 = vpop.f32.mrf.mxu0
    %v2000 = vadd.f32 0.0, %v1999
    %v2001 = vpop.f32.mrf.mxu0
    %v2002 = vpop.f32.mrf.mxu0
    %v2003 = vadd.f32 0.0, %v2002
    %v2004 = vpop.f32.mrf.mxu0
    %2005 = vmatprep.mubr.bf16.mxu0 0
    %2006 = vmatmul.mubr.bf16.gmra.mxu0 %v1671
    %v2007 = vpop.f32.mrf.mxu0
    %v2008 = vadd.f32 0.0, %v2007
    %v2009 = vpop.f32.mrf.mxu0
    %v2010 = vpop.f32.mrf.mxu0
    %v2011 = vadd.f32 0.0, %v2010
    %v2012 = vpop.f32.mrf.mxu0
    %2013 = vmatprep.mubr.bf16.mxu0 0
    %2014 = vmatmul.mubr.bf16.gmra.mxu0 %v1672
    %v2015 = vpop.f32.mrf.mxu0
    %v2016 = vadd.f32 0.0, %v2015
    %v2017 = vpop.f32.mrf.mxu0
    %v2018 = vpop.f32.mrf.mxu0
    %v2019 = vadd.f32 0.0, %v2018
    %v2020 = vpop.f32.mrf.mxu0
    %2021 = vmatprep.mubr.bf16.mxu0 0
    %2022 = vmatmul.mubr.bf16.gmra.mxu0 %v1673
    %v2023 = vpop.f32.mrf.mxu0
    %v2024 = vadd.f32 0.0, %v2023
    %v2025 = vpop.f32.mrf.mxu0
    %v2026 = vpop.f32.mrf.mxu0
    %v2027 = vadd.f32 0.0, %v2026
    %v2028 = vpop.f32.mrf.mxu0
    %2029 = vmatprep.mubr.bf16.mxu0 0
    %2030 = vmatmul.mubr.bf16.gmra.mxu0 %v1674
    %v2031 = vpop.f32.mrf.mxu0
    %v2032 = vadd.f32 0.0, %v2031
    %v2033 = vpop.f32.mrf.mxu0
    %v2034 = vpop.f32.mrf.mxu0
    %v2035 = vadd.f32 0.0, %v2034
    %v2036 = vpop.f32.mrf.mxu0
    %2037 = vmatprep.mubr.bf16.mxu0 0
    %2038 = vmatmul.mubr.bf16.gmra.mxu0 %v1675
    %v2039 = vpop.f32.mrf.mxu0
    %v2040 = vadd.f32 0.0, %v2039
    %v2041 = vpop.f32.mrf.mxu0
    %v2042 = vpop.f32.mrf.mxu0
    %v2043 = vadd.f32 0.0, %v2042
    %v2044 = vpop.f32.mrf.mxu0
    %2045 = vdwg.mxu0
    %v2046 = vpack.c.bf16 %v1875, %v1871
    %v2047 = vpack.c.bf16 %v1885, %v1881
    %v2048 = vpack.c.bf16 %v1895, %v1891
    %v2049 = vpack.c.bf16 %v1905, %v1901
    %v2050 = vpack.c.bf16 %v1915, %v1911
    %v2051 = vpack.c.bf16 %v1925, %v1921
    %v2052 = vpack.c.bf16 %v1935, %v1931
    %v2053 = vpack.c.bf16 %v1945, %v1941
    %v2062 = vunpack.c.l.b16 %v2046
    %v2063 = vunpack.c.h.b16 %v2046
    %v2064 = vunpack.c.l.b16 %v2047
    %v2065 = vunpack.c.h.b16 %v2047
    %v2066 = vunpack.c.l.b16 %v2048
    %v2067 = vunpack.c.h.b16 %v2048
    %v2068 = vunpack.c.l.b16 %v2049
    %v2069 = vunpack.c.h.b16 %v2049
    %v2070 = vunpack.c.l.b16 %v2050
    %v2071 = vunpack.c.h.b16 %v2050
    %v2072 = vunpack.c.l.b16 %v2051
    %v2073 = vunpack.c.h.b16 %v2051
    %v2074 = vunpack.c.l.b16 %v2052
    %v2075 = vunpack.c.h.b16 %v2052
    %v2076 = vunpack.c.l.b16 %v2053
    %v2077 = vunpack.c.h.b16 %v2053
    %v2078 = vpack.c.b16 %v2062, %v2062
    %v2079 = vpack.c.b16 %v2063, %v2063
    %v2080 = vpack.c.b16 %v2064, %v2064
    %v2081 = vpack.c.b16 %v2065, %v2065
    %v2082 = vpack.c.b16 %v2066, %v2066
    %v2083 = vpack.c.b16 %v2067, %v2067
    %v2084 = vpack.c.b16 %v2068, %v2068
    %v2085 = vpack.c.b16 %v2069, %v2069
    %v2086 = vpack.c.b16 %v2070, %v2070
    %v2087 = vpack.c.b16 %v2071, %v2071
    %v2088 = vpack.c.b16 %v2072, %v2072
    %v2089 = vpack.c.b16 %v2073, %v2073
    %v2090 = vpack.c.b16 %v2074, %v2074
    %v2091 = vpack.c.b16 %v2075, %v2075
    %v2092 = vpack.c.b16 %v2076, %v2076
    %v2093 = vpack.c.b16 %v2077, %v2077
    %2110 = vst [vmem:[#allocation3] sm:$0xf] %v2078
    %2111 = vst [vmem:[#allocation3 + $0x4] sm:$0xf] %v2079
    %2112 = vst [vmem:[#allocation3 + $0x8] sm:$0xf] %v2080
    %2113 = vst [vmem:[#allocation3 + $0xc] sm:$0xf] %v2081
    %2114 = vst [vmem:[#allocation3 + $0x10] sm:$0xf] %v2082
    %2115 = vst [vmem:[#allocation3 + $0x14] sm:$0xf] %v2083
    %2116 = vst [vmem:[#allocation3 + $0x18] sm:$0xf] %v2084
    %2117 = vst [vmem:[#allocation3 + $0x1c] sm:$0xf] %v2085
    %2118 = vst [vmem:[#allocation3 + $0x20] sm:$0xf] %v2086
    %2119 = vst [vmem:[#allocation3 + $0x24] sm:$0xf] %v2087
    %2120 = vst [vmem:[#allocation3 + $0x28] sm:$0xf] %v2088
    %2121 = vst [vmem:[#allocation3 + $0x2c] sm:$0xf] %v2089
    %2122 = vst [vmem:[#allocation3 + $0x30] sm:$0xf] %v2090
    %2123 = vst [vmem:[#allocation3 + $0x34] sm:$0xf] %v2091
    %2124 = vst [vmem:[#allocation3 + $0x38] sm:$0xf] %v2092
    %2125 = vst [vmem:[#allocation3 + $0x3c] sm:$0xf] %v2093
    %s2126 = sld [smem:[#allocation6]]
    %v2127 = vld [vmem:[%s0] sm:$0xf]
    %v2128 = vld [vmem:[%s0 + $0x4] sm:$0xf]
    %v2129 = vld [vmem:[%s0 + $0x8] sm:$0xf]
    %v2130 = vld [vmem:[%s0 + $0xc] sm:$0xf]
    %v2131 = vld [vmem:[%s0 + $0x10] sm:$0xf]
    %v2132 = vld [vmem:[%s0 + $0x14] sm:$0xf]
    %v2133 = vld [vmem:[%s0 + $0x18] sm:$0xf]
    %v2134 = vld [vmem:[%s0 + $0x1c] sm:$0xf]
    %v2135 = vld [vmem:[%s0 + $0x20] sm:$0xf]
    %v2136 = vld [vmem:[%s0 + $0x24] sm:$0xf]
    %v2137 = vld [vmem:[%s0 + $0x28] sm:$0xf]
    %v2138 = vld [vmem:[%s0 + $0x2c] sm:$0xf]
    %v2139 = vld [vmem:[%s0 + $0x30] sm:$0xf]
    %v2140 = vld [vmem:[%s0 + $0x34] sm:$0xf]
    %v2141 = vld [vmem:[%s0 + $0x38] sm:$0xf]
    %v2142 = vld [vmem:[%s0 + $0x3c] sm:$0xf]
    %v2143 = vunpack.c.l.bf16 %v2127
    %v2144 = vunpack.c.l.bf16 %v2128
    %v2145 = vunpack.c.l.bf16 %v2129
    %v2146 = vunpack.c.l.bf16 %v2130
    %v2147 = vunpack.c.l.bf16 %v2131
    %v2148 = vunpack.c.l.bf16 %v2132
    %v2149 = vunpack.c.l.bf16 %v2133
    %v2150 = vunpack.c.l.bf16 %v2134
    %v2151 = vunpack.c.l.bf16 %v2135
    %v2152 = vunpack.c.l.bf16 %v2136
    %v2153 = vunpack.c.l.bf16 %v2137
    %v2154 = vunpack.c.l.bf16 %v2138
    %v2155 = vunpack.c.l.bf16 %v2139
    %v2156 = vunpack.c.l.bf16 %v2140
    %v2157 = vunpack.c.l.bf16 %v2141
    %v2158 = vunpack.c.l.bf16 %v2142
    %v2159 = vstv %s2126
    %v2160 = vmul.f32 %v2159, %v2143
    %v2161 = vmul.f32 %v2159, %v2144
    %v2162 = vmul.f32 %v2159, %v2145
    %v2163 = vmul.f32 %v2159, %v2146
    %v2164 = vmul.f32 %v2159, %v2147
    %v2165 = vmul.f32 %v2159, %v2148
    %v2166 = vmul.f32 %v2159, %v2149
    %v2167 = vmul.f32 %v2159, %v2150
    %v2168 = vmul.f32 %v2159, %v2151
    %v2169 = vmul.f32 %v2159, %v2152
    %v2170 = vmul.f32 %v2159, %v2153
    %v2171 = vmul.f32 %v2159, %v2154
    %v2172 = vmul.f32 %v2159, %v2155
    %v2173 = vmul.f32 %v2159, %v2156
    %v2174 = vmul.f32 %v2159, %v2157
    %v2175 = vmul.f32 %v2159, %v2158
    %s2176 = sld [smem:[#allocation6 + $0x80]]
    %v2177 = vld [vmem:[%s620] sm:$0xf]
    %v2178 = vld [vmem:[%s620 + $0x4] sm:$0xf]
    %v2179 = vld [vmem:[%s620 + $0x8] sm:$0xf]
    %v2180 = vld [vmem:[%s620 + $0xc] sm:$0xf]
    %v2181 = vld [vmem:[%s620 + $0x10] sm:$0xf]
    %v2182 = vld [vmem:[%s620 + $0x14] sm:$0xf]
    %v2183 = vld [vmem:[%s620 + $0x18] sm:$0xf]
    %v2184 = vld [vmem:[%s620 + $0x1c] sm:$0xf]
    %v2185 = vld [vmem:[%s620 + $0x20] sm:$0xf]
    %v2186 = vld [vmem:[%s620 + $0x24] sm:$0xf]
    %v2187 = vld [vmem:[%s620 + $0x28] sm:$0xf]
    %v2188 = vld [vmem:[%s620 + $0x2c] sm:$0xf]
    %v2189 = vld [vmem:[%s620 + $0x30] sm:$0xf]
    %v2190 = vld [vmem:[%s620 + $0x34] sm:$0xf]
    %v2191 = vld [vmem:[%s620 + $0x38] sm:$0xf]
    %v2192 = vld [vmem:[%s620 + $0x3c] sm:$0xf]
    %v2193 = vunpack.c.l.bf16 %v2177
    %v2194 = vunpack.c.l.bf16 %v2178
    %v2195 = vunpack.c.l.bf16 %v2179
    %v2196 = vunpack.c.l.bf16 %v2180
    %v2197 = vunpack.c.l.bf16 %v2181
    %v2198 = vunpack.c.l.bf16 %v2182
    %v2199 = vunpack.c.l.bf16 %v2183
    %v2200 = vunpack.c.l.bf16 %v2184
    %v2201 = vunpack.c.l.bf16 %v2185
    %v2202 = vunpack.c.l.bf16 %v2186
    %v2203 = vunpack.c.l.bf16 %v2187
    %v2204 = vunpack.c.l.bf16 %v2188
    %v2205 = vunpack.c.l.bf16 %v2189
    %v2206 = vunpack.c.l.bf16 %v2190
    %v2207 = vunpack.c.l.bf16 %v2191
    %v2208 = vunpack.c.l.bf16 %v2192
    %v2209 = vstv %s2176
    %v2210 = vmul.f32 %v2209, %v2193
    %v2211 = vmul.f32 %v2209, %v2194
    %v2212 = vmul.f32 %v2209, %v2195
    %v2213 = vmul.f32 %v2209, %v2196
    %v2214 = vmul.f32 %v2209, %v2197
    %v2215 = vmul.f32 %v2209, %v2198
    %v2216 = vmul.f32 %v2209, %v2199
    %v2217 = vmul.f32 %v2209, %v2200
    %v2218 = vmul.f32 %v2209, %v2201
    %v2219 = vmul.f32 %v2209, %v2202
    %v2220 = vmul.f32 %v2209, %v2203
    %v2221 = vmul.f32 %v2209, %v2204
    %v2222 = vmul.f32 %v2209, %v2205
    %v2223 = vmul.f32 %v2209, %v2206
    %v2224 = vmul.f32 %v2209, %v2207
    %v2225 = vmul.f32 %v2209, %v2208
    %v2226 = vadd.f32 %v2160, %v2210
    %v2227 = vadd.f32 %v2161, %v2211
    %v2228 = vadd.f32 %v2162, %v2212
    %v2229 = vadd.f32 %v2163, %v2213
    %v2230 = vadd.f32 %v2164, %v2214
    %v2231 = vadd.f32 %v2165, %v2215
    %v2232 = vadd.f32 %v2166, %v2216
    %v2233 = vadd.f32 %v2167, %v2217
    %v2234 = vadd.f32 %v2168, %v2218
    %v2235 = vadd.f32 %v2169, %v2219
    %v2236 = vadd.f32 %v2170, %v2220
    %v2237 = vadd.f32 %v2171, %v2221
    %v2238 = vadd.f32 %v2172, %v2222
    %v2239 = vadd.f32 %v2173, %v2223
    %v2240 = vadd.f32 %v2174, %v2224
    %v2241 = vadd.f32 %v2175, %v2225
    %s2242 = sld [smem:[#allocation6 + $0x100]]
    %v2243 = vld [vmem:[%s687] sm:$0xf]
    %v2244 = vld [vmem:[%s687 + $0x4] sm:$0xf]
    %v2245 = vld [vmem:[%s687 + $0x8] sm:$0xf]
    %v2246 = vld [vmem:[%s687 + $0xc] sm:$0xf]
    %v2247 = vld [vmem:[%s687 + $0x10] sm:$0xf]
    %v2248 = vld [vmem:[%s687 + $0x14] sm:$0xf]
    %v2249 = vld [vmem:[%s687 + $0x18] sm:$0xf]
    %v2250 = vld [vmem:[%s687 + $0x1c] sm:$0xf]
    %v2251 = vld [vmem:[%s687 + $0x20] sm:$0xf]
    %v2252 = vld [vmem:[%s687 + $0x24] sm:$0xf]
    %v2253 = vld [vmem:[%s687 + $0x28] sm:$0xf]
    %v2254 = vld [vmem:[%s687 + $0x2c] sm:$0xf]
    %v2255 = vld [vmem:[%s687 + $0x30] sm:$0xf]
    %v2256 = vld [vmem:[%s687 + $0x34] sm:$0xf]
    %v2257 = vld [vmem:[%s687 + $0x38] sm:$0xf]
    %v2258 = vld [vmem:[%s687 + $0x3c] sm:$0xf]
    %v2259 = vunpack.c.l.bf16 %v2243
    %v2260 = vunpack.c.l.bf16 %v2244
    %v2261 = vunpack.c.l.bf16 %v2245
    %v2262 = vunpack.c.l.bf16 %v2246
    %v2263 = vunpack.c.l.bf16 %v2247
    %v2264 = vunpack.c.l.bf16 %v2248
    %v2265 = vunpack.c.l.bf16 %v2249
    %v2266 = vunpack.c.l.bf16 %v2250
    %v2267 = vunpack.c.l.bf16 %v2251
    %v2268 = vunpack.c.l.bf16 %v2252
    %v2269 = vunpack.c.l.bf16 %v2253
    %v2270 = vunpack.c.l.bf16 %v2254
    %v2271 = vunpack.c.l.bf16 %v2255
    %v2272 = vunpack.c.l.bf16 %v2256
    %v2273 = vunpack.c.l.bf16 %v2257
    %v2274 = vunpack.c.l.bf16 %v2258
    %v2275 = vstv %s2242
    %v2276 = vmul.f32 %v2275, %v2259
    %v2277 = vmul.f32 %v2275, %v2260
    %v2278 = vmul.f32 %v2275, %v2261
    %v2279 = vmul.f32 %v2275, %v2262
    %v2280 = vmul.f32 %v2275, %v2263
    %v2281 = vmul.f32 %v2275, %v2264
    %v2282 = vmul.f32 %v2275, %v2265
    %v2283 = vmul.f32 %v2275, %v2266
    %v2284 = vmul.f32 %v2275, %v2267
    %v2285 = vmul.f32 %v2275, %v2268
    %v2286 = vmul.f32 %v2275, %v2269
    %v2287 = vmul.f32 %v2275, %v2270
    %v2288 = vmul.f32 %v2275, %v2271
    %v2289 = vmul.f32 %v2275, %v2272
    %v2290 = vmul.f32 %v2275, %v2273
    %v2291 = vmul.f32 %v2275, %v2274
    %v2292 = vadd.f32 %v2226, %v2276
    %v2293 = vadd.f32 %v2227, %v2277
    %v2294 = vadd.f32 %v2228, %v2278
    %v2295 = vadd.f32 %v2229, %v2279
    %v2296 = vadd.f32 %v2230, %v2280
    %v2297 = vadd.f32 %v2231, %v2281
    %v2298 = vadd.f32 %v2232, %v2282
    %v2299 = vadd.f32 %v2233, %v2283
    %v2300 = vadd.f32 %v2234, %v2284
    %v2301 = vadd.f32 %v2235, %v2285
    %v2302 = vadd.f32 %v2236, %v2286
    %v2303 = vadd.f32 %v2237, %v2287
    %v2304 = vadd.f32 %v2238, %v2288
    %v2305 = vadd.f32 %v2239, %v2289
    %v2306 = vadd.f32 %v2240, %v2290
    %v2307 = vadd.f32 %v2241, %v2291
    %s2308 = sld [smem:[#allocation6 + $0x180]]
    %v2309 = vld [vmem:[%s754] sm:$0xf]
    %v2310 = vld [vmem:[%s754 + $0x4] sm:$0xf]
    %v2311 = vld [vmem:[%s754 + $0x8] sm:$0xf]
    %v2312 = vld [vmem:[%s754 + $0xc] sm:$0xf]
    %v2313 = vld [vmem:[%s754 + $0x10] sm:$0xf]
    %v2314 = vld [vmem:[%s754 + $0x14] sm:$0xf]
    %v2315 = vld [vmem:[%s754 + $0x18] sm:$0xf]
    %v2316 = vld [vmem:[%s754 + $0x1c] sm:$0xf]
    %v2317 = vld [vmem:[%s754 + $0x20] sm:$0xf]
    %v2318 = vld [vmem:[%s754 + $0x24] sm:$0xf]
    %v2319 = vld [vmem:[%s754 + $0x28] sm:$0xf]
    %v2320 = vld [vmem:[%s754 + $0x2c] sm:$0xf]
    %v2321 = vld [vmem:[%s754 + $0x30] sm:$0xf]
    %v2322 = vld [vmem:[%s754 + $0x34] sm:$0xf]
    %v2323 = vld [vmem:[%s754 + $0x38] sm:$0xf]
    %v2324 = vld [vmem:[%s754 + $0x3c] sm:$0xf]
    %v2325 = vunpack.c.l.bf16 %v2309
    %v2326 = vunpack.c.l.bf16 %v2310
    %v2327 = vunpack.c.l.bf16 %v2311
    %v2328 = vunpack.c.l.bf16 %v2312
    %v2329 = vunpack.c.l.bf16 %v2313
    %v2330 = vunpack.c.l.bf16 %v2314
    %v2331 = vunpack.c.l.bf16 %v2315
    %v2332 = vunpack.c.l.bf16 %v2316
    %v2333 = vunpack.c.l.bf16 %v2317
    %v2334 = vunpack.c.l.bf16 %v2318
    %v2335 = vunpack.c.l.bf16 %v2319
    %v2336 = vunpack.c.l.bf16 %v2320
    %v2337 = vunpack.c.l.bf16 %v2321
    %v2338 = vunpack.c.l.bf16 %v2322
    %v2339 = vunpack.c.l.bf16 %v2323
    %v2340 = vunpack.c.l.bf16 %v2324
    %v2341 = vstv %s2308
    %v2342 = vmul.f32 %v2341, %v2325
    %v2343 = vmul.f32 %v2341, %v2326
    %v2344 = vmul.f32 %v2341, %v2327
    %v2345 = vmul.f32 %v2341, %v2328
    %v2346 = vmul.f32 %v2341, %v2329
    %v2347 = vmul.f32 %v2341, %v2330
    %v2348 = vmul.f32 %v2341, %v2331
    %v2349 = vmul.f32 %v2341, %v2332
    %v2350 = vmul.f32 %v2341, %v2333
    %v2351 = vmul.f32 %v2341, %v2334
    %v2352 = vmul.f32 %v2341, %v2335
    %v2353 = vmul.f32 %v2341, %v2336
    %v2354 = vmul.f32 %v2341, %v2337
    %v2355 = vmul.f32 %v2341, %v2338
    %v2356 = vmul.f32 %v2341, %v2339
    %v2357 = vmul.f32 %v2341, %v2340
    %v2358 = vadd.f32 %v2292, %v2342
    %v2359 = vadd.f32 %v2293, %v2343
    %v2360 = vadd.f32 %v2294, %v2344
    %v2361 = vadd.f32 %v2295, %v2345
    %v2362 = vadd.f32 %v2296, %v2346
    %v2363 = vadd.f32 %v2297, %v2347
    %v2364 = vadd.f32 %v2298, %v2348
    %v2365 = vadd.f32 %v2299, %v2349
    %v2366 = vadd.f32 %v2300, %v2350
    %v2367 = vadd.f32 %v2301, %v2351
    %v2368 = vadd.f32 %v2302, %v2352
    %v2369 = vadd.f32 %v2303, %v2353
    %v2370 = vadd.f32 %v2304, %v2354
    %v2371 = vadd.f32 %v2305, %v2355
    %v2372 = vadd.f32 %v2306, %v2356
    %v2373 = vadd.f32 %v2307, %v2357
    %v2374 = vpack.c.bf16 %v2359, %v2358
    %v2375 = vpack.c.bf16 %v2361, %v2360
    %v2376 = vpack.c.bf16 %v2363, %v2362
    %v2377 = vpack.c.bf16 %v2365, %v2364
    %v2378 = vpack.c.bf16 %v2367, %v2366
    %v2379 = vpack.c.bf16 %v2369, %v2368
    %v2380 = vpack.c.bf16 %v2371, %v2370
    %v2381 = vpack.c.bf16 %v2373, %v2372
    %v2390 = vunpack.c.l.b16 %v2374
    %v2391 = vunpack.c.h.b16 %v2374
    %v2392 = vunpack.c.l.b16 %v2375
    %v2393 = vunpack.c.h.b16 %v2375
    %v2394 = vunpack.c.l.b16 %v2376
    %v2395 = vunpack.c.h.b16 %v2376
    %v2396 = vunpack.c.l.b16 %v2377
    %v2397 = vunpack.c.h.b16 %v2377
    %v2398 = vunpack.c.l.b16 %v2378
    %v2399 = vunpack.c.h.b16 %v2378
    %v2400 = vunpack.c.l.b16 %v2379
    %v2401 = vunpack.c.h.b16 %v2379
    %v2402 = vunpack.c.l.b16 %v2380
    %v2403 = vunpack.c.h.b16 %v2380
    %v2404 = vunpack.c.l.b16 %v2381
    %v2405 = vunpack.c.h.b16 %v2381
    %v2406 = vpack.c.b16 %v2390, %v2390
    %v2407 = vpack.c.b16 %v2391, %v2391
    %v2408 = vpack.c.b16 %v2392, %v2392
    %v2409 = vpack.c.b16 %v2393, %v2393
    %v2410 = vpack.c.b16 %v2394, %v2394
    %v2411 = vpack.c.b16 %v2395, %v2395
    %v2412 = vpack.c.b16 %v2396, %v2396
    %v2413 = vpack.c.b16 %v2397, %v2397
    %v2414 = vpack.c.b16 %v2398, %v2398
    %v2415 = vpack.c.b16 %v2399, %v2399
    %v2416 = vpack.c.b16 %v2400, %v2400
    %v2417 = vpack.c.b16 %v2401, %v2401
    %v2418 = vpack.c.b16 %v2402, %v2402
    %v2419 = vpack.c.b16 %v2403, %v2403
    %v2420 = vpack.c.b16 %v2404, %v2404
    %v2421 = vpack.c.b16 %v2405, %v2405
    %2438 = vst [vmem:[#allocation2] sm:$0xf] %v2406
    %2439 = vst [vmem:[#allocation2 + $0x8] sm:$0xf] %v2407
    %2440 = vst [vmem:[#allocation2 + $0x10] sm:$0xf] %v2408
    %2441 = vst [vmem:[#allocation2 + $0x18] sm:$0xf] %v2409
    %2442 = vst [vmem:[#allocation2 + $0x20] sm:$0xf] %v2410
    %2443 = vst [vmem:[#allocation2 + $0x28] sm:$0xf] %v2411
    %2444 = vst [vmem:[#allocation2 + $0x30] sm:$0xf] %v2412
    %2445 = vst [vmem:[#allocation2 + $0x38] sm:$0xf] %v2413
    %2446 = vst [vmem:[#allocation2 + $0x40] sm:$0xf] %v2414
    %2447 = vst [vmem:[#allocation2 + $0x48] sm:$0xf] %v2415
    %2448 = vst [vmem:[#allocation2 + $0x50] sm:$0xf] %v2416
    %2449 = vst [vmem:[#allocation2 + $0x58] sm:$0xf] %v2417
    %2450 = vst [vmem:[#allocation2 + $0x60] sm:$0xf] %v2418
    %2451 = vst [vmem:[#allocation2 + $0x68] sm:$0xf] %v2419
    %2452 = vst [vmem:[#allocation2 + $0x70] sm:$0xf] %v2420
    %2453 = vst [vmem:[#allocation2 + $0x78] sm:$0xf] %v2421
    %v2454 = vpack.c.bf16 %v1877, %v1873
    %v2455 = vpack.c.bf16 %v1887, %v1883
    %v2456 = vpack.c.bf16 %v1897, %v1893
    %v2457 = vpack.c.bf16 %v1907, %v1903
    %v2458 = vpack.c.bf16 %v1917, %v1913
    %v2459 = vpack.c.bf16 %v1927, %v1923
    %v2460 = vpack.c.bf16 %v1937, %v1933
    %v2461 = vpack.c.bf16 %v1947, %v1943
    %v2470 = vunpack.c.l.b16 %v2454
    %v2471 = vunpack.c.h.b16 %v2454
    %v2472 = vunpack.c.l.b16 %v2455
    %v2473 = vunpack.c.h.b16 %v2455
    %v2474 = vunpack.c.l.b16 %v2456
    %v2475 = vunpack.c.h.b16 %v2456
    %v2476 = vunpack.c.l.b16 %v2457
    %v2477 = vunpack.c.h.b16 %v2457
    %v2478 = vunpack.c.l.b16 %v2458
    %v2479 = vunpack.c.h.b16 %v2458
    %v2480 = vunpack.c.l.b16 %v2459
    %v2481 = vunpack.c.h.b16 %v2459
    %v2482 = vunpack.c.l.b16 %v2460
    %v2483 = vunpack.c.h.b16 %v2460
    %v2484 = vunpack.c.l.b16 %v2461
    %v2485 = vunpack.c.h.b16 %v2461
    %v2486 = vpack.c.b16 %v2470, %v2470
    %v2487 = vpack.c.b16 %v2471, %v2471
    %v2488 = vpack.c.b16 %v2472, %v2472
    %v2489 = vpack.c.b16 %v2473, %v2473
    %v2490 = vpack.c.b16 %v2474, %v2474
    %v2491 = vpack.c.b16 %v2475, %v2475
    %v2492 = vpack.c.b16 %v2476, %v2476
    %v2493 = vpack.c.b16 %v2477, %v2477
    %v2494 = vpack.c.b16 %v2478, %v2478
    %v2495 = vpack.c.b16 %v2479, %v2479
    %v2496 = vpack.c.b16 %v2480, %v2480
    %v2497 = vpack.c.b16 %v2481, %v2481
    %v2498 = vpack.c.b16 %v2482, %v2482
    %v2499 = vpack.c.b16 %v2483, %v2483
    %v2500 = vpack.c.b16 %v2484, %v2484
    %v2501 = vpack.c.b16 %v2485, %v2485
    %2518 = vst [vmem:[#allocation3 + $0x40] sm:$0xf] %v2486
    %2519 = vst [vmem:[#allocation3 + $0x44] sm:$0xf] %v2487
    %2520 = vst [vmem:[#allocation3 + $0x48] sm:$0xf] %v2488
    %2521 = vst [vmem:[#allocation3 + $0x4c] sm:$0xf] %v2489
    %2522 = vst [vmem:[#allocation3 + $0x50] sm:$0xf] %v2490
    %2523 = vst [vmem:[#allocation3 + $0x54] sm:$0xf] %v2491
    %2524 = vst [vmem:[#allocation3 + $0x58] sm:$0xf] %v2492
    %2525 = vst [vmem:[#allocation3 + $0x5c] sm:$0xf] %v2493
    %2526 = vst [vmem:[#allocation3 + $0x60] sm:$0xf] %v2494
    %2527 = vst [vmem:[#allocation3 + $0x64] sm:$0xf] %v2495
    %2528 = vst [vmem:[#allocation3 + $0x68] sm:$0xf] %v2496
    %2529 = vst [vmem:[#allocation3 + $0x6c] sm:$0xf] %v2497
    %2530 = vst [vmem:[#allocation3 + $0x70] sm:$0xf] %v2498
    %2531 = vst [vmem:[#allocation3 + $0x74] sm:$0xf] %v2499
    %2532 = vst [vmem:[#allocation3 + $0x78] sm:$0xf] %v2500
    %2533 = vst [vmem:[#allocation3 + $0x7c] sm:$0xf] %v2501
    %s2534 = sld [smem:[#allocation6 + $0x1]]
    %v2535 = vld [vmem:[%s0] sm:$0xf]
    %v2536 = vld [vmem:[%s0 + $0x4] sm:$0xf]
    %v2537 = vld [vmem:[%s0 + $0x8] sm:$0xf]
    %v2538 = vld [vmem:[%s0 + $0xc] sm:$0xf]
    %v2539 = vld [vmem:[%s0 + $0x10] sm:$0xf]
    %v2540 = vld [vmem:[%s0 + $0x14] sm:$0xf]
    %v2541 = vld [vmem:[%s0 + $0x18] sm:$0xf]
    %v2542 = vld [vmem:[%s0 + $0x1c] sm:$0xf]
    %v2543 = vld [vmem:[%s0 + $0x20] sm:$0xf]
    %v2544 = vld [vmem:[%s0 + $0x24] sm:$0xf]
    %v2545 = vld [vmem:[%s0 + $0x28] sm:$0xf]
    %v2546 = vld [vmem:[%s0 + $0x2c] sm:$0xf]
    %v2547 = vld [vmem:[%s0 + $0x30] sm:$0xf]
    %v2548 = vld [vmem:[%s0 + $0x34] sm:$0xf]
    %v2549 = vld [vmem:[%s0 + $0x38] sm:$0xf]
    %v2550 = vld [vmem:[%s0 + $0x3c] sm:$0xf]
    %v2551 = vunpack.c.l.bf16 %v2535
    %v2552 = vunpack.c.l.bf16 %v2536
    %v2553 = vunpack.c.l.bf16 %v2537
    %v2554 = vunpack.c.l.bf16 %v2538
    %v2555 = vunpack.c.l.bf16 %v2539
    %v2556 = vunpack.c.l.bf16 %v2540
    %v2557 = vunpack.c.l.bf16 %v2541
    %v2558 = vunpack.c.l.bf16 %v2542
    %v2559 = vunpack.c.l.bf16 %v2543
    %v2560 = vunpack.c.l.bf16 %v2544
    %v2561 = vunpack.c.l.bf16 %v2545
    %v2562 = vunpack.c.l.bf16 %v2546
    %v2563 = vunpack.c.l.bf16 %v2547
    %v2564 = vunpack.c.l.bf16 %v2548
    %v2565 = vunpack.c.l.bf16 %v2549
    %v2566 = vunpack.c.l.bf16 %v2550
    %v2567 = vstv %s2534
    %v2568 = vmul.f32 %v2567, %v2551
    %v2569 = vmul.f32 %v2567, %v2552
    %v2570 = vmul.f32 %v2567, %v2553
    %v2571 = vmul.f32 %v2567, %v2554
    %v2572 = vmul.f32 %v2567, %v2555
    %v2573 = vmul.f32 %v2567, %v2556
    %v2574 = vmul.f32 %v2567, %v2557
    %v2575 = vmul.f32 %v2567, %v2558
    %v2576 = vmul.f32 %v2567, %v2559
    %v2577 = vmul.f32 %v2567, %v2560
    %v2578 = vmul.f32 %v2567, %v2561
    %v2579 = vmul.f32 %v2567, %v2562
    %v2580 = vmul.f32 %v2567, %v2563
    %v2581 = vmul.f32 %v2567, %v2564
    %v2582 = vmul.f32 %v2567, %v2565
    %v2583 = vmul.f32 %v2567, %v2566
    %s2584 = sld [smem:[#allocation6 + $0x81]]
    %v2585 = vld [vmem:[%s620] sm:$0xf]
    %v2586 = vld [vmem:[%s620 + $0x4] sm:$0xf]
    %v2587 = vld [vmem:[%s620 + $0x8] sm:$0xf]
    %v2588 = vld [vmem:[%s620 + $0xc] sm:$0xf]
    %v2589 = vld [vmem:[%s620 + $0x10] sm:$0xf]
    %v2590 = vld [vmem:[%s620 + $0x14] sm:$0xf]
    %v2591 = vld [vmem:[%s620 + $0x18] sm:$0xf]
    %v2592 = vld [vmem:[%s620 + $0x1c] sm:$0xf]
    %v2593 = vld [vmem:[%s620 + $0x20] sm:$0xf]
    %v2594 = vld [vmem:[%s620 + $0x24] sm:$0xf]
    %v2595 = vld [vmem:[%s620 + $0x28] sm:$0xf]
    %v2596 = vld [vmem:[%s620 + $0x2c] sm:$0xf]
    %v2597 = vld [vmem:[%s620 + $0x30] sm:$0xf]
    %v2598 = vld [vmem:[%s620 + $0x34] sm:$0xf]
    %v2599 = vld [vmem:[%s620 + $0x38] sm:$0xf]
    %v2600 = vld [vmem:[%s620 + $0x3c] sm:$0xf]
    %v2601 = vunpack.c.l.bf16 %v2585
    %v2602 = vunpack.c.l.bf16 %v2586
    %v2603 = vunpack.c.l.bf16 %v2587
    %v2604 = vunpack.c.l.bf16 %v2588
    %v2605 = vunpack.c.l.bf16 %v2589
    %v2606 = vunpack.c.l.bf16 %v2590
    %v2607 = vunpack.c.l.bf16 %v2591
    %v2608 = vunpack.c.l.bf16 %v2592
    %v2609 = vunpack.c.l.bf16 %v2593
    %v2610 = vunpack.c.l.bf16 %v2594
    %v2611 = vunpack.c.l.bf16 %v2595
    %v2612 = vunpack.c.l.bf16 %v2596
    %v2613 = vunpack.c.l.bf16 %v2597
    %v2614 = vunpack.c.l.bf16 %v2598
    %v2615 = vunpack.c.l.bf16 %v2599
    %v2616 = vunpack.c.l.bf16 %v2600
    %v2617 = vstv %s2584
    %v2618 = vmul.f32 %v2617, %v2601
    %v2619 = vmul.f32 %v2617, %v2602
    %v2620 = vmul.f32 %v2617, %v2603
    %v2621 = vmul.f32 %v2617, %v2604
    %v2622 = vmul.f32 %v2617, %v2605
    %v2623 = vmul.f32 %v2617, %v2606
    %v2624 = vmul.f32 %v2617, %v2607
    %v2625 = vmul.f32 %v2617, %v2608
    %v2626 = vmul.f32 %v2617, %v2609
    %v2627 = vmul.f32 %v2617, %v2610
    %v2628 = vmul.f32 %v2617, %v2611
    %v2629 = vmul.f32 %v2617, %v2612
    %v2630 = vmul.f32 %v2617, %v2613
    %v2631 = vmul.f32 %v2617, %v2614
    %v2632 = vmul.f32 %v2617, %v2615
    %v2633 = vmul.f32 %v2617, %v2616
    %v2634 = vadd.f32 %v2568, %v2618
    %v2635 = vadd.f32 %v2569, %v2619
    %v2636 = vadd.f32 %v2570, %v2620
    %v2637 = vadd.f32 %v2571, %v2621
    %v2638 = vadd.f32 %v2572, %v2622
    %v2639 = vadd.f32 %v2573, %v2623
    %v2640 = vadd.f32 %v2574, %v2624
    %v2641 = vadd.f32 %v2575, %v2625
    %v2642 = vadd.f32 %v2576, %v2626
    %v2643 = vadd.f32 %v2577, %v2627
    %v2644 = vadd.f32 %v2578, %v2628
    %v2645 = vadd.f32 %v2579, %v2629
    %v2646 = vadd.f32 %v2580, %v2630
    %v2647 = vadd.f32 %v2581, %v2631
    %v2648 = vadd.f32 %v2582, %v2632
    %v2649 = vadd.f32 %v2583, %v2633
    %s2650 = sld [smem:[#allocation6 + $0x101]]
    %v2651 = vld [vmem:[%s687] sm:$0xf]
    %v2652 = vld [vmem:[%s687 + $0x4] sm:$0xf]
    %v2653 = vld [vmem:[%s687 + $0x8] sm:$0xf]
    %v2654 = vld [vmem:[%s687 + $0xc] sm:$0xf]
    %v2655 = vld [vmem:[%s687 + $0x10] sm:$0xf]
    %v2656 = vld [vmem:[%s687 + $0x14] sm:$0xf]
    %v2657 = vld [vmem:[%s687 + $0x18] sm:$0xf]
    %v2658 = vld [vmem:[%s687 + $0x1c] sm:$0xf]
    %v2659 = vld [vmem:[%s687 + $0x20] sm:$0xf]
    %v2660 = vld [vmem:[%s687 + $0x24] sm:$0xf]
    %v2661 = vld [vmem:[%s687 + $0x28] sm:$0xf]
    %v2662 = vld [vmem:[%s687 + $0x2c] sm:$0xf]
    %v2663 = vld [vmem:[%s687 + $0x30] sm:$0xf]
    %v2664 = vld [vmem:[%s687 + $0x34] sm:$0xf]
    %v2665 = vld [vmem:[%s687 + $0x38] sm:$0xf]
    %v2666 = vld [vmem:[%s687 + $0x3c] sm:$0xf]
    %v2667 = vunpack.c.l.bf16 %v2651
    %v2668 = vunpack.c.l.bf16 %v2652
    %v2669 = vunpack.c.l.bf16 %v2653
    %v2670 = vunpack.c.l.bf16 %v2654
    %v2671 = vunpack.c.l.bf16 %v2655
    %v2672 = vunpack.c.l.bf16 %v2656
    %v2673 = vunpack.c.l.bf16 %v2657
    %v2674 = vunpack.c.l.bf16 %v2658
    %v2675 = vunpack.c.l.bf16 %v2659
    %v2676 = vunpack.c.l.bf16 %v2660
    %v2677 = vunpack.c.l.bf16 %v2661
    %v2678 = vunpack.c.l.bf16 %v2662
    %v2679 = vunpack.c.l.bf16 %v2663
    %v2680 = vunpack.c.l.bf16 %v2664
    %v2681 = vunpack.c.l.bf16 %v2665
    %v2682 = vunpack.c.l.bf16 %v2666
    %v2683 = vstv %s2650
    %v2684 = vmul.f32 %v2683, %v2667
    %v2685 = vmul.f32 %v2683, %v2668
    %v2686 = vmul.f32 %v2683, %v2669
    %v2687 = vmul.f32 %v2683, %v2670
    %v2688 = vmul.f32 %v2683, %v2671
    %v2689 = vmul.f32 %v2683, %v2672
    %v2690 = vmul.f32 %v2683, %v2673
    %v2691 = vmul.f32 %v2683, %v2674
    %v2692 = vmul.f32 %v2683, %v2675
    %v2693 = vmul.f32 %v2683, %v2676
    %v2694 = vmul.f32 %v2683, %v2677
    %v2695 = vmul.f32 %v2683, %v2678
    %v2696 = vmul.f32 %v2683, %v2679
    %v2697 = vmul.f32 %v2683, %v2680
    %v2698 = vmul.f32 %v2683, %v2681
    %v2699 = vmul.f32 %v2683, %v2682
    %v2700 = vadd.f32 %v2634, %v2684
    %v2701 = vadd.f32 %v2635, %v2685
    %v2702 = vadd.f32 %v2636, %v2686
    %v2703 = vadd.f32 %v2637, %v2687
    %v2704 = vadd.f32 %v2638, %v2688
    %v2705 = vadd.f32 %v2639, %v2689
    %v2706 = vadd.f32 %v2640, %v2690
    %v2707 = vadd.f32 %v2641, %v2691
    %v2708 = vadd.f32 %v2642, %v2692
    %v2709 = vadd.f32 %v2643, %v2693
    %v2710 = vadd.f32 %v2644, %v2694
    %v2711 = vadd.f32 %v2645, %v2695
    %v2712 = vadd.f32 %v2646, %v2696
    %v2713 = vadd.f32 %v2647, %v2697
    %v2714 = vadd.f32 %v2648, %v2698
    %v2715 = vadd.f32 %v2649, %v2699
    %s2716 = sld [smem:[#allocation6 + $0x181]]
    %v2717 = vld [vmem:[%s754] sm:$0xf]
    %v2718 = vld [vmem:[%s754 + $0x4] sm:$0xf]
    %v2719 = vld [vmem:[%s754 + $0x8] sm:$0xf]
    %v2720 = vld [vmem:[%s754 + $0xc] sm:$0xf]
    %v2721 = vld [vmem:[%s754 + $0x10] sm:$0xf]
    %v2722 = vld [vmem:[%s754 + $0x14] sm:$0xf]
    %v2723 = vld [vmem:[%s754 + $0x18] sm:$0xf]
    %v2724 = vld [vmem:[%s754 + $0x1c] sm:$0xf]
    %v2725 = vld [vmem:[%s754 + $0x20] sm:$0xf]
    %v2726 = vld [vmem:[%s754 + $0x24] sm:$0xf]
    %v2727 = vld [vmem:[%s754 + $0x28] sm:$0xf]
    %v2728 = vld [vmem:[%s754 + $0x2c] sm:$0xf]
    %v2729 = vld [vmem:[%s754 + $0x30] sm:$0xf]
    %v2730 = vld [vmem:[%s754 + $0x34] sm:$0xf]
    %v2731 = vld [vmem:[%s754 + $0x38] sm:$0xf]
    %v2732 = vld [vmem:[%s754 + $0x3c] sm:$0xf]
    %v2733 = vunpack.c.l.bf16 %v2717
    %v2734 = vunpack.c.l.bf16 %v2718
    %v2735 = vunpack.c.l.bf16 %v2719
    %v2736 = vunpack.c.l.bf16 %v2720
    %v2737 = vunpack.c.l.bf16 %v2721
    %v2738 = vunpack.c.l.bf16 %v2722
    %v2739 = vunpack.c.l.bf16 %v2723
    %v2740 = vunpack.c.l.bf16 %v2724
    %v2741 = vunpack.c.l.bf16 %v2725
    %v2742 = vunpack.c.l.bf16 %v2726
    %v2743 = vunpack.c.l.bf16 %v2727
    %v2744 = vunpack.c.l.bf16 %v2728
    %v2745 = vunpack.c.l.bf16 %v2729
    %v2746 = vunpack.c.l.bf16 %v2730
    %v2747 = vunpack.c.l.bf16 %v2731
    %v2748 = vunpack.c.l.bf16 %v2732
    %v2749 = vstv %s2716
    %v2750 = vmul.f32 %v2749, %v2733
    %v2751 = vmul.f32 %v2749, %v2734
    %v2752 = vmul.f32 %v2749, %v2735
    %v2753 = vmul.f32 %v2749, %v2736
    %v2754 = vmul.f32 %v2749, %v2737
    %v2755 = vmul.f32 %v2749, %v2738
    %v2756 = vmul.f32 %v2749, %v2739
    %v2757 = vmul.f32 %v2749, %v2740
    %v2758 = vmul.f32 %v2749, %v2741
    %v2759 = vmul.f32 %v2749, %v2742
    %v2760 = vmul.f32 %v2749, %v2743
    %v2761 = vmul.f32 %v2749, %v2744
    %v2762 = vmul.f32 %v2749, %v2745
    %v2763 = vmul.f32 %v2749, %v2746
    %v2764 = vmul.f32 %v2749, %v2747
    %v2765 = vmul.f32 %v2749, %v2748
    %v2766 = vadd.f32 %v2700, %v2750
    %v2767 = vadd.f32 %v2701, %v2751
    %v2768 = vadd.f32 %v2702, %v2752
    %v2769 = vadd.f32 %v2703, %v2753
    %v2770 = vadd.f32 %v2704, %v2754
    %v2771 = vadd.f32 %v2705, %v2755
    %v2772 = vadd.f32 %v2706, %v2756
    %v2773 = vadd.f32 %v2707, %v2757
    %v2774 = vadd.f32 %v2708, %v2758
    %v2775 = vadd.f32 %v2709, %v2759
    %v2776 = vadd.f32 %v2710, %v2760
    %v2777 = vadd.f32 %v2711, %v2761
    %v2778 = vadd.f32 %v2712, %v2762
    %v2779 = vadd.f32 %v2713, %v2763
    %v2780 = vadd.f32 %v2714, %v2764
    %v2781 = vadd.f32 %v2715, %v2765
    %v2782 = vpack.c.bf16 %v2767, %v2766
    %v2783 = vpack.c.bf16 %v2769, %v2768
    %v2784 = vpack.c.bf16 %v2771, %v2770
    %v2785 = vpack.c.bf16 %v2773, %v2772
    %v2786 = vpack.c.bf16 %v2775, %v2774
    %v2787 = vpack.c.bf16 %v2777, %v2776
    %v2788 = vpack.c.bf16 %v2779, %v2778
    %v2789 = vpack.c.bf16 %v2781, %v2780
    %v2798 = vunpack.c.l.b16 %v2782
    %v2799 = vunpack.c.h.b16 %v2782
    %v2800 = vunpack.c.l.b16 %v2783
    %v2801 = vunpack.c.h.b16 %v2783
    %v2802 = vunpack.c.l.b16 %v2784
    %v2803 = vunpack.c.h.b16 %v2784
    %v2804 = vunpack.c.l.b16 %v2785
    %v2805 = vunpack.c.h.b16 %v2785
    %v2806 = vunpack.c.l.b16 %v2786
    %v2807 = vunpack.c.h.b16 %v2786
    %v2808 = vunpack.c.l.b16 %v2787
    %v2809 = vunpack.c.h.b16 %v2787
    %v2810 = vunpack.c.l.b16 %v2788
    %v2811 = vunpack.c.h.b16 %v2788
    %v2812 = vunpack.c.l.b16 %v2789
    %v2813 = vunpack.c.h.b16 %v2789
    %v2814 = vpack.c.b16 %v2798, %v2798
    %v2815 = vpack.c.b16 %v2799, %v2799
    %v2816 = vpack.c.b16 %v2800, %v2800
    %v2817 = vpack.c.b16 %v2801, %v2801
    %v2818 = vpack.c.b16 %v2802, %v2802
    %v2819 = vpack.c.b16 %v2803, %v2803
    %v2820 = vpack.c.b16 %v2804, %v2804
    %v2821 = vpack.c.b16 %v2805, %v2805
    %v2822 = vpack.c.b16 %v2806, %v2806
    %v2823 = vpack.c.b16 %v2807, %v2807
    %v2824 = vpack.c.b16 %v2808, %v2808
    %v2825 = vpack.c.b16 %v2809, %v2809
    %v2826 = vpack.c.b16 %v2810, %v2810
    %v2827 = vpack.c.b16 %v2811, %v2811
    %v2828 = vpack.c.b16 %v2812, %v2812
    %v2829 = vpack.c.b16 %v2813, %v2813
    %2846 = vst [vmem:[#allocation2 + $0x4] sm:$0xf] %v2814
    %2847 = vst [vmem:[#allocation2 + $0xc] sm:$0xf] %v2815
    %2848 = vst [vmem:[#allocation2 + $0x14] sm:$0xf] %v2816
    %2849 = vst [vmem:[#allocation2 + $0x1c] sm:$0xf] %v2817
    %2850 = vst [vmem:[#allocation2 + $0x24] sm:$0xf] %v2818
    %2851 = vst [vmem:[#allocation2 + $0x2c] sm:$0xf] %v2819
    %2852 = vst [vmem:[#allocation2 + $0x34] sm:$0xf] %v2820
    %2853 = vst [vmem:[#allocation2 + $0x3c] sm:$0xf] %v2821
    %2854 = vst [vmem:[#allocation2 + $0x44] sm:$0xf] %v2822
    %2855 = vst [vmem:[#allocation2 + $0x4c] sm:$0xf] %v2823
    %2856 = vst [vmem:[#allocation2 + $0x54] sm:$0xf] %v2824
    %2857 = vst [vmem:[#allocation2 + $0x5c] sm:$0xf] %v2825
    %2858 = vst [vmem:[#allocation2 + $0x64] sm:$0xf] %v2826
    %2859 = vst [vmem:[#allocation2 + $0x6c] sm:$0xf] %v2827
    %2860 = vst [vmem:[#allocation2 + $0x74] sm:$0xf] %v2828
    %2861 = vst [vmem:[#allocation2 + $0x7c] sm:$0xf] %v2829
    %v2862 = vld [vmem:[#allocation2] sm:$0xff]
    %v2863 = vld [vmem:[#allocation2 + $0x8] sm:$0xff]
    %v2864 = vld [vmem:[#allocation2 + $0x10] sm:$0xff]
    %v2865 = vld [vmem:[#allocation2 + $0x18] sm:$0xff]
    %v2866 = vld [vmem:[#allocation2 + $0x20] sm:$0xff]
    %v2867 = vld [vmem:[#allocation2 + $0x28] sm:$0xff]
    %v2868 = vld [vmem:[#allocation2 + $0x30] sm:$0xff]
    %v2869 = vld [vmem:[#allocation2 + $0x38] sm:$0xff]
    %v2870 = vld [vmem:[#allocation2 + $0x40] sm:$0xff]
    %v2871 = vld [vmem:[#allocation2 + $0x48] sm:$0xff]
    %v2872 = vld [vmem:[#allocation2 + $0x50] sm:$0xff]
    %v2873 = vld [vmem:[#allocation2 + $0x58] sm:$0xff]
    %v2874 = vld [vmem:[#allocation2 + $0x60] sm:$0xff]
    %v2875 = vld [vmem:[#allocation2 + $0x68] sm:$0xff]
    %v2876 = vld [vmem:[#allocation2 + $0x70] sm:$0xff]
    %v2877 = vld [vmem:[#allocation2 + $0x78] sm:$0xff]
    %v2878 = vld [vmem:[#allocation3] sm:$0xf]
    %v2879 = vld [vmem:[#allocation3 + $0x4] sm:$0xf]
    %v2880 = vld [vmem:[#allocation3 + $0x8] sm:$0xf]
    %v2881 = vld [vmem:[#allocation3 + $0xc] sm:$0xf]
    %v2882 = vld [vmem:[#allocation3 + $0x10] sm:$0xf]
    %v2883 = vld [vmem:[#allocation3 + $0x14] sm:$0xf]
    %v2884 = vld [vmem:[#allocation3 + $0x18] sm:$0xf]
    %v2885 = vld [vmem:[#allocation3 + $0x1c] sm:$0xf]
    %v2886 = vld [vmem:[#allocation3 + $0x20] sm:$0xf]
    %v2887 = vld [vmem:[#allocation3 + $0x24] sm:$0xf]
    %v2888 = vld [vmem:[#allocation3 + $0x28] sm:$0xf]
    %v2889 = vld [vmem:[#allocation3 + $0x2c] sm:$0xf]
    %v2890 = vld [vmem:[#allocation3 + $0x30] sm:$0xf]
    %v2891 = vld [vmem:[#allocation3 + $0x34] sm:$0xf]
    %v2892 = vld [vmem:[#allocation3 + $0x38] sm:$0xf]
    %v2893 = vld [vmem:[#allocation3 + $0x3c] sm:$0xf]
    %v2894 = vld [vmem:[#allocation3 + $0x40] sm:$0xf]
    %v2895 = vld [vmem:[#allocation3 + $0x44] sm:$0xf]
    %v2896 = vld [vmem:[#allocation3 + $0x48] sm:$0xf]
    %v2897 = vld [vmem:[#allocation3 + $0x4c] sm:$0xf]
    %v2898 = vld [vmem:[#allocation3 + $0x50] sm:$0xf]
    %v2899 = vld [vmem:[#allocation3 + $0x54] sm:$0xf]
    %v2900 = vld [vmem:[#allocation3 + $0x58] sm:$0xf]
    %v2901 = vld [vmem:[#allocation3 + $0x5c] sm:$0xf]
    %v2902 = vld [vmem:[#allocation3 + $0x60] sm:$0xf]
    %v2903 = vld [vmem:[#allocation3 + $0x64] sm:$0xf]
    %v2904 = vld [vmem:[#allocation3 + $0x68] sm:$0xf]
    %v2905 = vld [vmem:[#allocation3 + $0x6c] sm:$0xf]
    %v2906 = vld [vmem:[#allocation3 + $0x70] sm:$0xf]
    %v2907 = vld [vmem:[#allocation3 + $0x74] sm:$0xf]
    %v2908 = vld [vmem:[#allocation3 + $0x78] sm:$0xf]
    %v2909 = vld [vmem:[#allocation3 + $0x7c] sm:$0xf]
    %v2926 = vunpack.c.l.b16 %v2862
    %v2927 = vunpack.c.h.b16 %v2862
    %v2928 = vunpack.c.l.b16 %v2863
    %v2929 = vunpack.c.h.b16 %v2863
    %v2930 = vunpack.c.l.b16 %v2864
    %v2931 = vunpack.c.h.b16 %v2864
    %v2932 = vunpack.c.l.b16 %v2865
    %v2933 = vunpack.c.h.b16 %v2865
    %v2934 = vunpack.c.l.b16 %v2866
    %v2935 = vunpack.c.h.b16 %v2866
    %v2936 = vunpack.c.l.b16 %v2867
    %v2937 = vunpack.c.h.b16 %v2867
    %v2938 = vunpack.c.l.b16 %v2868
    %v2939 = vunpack.c.h.b16 %v2868
    %v2940 = vunpack.c.l.b16 %v2869
    %v2941 = vunpack.c.h.b16 %v2869
    %v2942 = vunpack.c.l.b16 %v2870
    %v2943 = vunpack.c.h.b16 %v2870
    %v2944 = vunpack.c.l.b16 %v2871
    %v2945 = vunpack.c.h.b16 %v2871
    %v2946 = vunpack.c.l.b16 %v2872
    %v2947 = vunpack.c.h.b16 %v2872
    %v2948 = vunpack.c.l.b16 %v2873
    %v2949 = vunpack.c.h.b16 %v2873
    %v2950 = vunpack.c.l.b16 %v2874
    %v2951 = vunpack.c.h.b16 %v2874
    %v2952 = vunpack.c.l.b16 %v2875
    %v2953 = vunpack.c.h.b16 %v2875
    %v2954 = vunpack.c.l.b16 %v2876
    %v2955 = vunpack.c.h.b16 %v2876
    %v2956 = vunpack.c.l.b16 %v2877
    %v2957 = vunpack.c.h.b16 %v2877
    %v2958 = vpack.c.b16 %v2928, %v2926
    %v2959 = vpack.c.b16 %v2929, %v2927
    %v2960 = vpack.c.b16 %v2932, %v2930
    %v2961 = vpack.c.b16 %v2933, %v2931
    %v2962 = vpack.c.b16 %v2936, %v2934
    %v2963 = vpack.c.b16 %v2937, %v2935
    %v2964 = vpack.c.b16 %v2940, %v2938
    %v2965 = vpack.c.b16 %v2941, %v2939
    %v2966 = vpack.c.b16 %v2944, %v2942
    %v2967 = vpack.c.b16 %v2945, %v2943
    %v2968 = vpack.c.b16 %v2948, %v2946
    %v2969 = vpack.c.b16 %v2949, %v2947
    %v2970 = vpack.c.b16 %v2952, %v2950
    %v2971 = vpack.c.b16 %v2953, %v2951
    %v2972 = vpack.c.b16 %v2956, %v2954
    %v2973 = vpack.c.b16 %v2957, %v2955
    %v3022 = vunpack.c.l.b16 %v2878
    %v3023 = vunpack.c.l.b16 %v2879
    %v3024 = vunpack.c.l.b16 %v2880
    %v3025 = vunpack.c.l.b16 %v2881
    %v3026 = vunpack.c.l.b16 %v2882
    %v3027 = vunpack.c.l.b16 %v2883
    %v3028 = vunpack.c.l.b16 %v2884
    %v3029 = vunpack.c.l.b16 %v2885
    %v3030 = vunpack.c.l.b16 %v2886
    %v3031 = vunpack.c.l.b16 %v2887
    %v3032 = vunpack.c.l.b16 %v2888
    %v3033 = vunpack.c.l.b16 %v2889
    %v3034 = vunpack.c.l.b16 %v2890
    %v3035 = vunpack.c.l.b16 %v2891
    %v3036 = vunpack.c.l.b16 %v2892
    %v3037 = vunpack.c.l.b16 %v2893
    %v3038 = vunpack.c.l.b16 %v2894
    %v3039 = vunpack.c.l.b16 %v2895
    %v3040 = vunpack.c.l.b16 %v2896
    %v3041 = vunpack.c.l.b16 %v2897
    %v3042 = vunpack.c.l.b16 %v2898
    %v3043 = vunpack.c.l.b16 %v2899
    %v3044 = vunpack.c.l.b16 %v2900
    %v3045 = vunpack.c.l.b16 %v2901
    %v3046 = vunpack.c.l.b16 %v2902
    %v3047 = vunpack.c.l.b16 %v2903
    %v3048 = vunpack.c.l.b16 %v2904
    %v3049 = vunpack.c.l.b16 %v2905
    %v3050 = vunpack.c.l.b16 %v2906
    %v3051 = vunpack.c.l.b16 %v2907
    %v3052 = vunpack.c.l.b16 %v2908
    %v3053 = vunpack.c.l.b16 %v2909
    %v3054 = vpack.c.b16 %v3023, %v3022
    %v3055 = vpack.c.b16 %v3025, %v3024
    %v3056 = vpack.c.b16 %v3027, %v3026
    %v3057 = vpack.c.b16 %v3029, %v3028
    %v3058 = vpack.c.b16 %v3031, %v3030
    %v3059 = vpack.c.b16 %v3033, %v3032
    %v3060 = vpack.c.b16 %v3035, %v3034
    %v3061 = vpack.c.b16 %v3037, %v3036
    %v3062 = vpack.c.b16 %v3039, %v3038
    %v3063 = vpack.c.b16 %v3041, %v3040
    %v3064 = vpack.c.b16 %v3043, %v3042
    %v3065 = vpack.c.b16 %v3045, %v3044
    %v3066 = vpack.c.b16 %v3047, %v3046
    %v3067 = vpack.c.b16 %v3049, %v3048
    %v3068 = vpack.c.b16 %v3051, %v3050
    %v3069 = vpack.c.b16 %v3053, %v3052
    %3086 = vmatprep.subr.bf16.mxu0 0
    %3087 = vmatpush1.bf16.msra.mxu0 %v3061
    %3088 = vmatprep.subr.bf16.mxu0 0
    %3089 = vmatpush1.bf16.msra.mxu0 %v3060
    %3090 = vmatprep.subr.bf16.mxu0 0
    %3091 = vmatpush1.bf16.msra.mxu0 %v3059
    %3092 = vmatprep.subr.bf16.mxu0 0
    %3093 = vmatpush1.bf16.msra.mxu0 %v3058
    %3094 = vmatprep.subr.bf16.mxu0 0
    %3095 = vmatpush1.bf16.msra.mxu0 %v3057
    %3096 = vmatprep.subr.bf16.mxu0 0
    %3097 = vmatpush1.bf16.msra.mxu0 %v3056
    %3098 = vmatprep.subr.bf16.mxu0 0
    %3099 = vmatpush1.bf16.msra.mxu0 %v3055
    %3100 = vmatprep.subr.bf16.mxu0 0
    %3101 = vmatpush1.bf16.msra.mxu0 %v3054
    %3102 = vmatprep.subr.bf16.mxu0 0
    %3103 = vmatpush2.bf16.msra.mxu0 %v3069
    %3104 = vmatprep.subr.bf16.mxu0 0
    %3105 = vmatpush2.bf16.msra.mxu0 %v3068
    %3106 = vmatprep.subr.bf16.mxu0 0
    %3107 = vmatpush2.bf16.msra.mxu0 %v3067
    %3108 = vmatprep.subr.bf16.mxu0 0
    %3109 = vmatpush2.bf16.msra.mxu0 %v3066
    %3110 = vmatprep.subr.bf16.mxu0 0
    %3111 = vmatpush2.bf16.msra.mxu0 %v3065
    %3112 = vmatprep.subr.bf16.mxu0 0
    %3113 = vmatpush2.bf16.msra.mxu0 %v3064
    %3114 = vmatprep.subr.bf16.mxu0 0
    %3115 = vmatpush2.bf16.msra.mxu0 %v3063
    %3116 = vmatprep.subr.bf16.mxu0 0
    %3117 = vmatpush2.bf16.msra.mxu0 %v3062
    %3118 = vmatprep.mubr.bf16.mxu0 %v2959
    %3119 = vmatmul.mubr.bf16.gmra.mxu0 %v2958
    %v3120 = vpop.f32.mrf.mxu0
    %v3121 = vadd.f32 %v1984, %v3120
    %v3122 = vpop.f32.mrf.mxu0
    %v3123 = vpop.f32.mrf.mxu0
    %v3124 = vadd.f32 %v1987, %v3123
    %v3125 = vpop.f32.mrf.mxu0
    %3126 = vmatprep.mubr.bf16.mxu0 %v2961
    %3127 = vmatmul.mubr.bf16.gmra.mxu0 %v2960
    %v3128 = vpop.f32.mrf.mxu0
    %v3129 = vadd.f32 %v1992, %v3128
    %v3130 = vpop.f32.mrf.mxu0
    %v3131 = vpop.f32.mrf.mxu0
    %v3132 = vadd.f32 %v1995, %v3131
    %v3133 = vpop.f32.mrf.mxu0
    %3134 = vmatprep.mubr.bf16.mxu0 %v2963
    %3135 = vmatmul.mubr.bf16.gmra.mxu0 %v2962
    %v3136 = vpop.f32.mrf.mxu0
    %v3137 = vadd.f32 %v2000, %v3136
    %v3138 = vpop.f32.mrf.mxu0
    %v3139 = vpop.f32.mrf.mxu0
    %v3140 = vadd.f32 %v2003, %v3139
    %v3141 = vpop.f32.mrf.mxu0
    %3142 = vmatprep.mubr.bf16.mxu0 %v2965
    %3143 = vmatmul.mubr.bf16.gmra.mxu0 %v2964
    %v3144 = vpop.f32.mrf.mxu0
    %v3145 = vadd.f32 %v2008, %v3144
    %v3146 = vpop.f32.mrf.mxu0
    %v3147 = vpop.f32.mrf.mxu0
    %v3148 = vadd.f32 %v2011, %v3147
    %v3149 = vpop.f32.mrf.mxu0
    %3150 = vmatprep.mubr.bf16.mxu0 %v2967
    %3151 = vmatmul.mubr.bf16.gmra.mxu0 %v2966
    %v3152 = vpop.f32.mrf.mxu0
    %v3153 = vadd.f32 %v2016, %v3152
    %v3154 = vpop.f32.mrf.mxu0
    %v3155 = vpop.f32.mrf.mxu0
    %v3156 = vadd.f32 %v2019, %v3155
    %v3157 = vpop.f32.mrf.mxu0
    %3158 = vmatprep.mubr.bf16.mxu0 %v2969
    %3159 = vmatmul.mubr.bf16.gmra.mxu0 %v2968
    %v3160 = vpop.f32.mrf.mxu0
    %v3161 = vadd.f32 %v2024, %v3160
    %v3162 = vpop.f32.mrf.mxu0
    %v3163 = vpop.f32.mrf.mxu0
    %v3164 = vadd.f32 %v2027, %v3163
    %v3165 = vpop.f32.mrf.mxu0
    %3166 = vmatprep.mubr.bf16.mxu0 %v2971
    %3167 = vmatmul.mubr.bf16.gmra.mxu0 %v2970
    %v3168 = vpop.f32.mrf.mxu0
    %v3169 = vadd.f32 %v2032, %v3168
    %v3170 = vpop.f32.mrf.mxu0
    %v3171 = vpop.f32.mrf.mxu0
    %v3172 = vadd.f32 %v2035, %v3171
    %v3173 = vpop.f32.mrf.mxu0
    %3174 = vmatprep.mubr.bf16.mxu0 %v2973
    %3175 = vmatmul.mubr.bf16.gmra.mxu0 %v2972
    %v3176 = vpop.f32.mrf.mxu0
    %v3177 = vadd.f32 %v2040, %v3176
    %v3178 = vpop.f32.mrf.mxu0
    %v3179 = vpop.f32.mrf.mxu0
    %v3180 = vadd.f32 %v2043, %v3179
    %v3181 = vpop.f32.mrf.mxu0
    %3182 = vdwg.mxu0
    %v3183 = vld [vmem:[%s7] sm:$0x1]
    %v3185 = vlaneseq
    %v3186 = vshrl.u32 %v3185, 7
    %v3187 = vsub.s32 0, %v3186
    %v3188 = vrot.slane %v3183, %v3187
    %v3190 = vadd.f32 %v3121, %v3188
    %v3191 = vadd.f32 %v3124, %v3188
    %v3192 = vadd.f32 %v3129, %v3188
    %v3193 = vadd.f32 %v3132, %v3188
    %v3194 = vadd.f32 %v3137, %v3188
    %v3195 = vadd.f32 %v3140, %v3188
    %v3196 = vadd.f32 %v3145, %v3188
    %v3197 = vadd.f32 %v3148, %v3188
    %v3198 = vadd.f32 %v3153, %v3188
    %v3199 = vadd.f32 %v3156, %v3188
    %v3200 = vadd.f32 %v3161, %v3188
    %v3201 = vadd.f32 %v3164, %v3188
    %v3202 = vadd.f32 %v3169, %v3188
    %v3203 = vadd.f32 %v3172, %v3188
    %v3204 = vadd.f32 %v3177, %v3188
    %v3205 = vadd.f32 %v3180, %v3188
    %v3206 = vmax.f32 %v3190, 0.0
    %v3207 = vmax.f32 %v3191, 0.0
    %v3208 = vmax.f32 %v3192, 0.0
    %v3209 = vmax.f32 %v3193, 0.0
    %v3210 = vmax.f32 %v3194, 0.0
    %v3211 = vmax.f32 %v3195, 0.0
    %v3212 = vmax.f32 %v3196, 0.0
    %v3213 = vmax.f32 %v3197, 0.0
    %v3214 = vmax.f32 %v3198, 0.0
    %v3215 = vmax.f32 %v3199, 0.0
    %v3216 = vmax.f32 %v3200, 0.0
    %v3217 = vmax.f32 %v3201, 0.0
    %v3218 = vmax.f32 %v3202, 0.0
    %v3219 = vmax.f32 %v3203, 0.0
    %v3220 = vmax.f32 %v3204, 0.0
    %v3221 = vmax.f32 %v3205, 0.0
    %3222 = vst [vmem:[%s8] sm:$0xff] %v3206
    %3223 = vst [vmem:[%s8 + $0x8] sm:$0xff] %v3207
    %3224 = vst [vmem:[%s8 + $0x10] sm:$0xff] %v3208
    %3225 = vst [vmem:[%s8 + $0x18] sm:$0xff] %v3209
    %3226 = vst [vmem:[%s8 + $0x20] sm:$0xff] %v3210
    %3227 = vst [vmem:[%s8 + $0x28] sm:$0xff] %v3211
    %3228 = vst [vmem:[%s8 + $0x30] sm:$0xff] %v3212
    %3229 = vst [vmem:[%s8 + $0x38] sm:$0xff] %v3213
    %3230 = vst [vmem:[%s8 + $0x40] sm:$0xff] %v3214
    %3231 = vst [vmem:[%s8 + $0x48] sm:$0xff] %v3215
    %3232 = vst [vmem:[%s8 + $0x50] sm:$0xff] %v3216
    %3233 = vst [vmem:[%s8 + $0x58] sm:$0xff] %v3217
    %3234 = vst [vmem:[%s8 + $0x60] sm:$0xff] %v3218
    %3235 = vst [vmem:[%s8 + $0x68] sm:$0xff] %v3219
    %3236 = vst [vmem:[%s8 + $0x70] sm:$0xff] %v3220
    %3237 = vst [vmem:[%s8 + $0x78] sm:$0xff] %v3221
    // Predicated region
    $region42: #{graph_encoder_gcn_forward.1} parent=1 // pred_check
      _
    $region43: #{graph_encoder_gcn_forward.1} parent=1 // pred_check_branch
      %3239 = sbr.rel (0) target = $region45
    $region44: #{graph_encoder_gcn_forward.1} parent=1 // pred_region
      _
    $region45: #{graph_encoder_gcn_forward.1} parent=1 // pred_fallthru
      _
    // Predicated region
    $region46: #{graph_encoder_gcn_forward.1} parent=1 // pred_check
      _
    $region47: #{graph_encoder_gcn_forward.1} parent=1 // pred_check_branch
      %3241 = sbr.rel (0) target = $region49
    $region48: #{graph_encoder_gcn_forward.1} parent=1 // pred_region
      _
    $region49: #{graph_encoder_gcn_forward.1} parent=1 // pred_fallthru
      _
    %3242 = vsyncpa [#allocation5], 1
    %3243 = vsyncpa [#allocation7], 1

</llo_original>
